<compile_context>
chip_gen: v7x
topology: tpu7x:2x2x1
jax: 0.10.0
libtpu: 0.0.40
codegen_flags: <defaults>
</compile_context>

<pallas_src>
import functools

import jax
import jax.numpy as jnp
import numpy as np
from jax.experimental import pallas as pl
from jax.experimental.pallas import tpu as pltpu


# ---------------------------------------------------------------------------
# Fused encoder kernel.  Per grid step (= one batch tile of T images):
#   x1_ref : (16T, 128) bf16  row-level im2col of the padded 30x30 input.
#            Rows [0, 8T): EVEN padded conv1 rows, k-major (row k*T + b is
#            padded row h = 2k of image b; k = 0 is conv2's zero pad row).
#            Rows [8T, 16T): ODD rows h = 2k+1 (k = 7 is the zero pad row).
#            Cols: 4x30 input window (ky*30 + wi), 1.0 bias flag at col 120
#            (0.0 on pad rows), zeros to 128.
#   m1_ref : (128, 512)  bf16  conv1 as a GEMM: window row -> one padded conv1
#            row = 16 W positions x 32 ch (w = 0, 15 zero); bias via flag col.
#   m2_ref : (2048, 512) bf16  conv2, all 4 kernel rows stacked along K;
#            N padded 448 -> 512 (cols 448.. zero).
#   wfc_ref: (3584, 128) bf16  fused [fc_mu | fc_logvar] weights, grouped by
#            conv2 output row y (7 x 512 K-blocks), N padded to 128.
#   b2_ref : (1, 512) f32,  bfc_ref : (1, 128) f32   biases (added in f32).
#   out_ref: (T, 128) f32   [mu | logvar | zero pad] per image, one store.
# ---------------------------------------------------------------------------
def _encoder_kernel(x1_ref, m1_ref, m2_ref, wfc_ref, b2_ref, bfc_ref, out_ref,
                    *, tile_b):
    T = tile_b

    def mm(a, b):
        return jnp.dot(a, b, preferred_element_type=jnp.float32)

    # conv1 + ReLU: one GEMM over all 16*T padded conv1 output rows.
    h1 = jnp.maximum(mm(x1_ref[...], m1_ref[...]), 0.0)        # (16T, 512) f32
    h1 = h1.astype(jnp.bfloat16)                                # one-shot cast

    # conv2 + ReLU as ONE large-K GEMM.  Output row oy (0..6) of image b needs
    # padded h1 rows 2*oy + ky, ky = 0..3; with the k-major layout those are
    # four contiguous slices at offsets 0 / 8T / T / 9T (sublane-aligned when
    # T is a multiple of 8), lane-concatenated into K = 2048.
    hcat = jnp.concatenate(
        [h1[0:7 * T], h1[8 * T:15 * T], h1[T:8 * T], h1[9 * T:16 * T]], axis=1)
    h2 = jnp.maximum(mm(hcat, m2_ref[...]) + b2_ref[...], 0.0)  # (7T, 512) f32
    h2 = h2.astype(jnp.bfloat16)                                 # one-shot cast
    # h2 row oy*T + b = conv2 output row oy of image b; cols ox*64 + co
    # (cols 448..511 are zero padding so lane blocks stay 128-aligned).

    # fc_mu | fc_logvar as ONE large-K GEMM (K = 7*512): lane-concatenate the
    # 7 conv2 rows of each image, multiply by the fused, NCHW-permuted weight
    # matrix, add biases in f32 and write ONE unmasked (T, 128) block.
    hcat2 = jnp.concatenate([h2[y * T:(y + 1) * T] for y in range(7)], axis=1)
    out_ref[...] = mm(hcat2, wfc_ref[...]) + bfc_ref[...]        # (T, 128) f32


# ---------------------------------------------------------------------------
# One-time weight preprocessing (GEMM-ready matrices, bias folding, NCHW ->
# (y,x,c) permutation of the FC weights, zero padding).  Never re-run per step.
# ---------------------------------------------------------------------------
def prepare_encoder_params(params, latent_dim):
    assert 2 * latent_dim <= 128, "latent_dim must be <= 64 for the fused head"
    w1, b1 = params["conv1_w"], params["conv1_b"]              # (32,1,4,4), (32,)
    w2, b2 = params["conv2_w"], params["conv2_b"]              # (64,32,4,4), (64,)

    # conv1 GEMM: row = (ky*30 + wi) of a 4x30 padded-input window, row 120 =
    # bias flag, rows 121..127 zero; col = (w*32 + c) over 16 padded W x 32 ch
    # (w = 0, 15 stay zero -- conv2's width padding).
    s1 = np.zeros((30, 16, 4), np.float32)                     # (wi, w, kx)
    for w in range(1, 15):
        for kx in range(4):
            s1[2 * w - 2 + kx, w, kx] = 1.0
    m1 = jnp.einsum("iwx,cyx->yiwc", jnp.asarray(s1), w1[:, 0]).reshape(120, 512)
    brow = jnp.zeros((16, 32), jnp.float32).at[1:15, :].set(b1).reshape(1, 512)
    m1 = jnp.concatenate([m1, brow, jnp.zeros((7, 512), jnp.float32)], axis=0)

    # conv2 GEMM, all 4 kernel rows stacked along K: row = ky*512 + (w*32+ci),
    # col = (ox*64 + co), N padded 448 -> 512 so lane blocks stay 128-aligned.
    s2 = np.zeros((16, 7, 4), np.float32)                      # (wi, ox, kx)
    for ox in range(7):
        for kx in range(4):
            s2[2 * ox + kx, ox, kx] = 1.0
    m2 = jnp.einsum("wpx,oiyx->ywipo", jnp.asarray(s2), w2).reshape(4, 512, 448)
    m2 = jnp.pad(m2, ((0, 0), (0, 0), (0, 64))).reshape(2048, 512)
    b2row = jnp.pad(jnp.tile(b2, 7), (0, 64)).reshape(1, 512)

    # Fused fc_mu / fc_logvar: permute PyTorch's NCHW-flatten order
    # (c*49 + y*7 + x) to the kernel's (y, x, c) order, insert zero rows for
    # the 64 padded conv2 columns per y, and pad N to 128 (sliced off later).
    L = latent_dim
    wcat = jnp.concatenate(
        [params["fc_mu_w"], params["fc_logvar_w"],
         jnp.zeros((128 - 2 * L, 64 * 49), jnp.float32)], axis=0)   # (128, 3136)
    wfc = wcat.reshape(128, 64, 7, 7).transpose(2, 3, 1, 0)         # (y,x,c,128)
    wfc = jnp.pad(wfc.reshape(7, 448, 128), ((0, 0), (0, 64), (0, 0)))
    wfc = wfc.reshape(3584, 128)
    bfc = jnp.concatenate(
        [params["fc_mu_b"], params["fc_logvar_b"],
         jnp.zeros((128 - 2 * L,), jnp.float32)]).reshape(1, 128)

    return {"M1": m1.astype(jnp.bfloat16), "M2": m2.astype(jnp.bfloat16),
            "WFC": wfc.astype(jnp.bfloat16), "B2": b2row, "BFC": bfc}


def _cdiv(a, b):
    return -(-a // b)


def _pick_batch_tile(B):
    """Batch tile (multiple of 8 whenever the grid has >1 step) + step count."""
    if B <= 32:
        return B, 1
    tile_b = 32
    nb = _cdiv(B, tile_b)
    if nb % 2:                       # v7x: prefer an even number of grid steps
        cand = max(8, min(32, _cdiv(_cdiv(B, nb + 1), 8) * 8))
        if _cdiv(B, cand) % 2 == 0:
            tile_b, nb = cand, _cdiv(B, cand)
    return tile_b, nb


# ---------------------------------------------------------------------------
# Forward pass: small fusible XLA prep of the tiny input, one fused pallas_call.
# ---------------------------------------------------------------------------
def encoder_forward(x_nchw, prep, latent_dim):
    B = x_nchw.shape[0]
    tile_b, nb = _pick_batch_tile(B)
    assert nb == 1 or tile_b % 8 == 0          # (8,128) rule for output blocks
    Bp = nb * tile_b
    T = tile_b

    # Row-level im2col: pad to 30x30, build the 4-row window of every conv1
    # output row (cols ky*30 + wi), append the bias-flag column (col 120), pad
    # to 16 rows (conv2's H padding) x 128 cols, then reorder rows into the
    # kernel's [even | odd], k-major-within-tile layout.
    xp = jnp.pad(x_nchw[:, 0], ((0, Bp - B), (1, 1), (1, 1)))        # (Bp,30,30)
    xr = xp.reshape(Bp, 15, 60)                                      # row pairs
    win = jnp.concatenate([xr[:, :14], xr[:, 1:]], axis=2)           # (Bp,14,120)
    rows = jnp.pad(win, ((0, 0), (0, 0), (0, 1)), constant_values=1.0)
    rows = jnp.pad(rows, ((0, 0), (1, 1), (0, 7)))                   # (Bp,16,128)
    x1 = rows.reshape(nb, T, 8, 2, 128).transpose(0, 3, 2, 1, 4)     # k-major
    x1 = x1.reshape(nb * 16 * T, 128).astype(jnp.bfloat16)

    out = pl.pallas_call(
        functools.partial(_encoder_kernel, tile_b=T),
        out_shape=jax.ShapeDtypeStruct((Bp, 128), jnp.float32),
        grid=(nb,),
        in_specs=[
            pl.BlockSpec((16 * T, 128), lambda i: (i, 0)),    # x1 (per tile)
            pl.BlockSpec((128, 512), lambda i: (0, 0)),       # M1
            pl.BlockSpec((2048, 512), lambda i: (0, 0)),      # M2
            pl.BlockSpec((3584, 128), lambda i: (0, 0)),      # WFC
            pl.BlockSpec((1, 512), lambda i: (0, 0)),         # B2
            pl.BlockSpec((1, 128), lambda i: (0, 0)),         # BFC
        ],
        out_specs=pl.BlockSpec((T, 128), lambda i: (i, 0)),
        compiler_params=pltpu.CompilerParams(
            dimension_semantics=("parallel",),
            vmem_limit_bytes=32 * 1024 * 1024),
    )(x1, prep["M1"], prep["M2"], prep["WFC"], prep["B2"], prep["BFC"])

    # Batch-pad rows (Bp - B) and padded head columns are discarded here.
    mu = out[:B, :latent_dim]
    logvar = out[:B, latent_dim:2 * latent_dim]
    return mu, logvar


# ---------------------------------------------------------------------------
# Pure-JAX f32 reference (for the sanity check).
# ---------------------------------------------------------------------------
def encoder_reference(x_nchw, params):
    dn = jax.lax.conv_dimension_numbers(x_nchw.shape, params["conv1_w"].shape,
                                        ("NCHW", "OIHW", "NCHW"))
    h = jax.lax.conv_general_dilated(
        x_nchw, params["conv1_w"], (2, 2), [(1, 1), (1, 1)],
        dimension_numbers=dn, precision=jax.lax.Precision.HIGHEST)
    h = jax.nn.relu(h + params["conv1_b"][None, :, None, None])
    dn2 = jax.lax.conv_dimension_numbers(h.shape, params["conv2_w"].shape,
                                         ("NCHW", "OIHW", "NCHW"))
    h = jax.lax.conv_general_dilated(
        h, params["conv2_w"], (2, 2), [(1, 1), (1, 1)],
        dimension_numbers=dn2, precision=jax.lax.Precision.HIGHEST)
    h = jax.nn.relu(h + params["conv2_b"][None, :, None, None])
    h = h.reshape(h.shape[0], -1)
    mu = h @ params["fc_mu_w"].T + params["fc_mu_b"]
    logvar = h @ params["fc_logvar_w"].T + params["fc_logvar_b"]
    return mu, logvar


def make_params(key, latent_dim):
    ks = jax.random.split(key, 8)
    s = 0.05
    return {
        "conv1_w": s * jax.random.normal(ks[0], (32, 1, 4, 4), jnp.float32),
        "conv1_b": s * jax.random.normal(ks[1], (32,), jnp.float32),
        "conv2_w": s * jax.random.normal(ks[2], (64, 32, 4, 4), jnp.float32),
        "conv2_b": s * jax.random.normal(ks[3], (64,), jnp.float32),
        "fc_mu_w": s * jax.random.normal(ks[4], (latent_dim, 64 * 49), jnp.float32),
        "fc_mu_b": s * jax.random.normal(ks[5], (latent_dim,), jnp.float32),
        "fc_logvar_w": s * jax.random.normal(ks[6], (latent_dim, 64 * 49), jnp.float32),
        "fc_logvar_b": s * jax.random.normal(ks[7], (latent_dim,), jnp.float32),
    }


if __name__ == "__main__":
    latent_dim = 16
    key = jax.random.PRNGKey(0)
    kx, kp = jax.random.split(key)

    # The forward path implies 28x28 single-channel input (-> 14x14 -> 7x7).
    x = jax.random.normal(kx, (2, 1, 28, 28), jnp.float32)
    params = make_params(kp, latent_dim)
    prep = prepare_encoder_params(params, latent_dim)   # one-time weight prep

    fwd = jax.jit(encoder_forward, static_argnames=("latent_dim",))
    mu, logvar = fwd(x, prep, latent_dim=latent_dim)
    mu = jax.block_until_ready(mu)
    logvar = jax.block_until_ready(logvar)

    assert mu.shape == (2, latent_dim) and logvar.shape == (2, latent_dim)

    mu_ref, lv_ref = encoder_reference(x, params)
    # bf16 matmul inputs with f32 accumulation -> ~1e-3 level error vs f32 ref.
    assert jnp.allclose(mu, mu_ref, rtol=2e-2, atol=2e-2)
    assert jnp.allclose(logvar, lv_ref, rtol=2e-2, atol=2e-2)

    print("KERNEL_OK")
</pallas_src>

<mosaic_0001>
module attributes {stable_mosaic.version = 11 : i64} {
  func.func @_encoder_kernel(%arg0: i32, %arg1: memref<32x128xbf16, #tpu.memory_space<vmem>>, %arg2: memref<128x512xbf16, #tpu.memory_space<vmem>>, %arg3: memref<2048x512xbf16, #tpu.memory_space<vmem>>, %arg4: memref<3584x128xbf16, #tpu.memory_space<vmem>>, %arg5: memref<1x512xf32, #tpu.memory_space<vmem>>, %arg6: memref<1x128xf32, #tpu.memory_space<vmem>>, %arg7: memref<2x128xf32, #tpu.memory_space<vmem>>) attributes {dimension_semantics = [#tpu.dimension_semantics<parallel>], iteration_bounds = array<i64: 1>, scalar_prefetch = 0 : i64, scratch_operands = 0 : i64, tpu.core_type = #tpu.core_type<tc>, window_params = [{transform_indices = @transform_0, window_bounds = array<i64: 32, 128>}, {pipeline_mode = #tpu.pipeline_mode<synchronous>, transform_indices = @transform_1, window_bounds = array<i64: 128, 512>}, {pipeline_mode = #tpu.pipeline_mode<synchronous>, transform_indices = @transform_2, window_bounds = array<i64: 2048, 512>}, {pipeline_mode = #tpu.pipeline_mode<synchronous>, transform_indices = @transform_3, window_bounds = array<i64: 3584, 128>}, {pipeline_mode = #tpu.pipeline_mode<synchronous>, transform_indices = @transform_4, window_bounds = array<i64: 1, 512>}, {pipeline_mode = #tpu.pipeline_mode<synchronous>, transform_indices = @transform_5, window_bounds = array<i64: 1, 128>}, {transform_indices = @transform_6, window_bounds = array<i64: 2, 128>}]} {
    %c0 = arith.constant 0 : index
    %c0_0 = arith.constant 0 : index
    %0 = vector.load %arg1[%c0, %c0_0] : memref<32x128xbf16, #tpu.memory_space<vmem>>, vector<32x128xbf16>
    %c0_1 = arith.constant 0 : index
    %c0_2 = arith.constant 0 : index
    %1 = vector.load %arg2[%c0_1, %c0_2] : memref<128x512xbf16, #tpu.memory_space<vmem>>, vector<128x512xbf16>
    %cst = arith.constant dense<0.000000e+00> : vector<32x512xf32>
    %2 = tpu.matmul %0, %1, %cst {dimension_numbers = #tpu.dot_dimension_numbers<[1], [0], [0], [1], [0, 0, 1, 1], [], []>} : vector<32x128xbf16>, vector<128x512xbf16>, vector<32x512xf32> -> vector<32x512xf32>
    %cst_3 = arith.constant 0.000000e+00 : f32
    %3 = vector.broadcast %cst_3 : f32 to vector<32x512xf32>
    %4 = arith.maximumf %2, %3 : vector<32x512xf32>
    %5 = arith.truncf %4 : vector<32x512xf32> to vector<32x512xbf16>
    %6 = vector.extract_strided_slice %5 {offsets = [0, 0], sizes = [14, 512], strides = [1, 1]} : vector<32x512xbf16> to vector<14x512xbf16>
    %7 = vector.extract_strided_slice %5 {offsets = [16, 0], sizes = [14, 512], strides = [1, 1]} : vector<32x512xbf16> to vector<14x512xbf16>
    %8 = vector.extract_strided_slice %5 {offsets = [2, 0], sizes = [14, 512], strides = [1, 1]} : vector<32x512xbf16> to vector<14x512xbf16>
    %9 = vector.extract_strided_slice %5 {offsets = [18, 0], sizes = [14, 512], strides = [1, 1]} : vector<32x512xbf16> to vector<14x512xbf16>
    %10 = tpu.concatenate %6, %7, %8, %9 in 1 : vector<14x512xbf16>, vector<14x512xbf16>, vector<14x512xbf16>, vector<14x512xbf16> -> vector<14x2048xbf16>
    %c0_4 = arith.constant 0 : index
    %c0_5 = arith.constant 0 : index
    %11 = vector.load %arg3[%c0_4, %c0_5] : memref<2048x512xbf16, #tpu.memory_space<vmem>>, vector<2048x512xbf16>
    %cst_6 = arith.constant dense<0.000000e+00> : vector<14x512xf32>
    %12 = tpu.matmul %10, %11, %cst_6 {dimension_numbers = #tpu.dot_dimension_numbers<[1], [0], [0], [1], [0, 0, 1, 1], [], []>} : vector<14x2048xbf16>, vector<2048x512xbf16>, vector<14x512xf32> -> vector<14x512xf32>
    %c0_7 = arith.constant 0 : index
    %c0_8 = arith.constant 0 : index
    %13 = vector.load %arg5[%c0_7, %c0_8] : memref<1x512xf32, #tpu.memory_space<vmem>>, vector<1x512xf32>
    %14 = vector.broadcast %13 : vector<1x512xf32> to vector<14x512xf32>
    %15 = arith.addf %12, %14 : vector<14x512xf32>
    %cst_9 = arith.constant 0.000000e+00 : f32
    %16 = vector.broadcast %cst_9 : f32 to vector<14x512xf32>
    %17 = arith.maximumf %15, %16 : vector<14x512xf32>
    %18 = arith.truncf %17 : vector<14x512xf32> to vector<14x512xbf16>
    %19 = vector.extract_strided_slice %18 {offsets = [0, 0], sizes = [2, 512], strides = [1, 1]} : vector<14x512xbf16> to vector<2x512xbf16>
    %20 = vector.extract_strided_slice %18 {offsets = [2, 0], sizes = [2, 512], strides = [1, 1]} : vector<14x512xbf16> to vector<2x512xbf16>
    %21 = vector.extract_strided_slice %18 {offsets = [4, 0], sizes = [2, 512], strides = [1, 1]} : vector<14x512xbf16> to vector<2x512xbf16>
    %22 = vector.extract_strided_slice %18 {offsets = [6, 0], sizes = [2, 512], strides = [1, 1]} : vector<14x512xbf16> to vector<2x512xbf16>
    %23 = vector.extract_strided_slice %18 {offsets = [8, 0], sizes = [2, 512], strides = [1, 1]} : vector<14x512xbf16> to vector<2x512xbf16>
    %24 = vector.extract_strided_slice %18 {offsets = [10, 0], sizes = [2, 512], strides = [1, 1]} : vector<14x512xbf16> to vector<2x512xbf16>
    %25 = vector.extract_strided_slice %18 {offsets = [12, 0], sizes = [2, 512], strides = [1, 1]} : vector<14x512xbf16> to vector<2x512xbf16>
    %26 = tpu.concatenate %19, %20, %21, %22, %23, %24, %25 in 1 : vector<2x512xbf16>, vector<2x512xbf16>, vector<2x512xbf16>, vector<2x512xbf16>, vector<2x512xbf16>, vector<2x512xbf16>, vector<2x512xbf16> -> vector<2x3584xbf16>
    %c0_10 = arith.constant 0 : index
    %c0_11 = arith.constant 0 : index
    %27 = vector.load %arg4[%c0_10, %c0_11] : memref<3584x128xbf16, #tpu.memory_space<vmem>>, vector<3584x128xbf16>
    %cst_12 = arith.constant dense<0.000000e+00> : vector<2x128xf32>
    %28 = tpu.matmul %26, %27, %cst_12 {dimension_numbers = #tpu.dot_dimension_numbers<[1], [0], [0], [1], [0, 0, 1, 1], [], []>} : vector<2x3584xbf16>, vector<3584x128xbf16>, vector<2x128xf32> -> vector<2x128xf32>
    %c0_13 = arith.constant 0 : index
    %c0_14 = arith.constant 0 : index
    %29 = vector.load %arg6[%c0_13, %c0_14] : memref<1x128xf32, #tpu.memory_space<vmem>>, vector<1x128xf32>
    %30 = vector.broadcast %29 : vector<1x128xf32> to vector<2x128xf32>
    %31 = arith.addf %28, %30 : vector<2x128xf32>
    %c0_15 = arith.constant 0 : index
    %c0_16 = arith.constant 0 : index
    %32 = vector.load %arg7[%c0_15, %c0_16] : memref<2x128xf32, #tpu.memory_space<vmem>>, vector<2x128xf32>
    tpu.vector_store %arg7[%c0_15, %c0_16], %31 {strides = array<i32>} : memref<2x128xf32, #tpu.memory_space<vmem>>, vector<2x128xf32>,
    return
  }
  func.func @transform_0(%arg0: i32) -> (i32, i32) {
    %c0_i32 = arith.constant 0 : i32
    %c0_i32_0 = arith.constant 0 : i32
    return %arg0, %c0_i32 : i32, i32
  }
  func.func @transform_1(%arg0: i32) -> (i32, i32) {
    %c0_i32 = arith.constant 0 : i32
    %c0_i32_0 = arith.constant 0 : i32
    %c0_i32_1 = arith.constant 0 : i32
    return %c0_i32, %c0_i32_0 : i32, i32
  }
  func.func @transform_2(%arg0: i32) -> (i32, i32) {
    %c0_i32 = arith.constant 0 : i32
    %c0_i32_0 = arith.constant 0 : i32
    %c0_i32_1 = arith.constant 0 : i32
    return %c0_i32, %c0_i32_0 : i32, i32
  }
  func.func @transform_3(%arg0: i32) -> (i32, i32) {
    %c0_i32 = arith.constant 0 : i32
    %c0_i32_0 = arith.constant 0 : i32
    %c0_i32_1 = arith.constant 0 : i32
    return %c0_i32, %c0_i32_0 : i32, i32
  }
  func.func @transform_4(%arg0: i32) -> (i32, i32) {
    %c0_i32 = arith.constant 0 : i32
    %c0_i32_0 = arith.constant 0 : i32
    %c0_i32_1 = arith.constant 0 : i32
    return %c0_i32, %c0_i32_0 : i32, i32
  }
  func.func @transform_5(%arg0: i32) -> (i32, i32) {
    %c0_i32 = arith.constant 0 : i32
    %c0_i32_0 = arith.constant 0 : i32
    %c0_i32_1 = arith.constant 0 : i32
    return %c0_i32, %c0_i32_0 : i32, i32
  }
  func.func @transform_6(%arg0: i32) -> (i32, i32) {
    %c0_i32 = arith.constant 0 : i32
    %c0_i32_0 = arith.constant 0 : i32
    return %arg0, %c0_i32 : i32, i32
  }
}

</mosaic_0001>

<llo_original>
// kernel: encoder_forward.1
$region0: #{encoder_forward.1}
  #allocation0 [shape = 'u32[]', space=smem, size = 0x4, offset = 0x4, fixed_abs, tag = 'smem constant byte address 0x4 - core index']
  #allocation1 [shape = 'u32[144,128]{1,0:T(1,128)}', space=vmem, size = 0x12000, scoped, tag = 'internal scratch']
  %s0 = inlined_call_operand.vmem [shape: bf16[32,128], index: 0, kind: input, shape index: {}]
  %s1 = inlined_call_operand.hbm [shape: bf16[128,512], index: 1, kind: input, shape index: {}]
  %s2 = inlined_call_operand.hbm [shape: bf16[2048,512], index: 2, kind: input, shape index: {}]
  %s3 = inlined_call_operand.hbm [shape: bf16[3584,128], index: 3, kind: input, shape index: {}]
  %s4 = inlined_call_operand.hbm [shape: f32[1,512], index: 4, kind: input, shape index: {}]
  %s5 = inlined_call_operand.hbm [shape: f32[1,128], index: 5, kind: input, shape index: {}]
  %s6 = inlined_call_operand.vmem [shape: f32[2,128], index: 6, kind: output, shape index: {}]
  %s7 = sld [smem:[#allocation0]]
  $region54: #{encoder_forward.1} parent=0
    _
  %s9 = ssub.s32 1, %s7
  %s10 = scalar_select 0, %s9, %s7
  $region1: #{encoder_forward.1} parent=0
    #allocation2 [shape = 'u8[131072]{0}', space=vmem, size = 0x20000, scoped, tag = 'input window, operand 1, single buffered']
    #allocation3 [shape = 's32[1]{0}', space=sflag, size = 0x4, scoped, tag = 'scoped memory for encoder_forward.1']
    #allocation4 [shape = 'u8[2097152]{0}', space=vmem, size = 0x200000, scoped, tag = 'input window, operand 2, single buffered']
    #allocation5 [shape = 's32[1]{0}', space=sflag, size = 0x4, scoped, tag = 'scoped memory for encoder_forward.1']
    #allocation6 [shape = 'u8[917504]{0}', space=vmem, size = 0xe0000, scoped, tag = 'input window, operand 3, single buffered']
    #allocation7 [shape = 'u8[2048]{0}', space=vmem, size = 0x800, scoped, tag = 'input window, operand 4, single buffered']
    #allocation8 [shape = 's32[1]{0}', space=sflag, size = 0x4, scoped, tag = 'scoped memory for encoder_forward.1']
    #allocation9 [shape = 'u8[512]{0}', space=vmem, size = 0x400, scoped, tag = 'input window, operand 5, single buffered']
    %11 = vsyncpa [#allocation3], 0
    %12 = vsyncpa [#allocation5], 0
    %13 = vsyncpa [#allocation8], 0
    // Predicated region
    $region2: #{encoder_forward.1} parent=1 // pred_check
      _
    $region3: #{encoder_forward.1} parent=1 // pred_check_branch
      %15 = sbr.rel (0) target = $region5
    $region4: #{encoder_forward.1} parent=1 // pred_region
      _
    $region5: #{encoder_forward.1} parent=1 // pred_fallthru
      _
    // Predicated region
    $region6: #{encoder_forward.1} parent=1 // pred_check
      _
    $region7: #{encoder_forward.1} parent=1 // pred_check_branch
      %17 = sbr.rel (0) target = $region9
    $region8: #{encoder_forward.1} parent=1 // pred_region
      %s19 = ssub.s32 4096, 4096
      %20 = vsyncadd [#allocation3], %s19
      %s21 = sshll.u32 [#allocation2], 4
      %s22 = int_to_ptr.vmem [resolvable:$true] %s21
      %27 = dma.hbm_to_vmem [thread:$0]  %s1, 4096, %s22, [#allocation3], 256, 256, 16
    $region9: #{encoder_forward.1} parent=1 // pred_fallthru
      _
    // Predicated region
    $region10: #{encoder_forward.1} parent=1 // pred_check
      _
    $region11: #{encoder_forward.1} parent=1 // pred_check_branch
      %29 = sbr.rel (0) target = $region13
    $region12: #{encoder_forward.1} parent=1 // pred_region
      %s31 = ssub.s32 65536, 65536
      %32 = vsyncadd [#allocation5], %s31
      %s33 = sshll.u32 [#allocation4], 4
      %s34 = int_to_ptr.vmem [resolvable:$true] %s33
      %39 = dma.hbm_to_vmem [thread:$0]  %s2, 65536, %s34, [#allocation5], 256, 256, 16
    $region13: #{encoder_forward.1} parent=1 // pred_fallthru
      _
    // Predicated region
    $region14: #{encoder_forward.1} parent=1 // pred_check
      _
    $region15: #{encoder_forward.1} parent=1 // pred_check_branch
      %41 = sbr.rel (0) target = $region17
    $region16: #{encoder_forward.1} parent=1 // pred_region
      %s43 = ssub.s32 28672, 28672
      %44 = vsyncadd [#allocation5], %s43
      %s45 = sshll.u32 [#allocation6], 4
      %s46 = int_to_ptr.vmem [resolvable:$true] %s45
      %51 = dma.hbm_to_vmem [thread:$0]  %s3, 28672, %s46, [#allocation5], 64, 64, 4
    $region17: #{encoder_forward.1} parent=1 // pred_fallthru
      _
    // Predicated region
    $region18: #{encoder_forward.1} parent=1 // pred_check
      _
    $region19: #{encoder_forward.1} parent=1 // pred_check_branch
      %53 = sbr.rel (0) target = $region21
    $region20: #{encoder_forward.1} parent=1 // pred_region
      %s55 = ssub.s32 64, 64
      %56 = vsyncadd [#allocation8], %s55
      %s58 = sshll.u32 [#allocation7], 4
      %s59 = int_to_ptr.vmem [resolvable:$true] %s58
      %61 = dma.hbm_to_vmem [thread:$0]  %s4, 64, %s59, [#allocation8]
    $region21: #{encoder_forward.1} parent=1 // pred_fallthru
      _
    // Predicated region
    $region22: #{encoder_forward.1} parent=1 // pred_check
      _
    $region23: #{encoder_forward.1} parent=1 // pred_check_branch
      %63 = sbr.rel (0) target = $region25
    $region24: #{encoder_forward.1} parent=1 // pred_region
      %s65 = ssub.s32 16, 16
      %66 = vsyncadd [#allocation8], %s65
      %s68 = sshll.u32 [#allocation9], 4
      %s69 = int_to_ptr.vmem [resolvable:$true] %s68
      %71 = dma.hbm_to_vmem [thread:$0]  %s5, 16, %s69, [#allocation8]
    $region25: #{encoder_forward.1} parent=1 // pred_fallthru
      _
    // Predicated region
    $region26: #{encoder_forward.1} parent=1 // pred_check
      _
    $region27: #{encoder_forward.1} parent=1 // pred_check_branch
      %73 = sbr.rel (0) target = $region29
    $region28: #{encoder_forward.1} parent=1 // pred_region
      %74 = dma.done [#allocation3], 4096
    $region29: #{encoder_forward.1} parent=1 // pred_fallthru
      _
    // Predicated region
    $region30: #{encoder_forward.1} parent=1 // pred_check
      _
    $region31: #{encoder_forward.1} parent=1 // pred_check_branch
      %76 = sbr.rel (0) target = $region33
    $region32: #{encoder_forward.1} parent=1 // pred_region
      %77 = dma.done [#allocation5], 65536
    $region33: #{encoder_forward.1} parent=1 // pred_fallthru
      _
    // Predicated region
    $region34: #{encoder_forward.1} parent=1 // pred_check
      _
    $region35: #{encoder_forward.1} parent=1 // pred_check_branch
      %79 = sbr.rel (0) target = $region37
    $region36: #{encoder_forward.1} parent=1 // pred_region
      %80 = dma.done [#allocation5], 28672
    $region37: #{encoder_forward.1} parent=1 // pred_fallthru
      _
    // Predicated region
    $region38: #{encoder_forward.1} parent=1 // pred_check
      _
    $region39: #{encoder_forward.1} parent=1 // pred_check_branch
      %82 = sbr.rel (0) target = $region41
    $region40: #{encoder_forward.1} parent=1 // pred_region
      %83 = dma.done [#allocation8], 64
    $region41: #{encoder_forward.1} parent=1 // pred_fallthru
      _
    // Predicated region
    $region42: #{encoder_forward.1} parent=1 // pred_check
      _
    $region43: #{encoder_forward.1} parent=1 // pred_check_branch
      %85 = sbr.rel (0) target = $region45
    $region44: #{encoder_forward.1} parent=1 // pred_region
      %86 = dma.done [#allocation8], 16
    $region45: #{encoder_forward.1} parent=1 // pred_fallthru
      _
    %v88 = vld [vmem:[%s0] sm:$0xf]
    %v89 = vld [vmem:[%s0 + $0x4] sm:$0xf]
    %v90 = vld [vmem:[%s0 + $0x8] sm:$0xf]
    %v91 = vld [vmem:[%s0 + $0xc] sm:$0xf]
    %v92 = vld [vmem:[#allocation2] sm:$0xff]
    %v93 = vld [vmem:[#allocation2 + $0x8] sm:$0xff]
    %v94 = vld [vmem:[#allocation2 + $0x10] sm:$0xff]
    %v95 = vld [vmem:[#allocation2 + $0x18] sm:$0xff]
    %v96 = vld [vmem:[#allocation2 + $0x20] sm:$0xff]
    %v97 = vld [vmem:[#allocation2 + $0x28] sm:$0xff]
    %v98 = vld [vmem:[#allocation2 + $0x30] sm:$0xff]
    %v99 = vld [vmem:[#allocation2 + $0x38] sm:$0xff]
    %v100 = vld [vmem:[#allocation2 + $0x40] sm:$0xff]
    %v101 = vld [vmem:[#allocation2 + $0x48] sm:$0xff]
    %v102 = vld [vmem:[#allocation2 + $0x50] sm:$0xff]
    %v103 = vld [vmem:[#allocation2 + $0x58] sm:$0xff]
    %v104 = vld [vmem:[#allocation2 + $0x60] sm:$0xff]
    %v105 = vld [vmem:[#allocation2 + $0x68] sm:$0xff]
    %v106 = vld [vmem:[#allocation2 + $0x70] sm:$0xff]
    %v107 = vld [vmem:[#allocation2 + $0x78] sm:$0xff]
    %v108 = vld [vmem:[#allocation2 + $0x80] sm:$0xff]
    %v109 = vld [vmem:[#allocation2 + $0x88] sm:$0xff]
    %v110 = vld [vmem:[#allocation2 + $0x90] sm:$0xff]
    %v111 = vld [vmem:[#allocation2 + $0x98] sm:$0xff]
    %v112 = vld [vmem:[#allocation2 + $0xa0] sm:$0xff]
    %v113 = vld [vmem:[#allocation2 + $0xa8] sm:$0xff]
    %v114 = vld [vmem:[#allocation2 + $0xb0] sm:$0xff]
    %v115 = vld [vmem:[#allocation2 + $0xb8] sm:$0xff]
    %v116 = vld [vmem:[#allocation2 + $0xc0] sm:$0xff]
    %v117 = vld [vmem:[#allocation2 + $0xc8] sm:$0xff]
    %v118 = vld [vmem:[#allocation2 + $0xd0] sm:$0xff]
    %v119 = vld [vmem:[#allocation2 + $0xd8] sm:$0xff]
    %v120 = vld [vmem:[#allocation2 + $0xe0] sm:$0xff]
    %v121 = vld [vmem:[#allocation2 + $0xe8] sm:$0xff]
    %v122 = vld [vmem:[#allocation2 + $0xf0] sm:$0xff]
    %v123 = vld [vmem:[#allocation2 + $0xf8] sm:$0xff]
    %v128 = vunpack.c.l.b16 %v88
    %v129 = vunpack.c.l.b16 %v89
    %v130 = vunpack.c.l.b16 %v90
    %v131 = vunpack.c.l.b16 %v91
    %v132 = vpack.c.b16 %v129, %v128
    %v133 = vpack.c.b16 %v131, %v130
    %v168 = vunpack.c.l.b16 %v92
    %v169 = vunpack.c.h.b16 %v92
    %v170 = vunpack.c.l.b16 %v93
    %v171 = vunpack.c.h.b16 %v93
    %v172 = vunpack.c.l.b16 %v94
    %v173 = vunpack.c.h.b16 %v94
    %v174 = vunpack.c.l.b16 %v95
    %v175 = vunpack.c.h.b16 %v95
    %v176 = vunpack.c.l.b16 %v96
    %v177 = vunpack.c.h.b16 %v96
    %v178 = vunpack.c.l.b16 %v97
    %v179 = vunpack.c.h.b16 %v97
    %v180 = vunpack.c.l.b16 %v98
    %v181 = vunpack.c.h.b16 %v98
    %v182 = vunpack.c.l.b16 %v99
    %v183 = vunpack.c.h.b16 %v99
    %v184 = vunpack.c.l.b16 %v100
    %v185 = vunpack.c.h.b16 %v100
    %v186 = vunpack.c.l.b16 %v101
    %v187 = vunpack.c.h.b16 %v101
    %v188 = vunpack.c.l.b16 %v102
    %v189 = vunpack.c.h.b16 %v102
    %v190 = vunpack.c.l.b16 %v103
    %v191 = vunpack.c.h.b16 %v103
    %v192 = vunpack.c.l.b16 %v104
    %v193 = vunpack.c.h.b16 %v104
    %v194 = vunpack.c.l.b16 %v105
    %v195 = vunpack.c.h.b16 %v105
    %v196 = vunpack.c.l.b16 %v106
    %v197 = vunpack.c.h.b16 %v106
    %v198 = vunpack.c.l.b16 %v107
    %v199 = vunpack.c.h.b16 %v107
    %v200 = vunpack.c.l.b16 %v108
    %v201 = vunpack.c.h.b16 %v108
    %v202 = vunpack.c.l.b16 %v109
    %v203 = vunpack.c.h.b16 %v109
    %v204 = vunpack.c.l.b16 %v110
    %v205 = vunpack.c.h.b16 %v110
    %v206 = vunpack.c.l.b16 %v111
    %v207 = vunpack.c.h.b16 %v111
    %v208 = vunpack.c.l.b16 %v112
    %v209 = vunpack.c.h.b16 %v112
    %v210 = vunpack.c.l.b16 %v113
    %v211 = vunpack.c.h.b16 %v113
    %v212 = vunpack.c.l.b16 %v114
    %v213 = vunpack.c.h.b16 %v114
    %v214 = vunpack.c.l.b16 %v115
    %v215 = vunpack.c.h.b16 %v115
    %v216 = vunpack.c.l.b16 %v116
    %v217 = vunpack.c.h.b16 %v116
    %v218 = vunpack.c.l.b16 %v117
    %v219 = vunpack.c.h.b16 %v117
    %v220 = vunpack.c.l.b16 %v118
    %v221 = vunpack.c.h.b16 %v118
    %v222 = vunpack.c.l.b16 %v119
    %v223 = vunpack.c.h.b16 %v119
    %v224 = vunpack.c.l.b16 %v120
    %v225 = vunpack.c.h.b16 %v120
    %v226 = vunpack.c.l.b16 %v121
    %v227 = vunpack.c.h.b16 %v121
    %v228 = vunpack.c.l.b16 %v122
    %v229 = vunpack.c.h.b16 %v122
    %v230 = vunpack.c.l.b16 %v123
    %v231 = vunpack.c.h.b16 %v123
    %v232 = vpack.c.b16 %v172, %v168
    %v233 = vpack.c.b16 %v173, %v169
    %v234 = vpack.c.b16 %v174, %v170
    %v235 = vpack.c.b16 %v175, %v171
    %v236 = vpack.c.b16 %v180, %v176
    %v237 = vpack.c.b16 %v181, %v177
    %v238 = vpack.c.b16 %v182, %v178
    %v239 = vpack.c.b16 %v183, %v179
    %v240 = vpack.c.b16 %v188, %v184
    %v241 = vpack.c.b16 %v189, %v185
    %v242 = vpack.c.b16 %v190, %v186
    %v243 = vpack.c.b16 %v191, %v187
    %v244 = vpack.c.b16 %v196, %v192
    %v245 = vpack.c.b16 %v197, %v193
    %v246 = vpack.c.b16 %v198, %v194
    %v247 = vpack.c.b16 %v199, %v195
    %v248 = vpack.c.b16 %v204, %v200
    %v249 = vpack.c.b16 %v205, %v201
    %v250 = vpack.c.b16 %v206, %v202
    %v251 = vpack.c.b16 %v207, %v203
    %v252 = vpack.c.b16 %v212, %v208
    %v253 = vpack.c.b16 %v213, %v209
    %v254 = vpack.c.b16 %v214, %v210
    %v255 = vpack.c.b16 %v215, %v211
    %v256 = vpack.c.b16 %v220, %v216
    %v257 = vpack.c.b16 %v221, %v217
    %v258 = vpack.c.b16 %v222, %v218
    %v259 = vpack.c.b16 %v223, %v219
    %v260 = vpack.c.b16 %v228, %v224
    %v261 = vpack.c.b16 %v229, %v225
    %v262 = vpack.c.b16 %v230, %v226
    %v263 = vpack.c.b16 %v231, %v227
    %296 = vmatprep.subr.bf16.mxu0 %v233
    %297 = vmatpush1.bf16.msra.mxu0 %v232
    %298 = vmatprep.subr.bf16.mxu0 %v237
    %299 = vmatpush1.bf16.msra.mxu0 %v236
    %300 = vmatprep.subr.bf16.mxu0 %v241
    %301 = vmatpush1.bf16.msra.mxu0 %v240
    %302 = vmatprep.subr.bf16.mxu0 %v245
    %303 = vmatpush1.bf16.msra.mxu0 %v244
    %304 = vmatprep.subr.bf16.mxu0 %v249
    %305 = vmatpush1.bf16.msra.mxu0 %v248
    %306 = vmatprep.subr.bf16.mxu0 %v253
    %307 = vmatpush1.bf16.msra.mxu0 %v252
    %308 = vmatprep.subr.bf16.mxu0 %v257
    %309 = vmatpush1.bf16.msra.mxu0 %v256
    %310 = vmatprep.subr.bf16.mxu0 %v261
    %311 = vmatpush1.bf16.msra.mxu0 %v260
    %312 = vmatprep.subr.bf16.mxu0 0
    %313 = vmatpush1.bf16.msra.mxu0 0
    %314 = vmatprep.subr.bf16.mxu0 0
    %315 = vmatpush1.bf16.msra.mxu0 0
    %316 = vmatprep.subr.bf16.mxu0 0
    %317 = vmatpush1.bf16.msra.mxu0 0
    %318 = vmatprep.subr.bf16.mxu0 0
    %319 = vmatpush1.bf16.msra.mxu0 0
    %320 = vmatprep.subr.bf16.mxu0 0
    %321 = vmatpush1.bf16.msra.mxu0 0
    %322 = vmatprep.subr.bf16.mxu0 0
    %323 = vmatpush1.bf16.msra.mxu0 0
    %324 = vmatprep.subr.bf16.mxu0 0
    %325 = vmatpush1.bf16.msra.mxu0 0
    %326 = vmatprep.subr.bf16.mxu0 0
    %327 = vmatpush1.bf16.msra.mxu0 0
    %328 = vmatprep.mubr.bf16.mxu0 0
    %329 = vmatmul.mubr.bf16.gmra.mrb[0].mxu0 %v132
    %v330 = vpop.f32.mrb[0].mxu0
    %v331 = vadd.f32 0.0, %v330
    %v332 = vpop.f32.mrb[0].mxu0
    %v333 = vadd.f32 0.0, %v332
    %v334 = vpop.f32.mrb[0].mxu0
    %v335 = vadd.f32 0.0, %v334
    %v336 = vpop.f32.mrb[0].mxu0
    %v337 = vadd.f32 0.0, %v336
    %338 = vmatprep.mubr.bf16.mxu0 0
    %339 = vmatmul.mubr.bf16.gmra.mrb[0].mxu0 %v133
    %v340 = vpop.f32.mrb[0].mxu0
    %v341 = vadd.f32 0.0, %v340
    %v342 = vpop.f32.mrb[0].mxu0
    %v343 = vadd.f32 0.0, %v342
    %v344 = vpop.f32.mrb[0].mxu0
    %v345 = vadd.f32 0.0, %v344
    %v346 = vpop.f32.mrb[0].mxu0
    %v347 = vadd.f32 0.0, %v346
    %348 = vdwg.mxu0
    %349 = vmatprep.subr.bf16.mxu0 %v235
    %350 = vmatpush1.bf16.msra.mxu0 %v234
    %351 = vmatprep.subr.bf16.mxu0 %v239
    %352 = vmatpush1.bf16.msra.mxu0 %v238
    %353 = vmatprep.subr.bf16.mxu0 %v243
    %354 = vmatpush1.bf16.msra.mxu0 %v242
    %355 = vmatprep.subr.bf16.mxu0 %v247
    %356 = vmatpush1.bf16.msra.mxu0 %v246
    %357 = vmatprep.subr.bf16.mxu0 %v251
    %358 = vmatpush1.bf16.msra.mxu0 %v250
    %359 = vmatprep.subr.bf16.mxu0 %v255
    %360 = vmatpush1.bf16.msra.mxu0 %v254
    %361 = vmatprep.subr.bf16.mxu0 %v259
    %362 = vmatpush1.bf16.msra.mxu0 %v258
    %363 = vmatprep.subr.bf16.mxu0 %v263
    %364 = vmatpush1.bf16.msra.mxu0 %v262
    %365 = vmatprep.subr.bf16.mxu0 0
    %366 = vmatpush1.bf16.msra.mxu0 0
    %367 = vmatprep.subr.bf16.mxu0 0
    %368 = vmatpush1.bf16.msra.mxu0 0
    %369 = vmatprep.subr.bf16.mxu0 0
    %370 = vmatpush1.bf16.msra.mxu0 0
    %371 = vmatprep.subr.bf16.mxu0 0
    %372 = vmatpush1.bf16.msra.mxu0 0
    %373 = vmatprep.subr.bf16.mxu0 0
    %374 = vmatpush1.bf16.msra.mxu0 0
    %375 = vmatprep.subr.bf16.mxu0 0
    %376 = vmatpush1.bf16.msra.mxu0 0
    %377 = vmatprep.subr.bf16.mxu0 0
    %378 = vmatpush1.bf16.msra.mxu0 0
    %379 = vmatprep.subr.bf16.mxu0 0
    %380 = vmatpush1.bf16.msra.mxu0 0
    %381 = vmatprep.mubr.bf16.mxu0 0
    %382 = vmatmul.mubr.bf16.gmra.mrb[0].mxu0 %v132
    %v383 = vpop.f32.mrb[0].mxu0
    %v384 = vadd.f32 0.0, %v383
    %v385 = vpop.f32.mrb[0].mxu0
    %v386 = vadd.f32 0.0, %v385
    %v387 = vpop.f32.mrb[0].mxu0
    %v388 = vadd.f32 0.0, %v387
    %v389 = vpop.f32.mrb[0].mxu0
    %v390 = vadd.f32 0.0, %v389
    %391 = vmatprep.mubr.bf16.mxu0 0
    %392 = vmatmul.mubr.bf16.gmra.mrb[0].mxu0 %v133
    %v393 = vpop.f32.mrb[0].mxu0
    %v394 = vadd.f32 0.0, %v393
    %v395 = vpop.f32.mrb[0].mxu0
    %v396 = vadd.f32 0.0, %v395
    %v397 = vpop.f32.mrb[0].mxu0
    %v398 = vadd.f32 0.0, %v397
    %v399 = vpop.f32.mrb[0].mxu0
    %v400 = vadd.f32 0.0, %v399
    %401 = vdwg.mxu0
    %v402 = vmax.f32 %v331, 0.0
    %v403 = vmax.f32 %v333, 0.0
    %v404 = vmax.f32 %v384, 0.0
    %v405 = vmax.f32 %v386, 0.0
    %v406 = vmax.f32 %v335, 0.0
    %v407 = vmax.f32 %v337, 0.0
    %v408 = vmax.f32 %v388, 0.0
    %v409 = vmax.f32 %v390, 0.0
    %v410 = vmax.f32 %v341, 0.0
    %v411 = vmax.f32 %v343, 0.0
    %v412 = vmax.f32 %v394, 0.0
    %v413 = vmax.f32 %v396, 0.0
    %v414 = vmax.f32 %v345, 0.0
    %v415 = vmax.f32 %v347, 0.0
    %v416 = vmax.f32 %v398, 0.0
    %v417 = vmax.f32 %v400, 0.0
    %v418 = vpack.c.bf16 %v406, %v402
    %v419 = vpack.c.bf16 %v407, %v403
    %v420 = vpack.c.bf16 %v408, %v404
    %v421 = vpack.c.bf16 %v409, %v405
    %v422 = vpack.c.bf16 %v414, %v410
    %v423 = vpack.c.bf16 %v415, %v411
    %v424 = vpack.c.bf16 %v416, %v412
    %v425 = vpack.c.bf16 %v417, %v413
    %v430 = vrot.slane %v418, 1
    %v431 = vrot.slane %v419, 1
    %v432 = vrot.slane %v420, 1
    %v433 = vrot.slane %v421, 1
    %v442 = vrot.slane %v422, 1
    %v443 = vrot.slane %v423, 1
    %v444 = vrot.slane %v424, 1
    %v445 = vrot.slane %v425, 1
    %v450 = vld [vmem:[#allocation4] sm:$0xff]
    %v451 = vld [vmem:[#allocation4 + $0x8] sm:$0xff]
    %v452 = vld [vmem:[#allocation4 + $0x10] sm:$0xff]
    %v453 = vld [vmem:[#allocation4 + $0x18] sm:$0xff]
    %v454 = vld [vmem:[#allocation4 + $0x20] sm:$0xff]
    %v455 = vld [vmem:[#allocation4 + $0x28] sm:$0xff]
    %v456 = vld [vmem:[#allocation4 + $0x30] sm:$0xff]
    %v457 = vld [vmem:[#allocation4 + $0x38] sm:$0xff]
    %v458 = vld [vmem:[#allocation4 + $0x40] sm:$0xff]
    %v459 = vld [vmem:[#allocation4 + $0x48] sm:$0xff]
    %v460 = vld [vmem:[#allocation4 + $0x50] sm:$0xff]
    %v461 = vld [vmem:[#allocation4 + $0x58] sm:$0xff]
    %v462 = vld [vmem:[#allocation4 + $0x60] sm:$0xff]
    %v463 = vld [vmem:[#allocation4 + $0x68] sm:$0xff]
    %v464 = vld [vmem:[#allocation4 + $0x70] sm:$0xff]
    %v465 = vld [vmem:[#allocation4 + $0x78] sm:$0xff]
    %v466 = vld [vmem:[#allocation4 + $0x80] sm:$0xff]
    %v467 = vld [vmem:[#allocation4 + $0x88] sm:$0xff]
    %v468 = vld [vmem:[#allocation4 + $0x90] sm:$0xff]
    %v469 = vld [vmem:[#allocation4 + $0x98] sm:$0xff]
    %v470 = vld [vmem:[#allocation4 + $0xa0] sm:$0xff]
    %v471 = vld [vmem:[#allocation4 + $0xa8] sm:$0xff]
    %v472 = vld [vmem:[#allocation4 + $0xb0] sm:$0xff]
    %v473 = vld [vmem:[#allocation4 + $0xb8] sm:$0xff]
    %v474 = vld [vmem:[#allocation4 + $0xc0] sm:$0xff]
    %v475 = vld [vmem:[#allocation4 + $0xc8] sm:$0xff]
    %v476 = vld [vmem:[#allocation4 + $0xd0] sm:$0xff]
    %v477 = vld [vmem:[#allocation4 + $0xd8] sm:$0xff]
    %v478 = vld [vmem:[#allocation4 + $0xe0] sm:$0xff]
    %v479 = vld [vmem:[#allocation4 + $0xe8] sm:$0xff]
    %v480 = vld [vmem:[#allocation4 + $0xf0] sm:$0xff]
    %v481 = vld [vmem:[#allocation4 + $0xf8] sm:$0xff]
    %v482 = vld [vmem:[#allocation4 + $0x100] sm:$0xff]
    %v483 = vld [vmem:[#allocation4 + $0x108] sm:$0xff]
    %v484 = vld [vmem:[#allocation4 + $0x110] sm:$0xff]
    %v485 = vld [vmem:[#allocation4 + $0x118] sm:$0xff]
    %v486 = vld [vmem:[#allocation4 + $0x120] sm:$0xff]
    %v487 = vld [vmem:[#allocation4 + $0x128] sm:$0xff]
    %v488 = vld [vmem:[#allocation4 + $0x130] sm:$0xff]
    %v489 = vld [vmem:[#allocation4 + $0x138] sm:$0xff]
    %v490 = vld [vmem:[#allocation4 + $0x140] sm:$0xff]
    %v491 = vld [vmem:[#allocation4 + $0x148] sm:$0xff]
    %v492 = vld [vmem:[#allocation4 + $0x150] sm:$0xff]
    %v493 = vld [vmem:[#allocation4 + $0x158] sm:$0xff]
    %v494 = vld [vmem:[#allocation4 + $0x160] sm:$0xff]
    %v495 = vld [vmem:[#allocation4 + $0x168] sm:$0xff]
    %v496 = vld [vmem:[#allocation4 + $0x170] sm:$0xff]
    %v497 = vld [vmem:[#allocation4 + $0x178] sm:$0xff]
    %v498 = vld [vmem:[#allocation4 + $0x180] sm:$0xff]
    %v499 = vld [vmem:[#allocation4 + $0x188] sm:$0xff]
    %v500 = vld [vmem:[#allocation4 + $0x190] sm:$0xff]
    %v501 = vld [vmem:[#allocation4 + $0x198] sm:$0xff]
    %v502 = vld [vmem:[#allocation4 + $0x1a0] sm:$0xff]
    %v503 = vld [vmem:[#allocation4 + $0x1a8] sm:$0xff]
    %v504 = vld [vmem:[#allocation4 + $0x1b0] sm:$0xff]
    %v505 = vld [vmem:[#allocation4 + $0x1b8] sm:$0xff]
    %v506 = vld [vmem:[#allocation4 + $0x1c0] sm:$0xff]
    %v507 = vld [vmem:[#allocation4 + $0x1c8] sm:$0xff]
    %v508 = vld [vmem:[#allocation4 + $0x1d0] sm:$0xff]
    %v509 = vld [vmem:[#allocation4 + $0x1d8] sm:$0xff]
    %v510 = vld [vmem:[#allocation4 + $0x1e0] sm:$0xff]
    %v511 = vld [vmem:[#allocation4 + $0x1e8] sm:$0xff]
    %v512 = vld [vmem:[#allocation4 + $0x1f0] sm:$0xff]
    %v513 = vld [vmem:[#allocation4 + $0x1f8] sm:$0xff]
    %v514 = vld [vmem:[#allocation4 + $0x200] sm:$0xff]
    %v515 = vld [vmem:[#allocation4 + $0x208] sm:$0xff]
    %v516 = vld [vmem:[#allocation4 + $0x210] sm:$0xff]
    %v517 = vld [vmem:[#allocation4 + $0x218] sm:$0xff]
    %v518 = vld [vmem:[#allocation4 + $0x220] sm:$0xff]
    %v519 = vld [vmem:[#allocation4 + $0x228] sm:$0xff]
    %v520 = vld [vmem:[#allocation4 + $0x230] sm:$0xff]
    %v521 = vld [vmem:[#allocation4 + $0x238] sm:$0xff]
    %v522 = vld [vmem:[#allocation4 + $0x240] sm:$0xff]
    %v523 = vld [vmem:[#allocation4 + $0x248] sm:$0xff]
    %v524 = vld [vmem:[#allocation4 + $0x250] sm:$0xff]
    %v525 = vld [vmem:[#allocation4 + $0x258] sm:$0xff]
    %v526 = vld [vmem:[#allocation4 + $0x260] sm:$0xff]
    %v527 = vld [vmem:[#allocation4 + $0x268] sm:$0xff]
    %v528 = vld [vmem:[#allocation4 + $0x270] sm:$0xff]
    %v529 = vld [vmem:[#allocation4 + $0x278] sm:$0xff]
    %v530 = vld [vmem:[#allocation4 + $0x280] sm:$0xff]
    %v531 = vld [vmem:[#allocation4 + $0x288] sm:$0xff]
    %v532 = vld [vmem:[#allocation4 + $0x290] sm:$0xff]
    %v533 = vld [vmem:[#allocation4 + $0x298] sm:$0xff]
    %v534 = vld [vmem:[#allocation4 + $0x2a0] sm:$0xff]
    %v535 = vld [vmem:[#allocation4 + $0x2a8] sm:$0xff]
    %v536 = vld [vmem:[#allocation4 + $0x2b0] sm:$0xff]
    %v537 = vld [vmem:[#allocation4 + $0x2b8] sm:$0xff]
    %v538 = vld [vmem:[#allocation4 + $0x2c0] sm:$0xff]
    %v539 = vld [vmem:[#allocation4 + $0x2c8] sm:$0xff]
    %v540 = vld [vmem:[#allocation4 + $0x2d0] sm:$0xff]
    %v541 = vld [vmem:[#allocation4 + $0x2d8] sm:$0xff]
    %v542 = vld [vmem:[#allocation4 + $0x2e0] sm:$0xff]
    %v543 = vld [vmem:[#allocation4 + $0x2e8] sm:$0xff]
    %v544 = vld [vmem:[#allocation4 + $0x2f0] sm:$0xff]
    %v545 = vld [vmem:[#allocation4 + $0x2f8] sm:$0xff]
    %v546 = vld [vmem:[#allocation4 + $0x300] sm:$0xff]
    %v547 = vld [vmem:[#allocation4 + $0x308] sm:$0xff]
    %v548 = vld [vmem:[#allocation4 + $0x310] sm:$0xff]
    %v549 = vld [vmem:[#allocation4 + $0x318] sm:$0xff]
    %v550 = vld [vmem:[#allocation4 + $0x320] sm:$0xff]
    %v551 = vld [vmem:[#allocation4 + $0x328] sm:$0xff]
    %v552 = vld [vmem:[#allocation4 + $0x330] sm:$0xff]
    %v553 = vld [vmem:[#allocation4 + $0x338] sm:$0xff]
    %v554 = vld [vmem:[#allocation4 + $0x340] sm:$0xff]
    %v555 = vld [vmem:[#allocation4 + $0x348] sm:$0xff]
    %v556 = vld [vmem:[#allocation4 + $0x350] sm:$0xff]
    %v557 = vld [vmem:[#allocation4 + $0x358] sm:$0xff]
    %v558 = vld [vmem:[#allocation4 + $0x360] sm:$0xff]
    %v559 = vld [vmem:[#allocation4 + $0x368] sm:$0xff]
    %v560 = vld [vmem:[#allocation4 + $0x370] sm:$0xff]
    %v561 = vld [vmem:[#allocation4 + $0x378] sm:$0xff]
    %v562 = vld [vmem:[#allocation4 + $0x380] sm:$0xff]
    %v563 = vld [vmem:[#allocation4 + $0x388] sm:$0xff]
    %v564 = vld [vmem:[#allocation4 + $0x390] sm:$0xff]
    %v565 = vld [vmem:[#allocation4 + $0x398] sm:$0xff]
    %v566 = vld [vmem:[#allocation4 + $0x3a0] sm:$0xff]
    %v567 = vld [vmem:[#allocation4 + $0x3a8] sm:$0xff]
    %v568 = vld [vmem:[#allocation4 + $0x3b0] sm:$0xff]
    %v569 = vld [vmem:[#allocation4 + $0x3b8] sm:$0xff]
    %v570 = vld [vmem:[#allocation4 + $0x3c0] sm:$0xff]
    %v571 = vld [vmem:[#allocation4 + $0x3c8] sm:$0xff]
    %v572 = vld [vmem:[#allocation4 + $0x3d0] sm:$0xff]
    %v573 = vld [vmem:[#allocation4 + $0x3d8] sm:$0xff]
    %v574 = vld [vmem:[#allocation4 + $0x3e0] sm:$0xff]
    %v575 = vld [vmem:[#allocation4 + $0x3e8] sm:$0xff]
    %v576 = vld [vmem:[#allocation4 + $0x3f0] sm:$0xff]
    %v577 = vld [vmem:[#allocation4 + $0x3f8] sm:$0xff]
    %v578 = vld [vmem:[#allocation4 + $0x400] sm:$0xff]
    %v579 = vld [vmem:[#allocation4 + $0x408] sm:$0xff]
    %v580 = vld [vmem:[#allocation4 + $0x410] sm:$0xff]
    %v581 = vld [vmem:[#allocation4 + $0x418] sm:$0xff]
    %v582 = vld [vmem:[#allocation4 + $0x420] sm:$0xff]
    %v583 = vld [vmem:[#allocation4 + $0x428] sm:$0xff]
    %v584 = vld [vmem:[#allocation4 + $0x430] sm:$0xff]
    %v585 = vld [vmem:[#allocation4 + $0x438] sm:$0xff]
    %v586 = vld [vmem:[#allocation4 + $0x440] sm:$0xff]
    %v587 = vld [vmem:[#allocation4 + $0x448] sm:$0xff]
    %v588 = vld [vmem:[#allocation4 + $0x450] sm:$0xff]
    %v589 = vld [vmem:[#allocation4 + $0x458] sm:$0xff]
    %v590 = vld [vmem:[#allocation4 + $0x460] sm:$0xff]
    %v591 = vld [vmem:[#allocation4 + $0x468] sm:$0xff]
    %v592 = vld [vmem:[#allocation4 + $0x470] sm:$0xff]
    %v593 = vld [vmem:[#allocation4 + $0x478] sm:$0xff]
    %v594 = vld [vmem:[#allocation4 + $0x480] sm:$0xff]
    %v595 = vld [vmem:[#allocation4 + $0x488] sm:$0xff]
    %v596 = vld [vmem:[#allocation4 + $0x490] sm:$0xff]
    %v597 = vld [vmem:[#allocation4 + $0x498] sm:$0xff]
    %v598 = vld [vmem:[#allocation4 + $0x4a0] sm:$0xff]
    %v599 = vld [vmem:[#allocation4 + $0x4a8] sm:$0xff]
    %v600 = vld [vmem:[#allocation4 + $0x4b0] sm:$0xff]
    %v601 = vld [vmem:[#allocation4 + $0x4b8] sm:$0xff]
    %v602 = vld [vmem:[#allocation4 + $0x4c0] sm:$0xff]
    %v603 = vld [vmem:[#allocation4 + $0x4c8] sm:$0xff]
    %v604 = vld [vmem:[#allocation4 + $0x4d0] sm:$0xff]
    %v605 = vld [vmem:[#allocation4 + $0x4d8] sm:$0xff]
    %v606 = vld [vmem:[#allocation4 + $0x4e0] sm:$0xff]
    %v607 = vld [vmem:[#allocation4 + $0x4e8] sm:$0xff]
    %v608 = vld [vmem:[#allocation4 + $0x4f0] sm:$0xff]
    %v609 = vld [vmem:[#allocation4 + $0x4f8] sm:$0xff]
    %v610 = vld [vmem:[#allocation4 + $0x500] sm:$0xff]
    %v611 = vld [vmem:[#allocation4 + $0x508] sm:$0xff]
    %v612 = vld [vmem:[#allocation4 + $0x510] sm:$0xff]
    %v613 = vld [vmem:[#allocation4 + $0x518] sm:$0xff]
    %v614 = vld [vmem:[#allocation4 + $0x520] sm:$0xff]
    %v615 = vld [vmem:[#allocation4 + $0x528] sm:$0xff]
    %v616 = vld [vmem:[#allocation4 + $0x530] sm:$0xff]
    %v617 = vld [vmem:[#allocation4 + $0x538] sm:$0xff]
    %v618 = vld [vmem:[#allocation4 + $0x540] sm:$0xff]
    %v619 = vld [vmem:[#allocation4 + $0x548] sm:$0xff]
    %v620 = vld [vmem:[#allocation4 + $0x550] sm:$0xff]
    %v621 = vld [vmem:[#allocation4 + $0x558] sm:$0xff]
    %v622 = vld [vmem:[#allocation4 + $0x560] sm:$0xff]
    %v623 = vld [vmem:[#allocation4 + $0x568] sm:$0xff]
    %v624 = vld [vmem:[#allocation4 + $0x570] sm:$0xff]
    %v625 = vld [vmem:[#allocation4 + $0x578] sm:$0xff]
    %v626 = vld [vmem:[#allocation4 + $0x580] sm:$0xff]
    %v627 = vld [vmem:[#allocation4 + $0x588] sm:$0xff]
    %v628 = vld [vmem:[#allocation4 + $0x590] sm:$0xff]
    %v629 = vld [vmem:[#allocation4 + $0x598] sm:$0xff]
    %v630 = vld [vmem:[#allocation4 + $0x5a0] sm:$0xff]
    %v631 = vld [vmem:[#allocation4 + $0x5a8] sm:$0xff]
    %v632 = vld [vmem:[#allocation4 + $0x5b0] sm:$0xff]
    %v633 = vld [vmem:[#allocation4 + $0x5b8] sm:$0xff]
    %v634 = vld [vmem:[#allocation4 + $0x5c0] sm:$0xff]
    %v635 = vld [vmem:[#allocation4 + $0x5c8] sm:$0xff]
    %v636 = vld [vmem:[#allocation4 + $0x5d0] sm:$0xff]
    %v637 = vld [vmem:[#allocation4 + $0x5d8] sm:$0xff]
    %v638 = vld [vmem:[#allocation4 + $0x5e0] sm:$0xff]
    %v639 = vld [vmem:[#allocation4 + $0x5e8] sm:$0xff]
    %v640 = vld [vmem:[#allocation4 + $0x5f0] sm:$0xff]
    %v641 = vld [vmem:[#allocation4 + $0x5f8] sm:$0xff]
    %v642 = vld [vmem:[#allocation4 + $0x600] sm:$0xff]
    %v643 = vld [vmem:[#allocation4 + $0x608] sm:$0xff]
    %v644 = vld [vmem:[#allocation4 + $0x610] sm:$0xff]
    %v645 = vld [vmem:[#allocation4 + $0x618] sm:$0xff]
    %v646 = vld [vmem:[#allocation4 + $0x620] sm:$0xff]
    %v647 = vld [vmem:[#allocation4 + $0x628] sm:$0xff]
    %v648 = vld [vmem:[#allocation4 + $0x630] sm:$0xff]
    %v649 = vld [vmem:[#allocation4 + $0x638] sm:$0xff]
    %v650 = vld [vmem:[#allocation4 + $0x640] sm:$0xff]
    %v651 = vld [vmem:[#allocation4 + $0x648] sm:$0xff]
    %v652 = vld [vmem:[#allocation4 + $0x650] sm:$0xff]
    %v653 = vld [vmem:[#allocation4 + $0x658] sm:$0xff]
    %v654 = vld [vmem:[#allocation4 + $0x660] sm:$0xff]
    %v655 = vld [vmem:[#allocation4 + $0x668] sm:$0xff]
    %v656 = vld [vmem:[#allocation4 + $0x670] sm:$0xff]
    %v657 = vld [vmem:[#allocation4 + $0x678] sm:$0xff]
    %v658 = vld [vmem:[#allocation4 + $0x680] sm:$0xff]
    %v659 = vld [vmem:[#allocation4 + $0x688] sm:$0xff]
    %v660 = vld [vmem:[#allocation4 + $0x690] sm:$0xff]
    %v661 = vld [vmem:[#allocation4 + $0x698] sm:$0xff]
    %v662 = vld [vmem:[#allocation4 + $0x6a0] sm:$0xff]
    %v663 = vld [vmem:[#allocation4 + $0x6a8] sm:$0xff]
    %v664 = vld [vmem:[#allocation4 + $0x6b0] sm:$0xff]
    %v665 = vld [vmem:[#allocation4 + $0x6b8] sm:$0xff]
    %v666 = vld [vmem:[#allocation4 + $0x6c0] sm:$0xff]
    %v667 = vld [vmem:[#allocation4 + $0x6c8] sm:$0xff]
    %v668 = vld [vmem:[#allocation4 + $0x6d0] sm:$0xff]
    %v669 = vld [vmem:[#allocation4 + $0x6d8] sm:$0xff]
    %v670 = vld [vmem:[#allocation4 + $0x6e0] sm:$0xff]
    %v671 = vld [vmem:[#allocation4 + $0x6e8] sm:$0xff]
    %v672 = vld [vmem:[#allocation4 + $0x6f0] sm:$0xff]
    %v673 = vld [vmem:[#allocation4 + $0x6f8] sm:$0xff]
    %v674 = vld [vmem:[#allocation4 + $0x700] sm:$0xff]
    %v675 = vld [vmem:[#allocation4 + $0x708] sm:$0xff]
    %v676 = vld [vmem:[#allocation4 + $0x710] sm:$0xff]
    %v677 = vld [vmem:[#allocation4 + $0x718] sm:$0xff]
    %v678 = vld [vmem:[#allocation4 + $0x720] sm:$0xff]
    %v679 = vld [vmem:[#allocation4 + $0x728] sm:$0xff]
    %v680 = vld [vmem:[#allocation4 + $0x730] sm:$0xff]
    %v681 = vld [vmem:[#allocation4 + $0x738] sm:$0xff]
    %v682 = vld [vmem:[#allocation4 + $0x740] sm:$0xff]
    %v683 = vld [vmem:[#allocation4 + $0x748] sm:$0xff]
    %v684 = vld [vmem:[#allocation4 + $0x750] sm:$0xff]
    %v685 = vld [vmem:[#allocation4 + $0x758] sm:$0xff]
    %v686 = vld [vmem:[#allocation4 + $0x760] sm:$0xff]
    %v687 = vld [vmem:[#allocation4 + $0x768] sm:$0xff]
    %v688 = vld [vmem:[#allocation4 + $0x770] sm:$0xff]
    %v689 = vld [vmem:[#allocation4 + $0x778] sm:$0xff]
    %v690 = vld [vmem:[#allocation4 + $0x780] sm:$0xff]
    %v691 = vld [vmem:[#allocation4 + $0x788] sm:$0xff]
    %v692 = vld [vmem:[#allocation4 + $0x790] sm:$0xff]
    %v693 = vld [vmem:[#allocation4 + $0x798] sm:$0xff]
    %v694 = vld [vmem:[#allocation4 + $0x7a0] sm:$0xff]
    %v695 = vld [vmem:[#allocation4 + $0x7a8] sm:$0xff]
    %v696 = vld [vmem:[#allocation4 + $0x7b0] sm:$0xff]
    %v697 = vld [vmem:[#allocation4 + $0x7b8] sm:$0xff]
    %v698 = vld [vmem:[#allocation4 + $0x7c0] sm:$0xff]
    %v699 = vld [vmem:[#allocation4 + $0x7c8] sm:$0xff]
    %v700 = vld [vmem:[#allocation4 + $0x7d0] sm:$0xff]
    %v701 = vld [vmem:[#allocation4 + $0x7d8] sm:$0xff]
    %v702 = vld [vmem:[#allocation4 + $0x7e0] sm:$0xff]
    %v703 = vld [vmem:[#allocation4 + $0x7e8] sm:$0xff]
    %v704 = vld [vmem:[#allocation4 + $0x7f0] sm:$0xff]
    %v705 = vld [vmem:[#allocation4 + $0x7f8] sm:$0xff]
    %v706 = vld [vmem:[#allocation4 + $0x800] sm:$0xff]
    %v707 = vld [vmem:[#allocation4 + $0x808] sm:$0xff]
    %v708 = vld [vmem:[#allocation4 + $0x810] sm:$0xff]
    %v709 = vld [vmem:[#allocation4 + $0x818] sm:$0xff]
    %v710 = vld [vmem:[#allocation4 + $0x820] sm:$0xff]
    %v711 = vld [vmem:[#allocation4 + $0x828] sm:$0xff]
    %v712 = vld [vmem:[#allocation4 + $0x830] sm:$0xff]
    %v713 = vld [vmem:[#allocation4 + $0x838] sm:$0xff]
    %v714 = vld [vmem:[#allocation4 + $0x840] sm:$0xff]
    %v715 = vld [vmem:[#allocation4 + $0x848] sm:$0xff]
    %v716 = vld [vmem:[#allocation4 + $0x850] sm:$0xff]
    %v717 = vld [vmem:[#allocation4 + $0x858] sm:$0xff]
    %v718 = vld [vmem:[#allocation4 + $0x860] sm:$0xff]
    %v719 = vld [vmem:[#allocation4 + $0x868] sm:$0xff]
    %v720 = vld [vmem:[#allocation4 + $0x870] sm:$0xff]
    %v721 = vld [vmem:[#allocation4 + $0x878] sm:$0xff]
    %v722 = vld [vmem:[#allocation4 + $0x880] sm:$0xff]
    %v723 = vld [vmem:[#allocation4 + $0x888] sm:$0xff]
    %v724 = vld [vmem:[#allocation4 + $0x890] sm:$0xff]
    %v725 = vld [vmem:[#allocation4 + $0x898] sm:$0xff]
    %v726 = vld [vmem:[#allocation4 + $0x8a0] sm:$0xff]
    %v727 = vld [vmem:[#allocation4 + $0x8a8] sm:$0xff]
    %v728 = vld [vmem:[#allocation4 + $0x8b0] sm:$0xff]
    %v729 = vld [vmem:[#allocation4 + $0x8b8] sm:$0xff]
    %v730 = vld [vmem:[#allocation4 + $0x8c0] sm:$0xff]
    %v731 = vld [vmem:[#allocation4 + $0x8c8] sm:$0xff]
    %v732 = vld [vmem:[#allocation4 + $0x8d0] sm:$0xff]
    %v733 = vld [vmem:[#allocation4 + $0x8d8] sm:$0xff]
    %v734 = vld [vmem:[#allocation4 + $0x8e0] sm:$0xff]
    %v735 = vld [vmem:[#allocation4 + $0x8e8] sm:$0xff]
    %v736 = vld [vmem:[#allocation4 + $0x8f0] sm:$0xff]
    %v737 = vld [vmem:[#allocation4 + $0x8f8] sm:$0xff]
    %v738 = vld [vmem:[#allocation4 + $0x900] sm:$0xff]
    %v739 = vld [vmem:[#allocation4 + $0x908] sm:$0xff]
    %v740 = vld [vmem:[#allocation4 + $0x910] sm:$0xff]
    %v741 = vld [vmem:[#allocation4 + $0x918] sm:$0xff]
    %v742 = vld [vmem:[#allocation4 + $0x920] sm:$0xff]
    %v743 = vld [vmem:[#allocation4 + $0x928] sm:$0xff]
    %v744 = vld [vmem:[#allocation4 + $0x930] sm:$0xff]
    %v745 = vld [vmem:[#allocation4 + $0x938] sm:$0xff]
    %v746 = vld [vmem:[#allocation4 + $0x940] sm:$0xff]
    %v747 = vld [vmem:[#allocation4 + $0x948] sm:$0xff]
    %v748 = vld [vmem:[#allocation4 + $0x950] sm:$0xff]
    %v749 = vld [vmem:[#allocation4 + $0x958] sm:$0xff]
    %v750 = vld [vmem:[#allocation4 + $0x960] sm:$0xff]
    %v751 = vld [vmem:[#allocation4 + $0x968] sm:$0xff]
    %v752 = vld [vmem:[#allocation4 + $0x970] sm:$0xff]
    %v753 = vld [vmem:[#allocation4 + $0x978] sm:$0xff]
    %v754 = vld [vmem:[#allocation4 + $0x980] sm:$0xff]
    %v755 = vld [vmem:[#allocation4 + $0x988] sm:$0xff]
    %v756 = vld [vmem:[#allocation4 + $0x990] sm:$0xff]
    %v757 = vld [vmem:[#allocation4 + $0x998] sm:$0xff]
    %v758 = vld [vmem:[#allocation4 + $0x9a0] sm:$0xff]
    %v759 = vld [vmem:[#allocation4 + $0x9a8] sm:$0xff]
    %v760 = vld [vmem:[#allocation4 + $0x9b0] sm:$0xff]
    %v761 = vld [vmem:[#allocation4 + $0x9b8] sm:$0xff]
    %v762 = vld [vmem:[#allocation4 + $0x9c0] sm:$0xff]
    %v763 = vld [vmem:[#allocation4 + $0x9c8] sm:$0xff]
    %v764 = vld [vmem:[#allocation4 + $0x9d0] sm:$0xff]
    %v765 = vld [vmem:[#allocation4 + $0x9d8] sm:$0xff]
    %v766 = vld [vmem:[#allocation4 + $0x9e0] sm:$0xff]
    %v767 = vld [vmem:[#allocation4 + $0x9e8] sm:$0xff]
    %v768 = vld [vmem:[#allocation4 + $0x9f0] sm:$0xff]
    %v769 = vld [vmem:[#allocation4 + $0x9f8] sm:$0xff]
    %v770 = vld [vmem:[#allocation4 + $0xa00] sm:$0xff]
    %v771 = vld [vmem:[#allocation4 + $0xa08] sm:$0xff]
    %v772 = vld [vmem:[#allocation4 + $0xa10] sm:$0xff]
    %v773 = vld [vmem:[#allocation4 + $0xa18] sm:$0xff]
    %v774 = vld [vmem:[#allocation4 + $0xa20] sm:$0xff]
    %v775 = vld [vmem:[#allocation4 + $0xa28] sm:$0xff]
    %v776 = vld [vmem:[#allocation4 + $0xa30] sm:$0xff]
    %v777 = vld [vmem:[#allocation4 + $0xa38] sm:$0xff]
    %v778 = vld [vmem:[#allocation4 + $0xa40] sm:$0xff]
    %v779 = vld [vmem:[#allocation4 + $0xa48] sm:$0xff]
    %v780 = vld [vmem:[#allocation4 + $0xa50] sm:$0xff]
    %v781 = vld [vmem:[#allocation4 + $0xa58] sm:$0xff]
    %v782 = vld [vmem:[#allocation4 + $0xa60] sm:$0xff]
    %v783 = vld [vmem:[#allocation4 + $0xa68] sm:$0xff]
    %v784 = vld [vmem:[#allocation4 + $0xa70] sm:$0xff]
    %v785 = vld [vmem:[#allocation4 + $0xa78] sm:$0xff]
    %v786 = vld [vmem:[#allocation4 + $0xa80] sm:$0xff]
    %v787 = vld [vmem:[#allocation4 + $0xa88] sm:$0xff]
    %v788 = vld [vmem:[#allocation4 + $0xa90] sm:$0xff]
    %v789 = vld [vmem:[#allocation4 + $0xa98] sm:$0xff]
    %v790 = vld [vmem:[#allocation4 + $0xaa0] sm:$0xff]
    %v791 = vld [vmem:[#allocation4 + $0xaa8] sm:$0xff]
    %v792 = vld [vmem:[#allocation4 + $0xab0] sm:$0xff]
    %v793 = vld [vmem:[#allocation4 + $0xab8] sm:$0xff]
    %v794 = vld [vmem:[#allocation4 + $0xac0] sm:$0xff]
    %v795 = vld [vmem:[#allocation4 + $0xac8] sm:$0xff]
    %v796 = vld [vmem:[#allocation4 + $0xad0] sm:$0xff]
    %v797 = vld [vmem:[#allocation4 + $0xad8] sm:$0xff]
    %v798 = vld [vmem:[#allocation4 + $0xae0] sm:$0xff]
    %v799 = vld [vmem:[#allocation4 + $0xae8] sm:$0xff]
    %v800 = vld [vmem:[#allocation4 + $0xaf0] sm:$0xff]
    %v801 = vld [vmem:[#allocation4 + $0xaf8] sm:$0xff]
    %v802 = vld [vmem:[#allocation4 + $0xb00] sm:$0xff]
    %v803 = vld [vmem:[#allocation4 + $0xb08] sm:$0xff]
    %v804 = vld [vmem:[#allocation4 + $0xb10] sm:$0xff]
    %v805 = vld [vmem:[#allocation4 + $0xb18] sm:$0xff]
    %v806 = vld [vmem:[#allocation4 + $0xb20] sm:$0xff]
    %v807 = vld [vmem:[#allocation4 + $0xb28] sm:$0xff]
    %v808 = vld [vmem:[#allocation4 + $0xb30] sm:$0xff]
    %v809 = vld [vmem:[#allocation4 + $0xb38] sm:$0xff]
    %v810 = vld [vmem:[#allocation4 + $0xb40] sm:$0xff]
    %v811 = vld [vmem:[#allocation4 + $0xb48] sm:$0xff]
    %v812 = vld [vmem:[#allocation4 + $0xb50] sm:$0xff]
    %v813 = vld [vmem:[#allocation4 + $0xb58] sm:$0xff]
    %v814 = vld [vmem:[#allocation4 + $0xb60] sm:$0xff]
    %v815 = vld [vmem:[#allocation4 + $0xb68] sm:$0xff]
    %v816 = vld [vmem:[#allocation4 + $0xb70] sm:$0xff]
    %v817 = vld [vmem:[#allocation4 + $0xb78] sm:$0xff]
    %v818 = vld [vmem:[#allocation4 + $0xb80] sm:$0xff]
    %v819 = vld [vmem:[#allocation4 + $0xb88] sm:$0xff]
    %v820 = vld [vmem:[#allocation4 + $0xb90] sm:$0xff]
    %v821 = vld [vmem:[#allocation4 + $0xb98] sm:$0xff]
    %v822 = vld [vmem:[#allocation4 + $0xba0] sm:$0xff]
    %v823 = vld [vmem:[#allocation4 + $0xba8] sm:$0xff]
    %v824 = vld [vmem:[#allocation4 + $0xbb0] sm:$0xff]
    %v825 = vld [vmem:[#allocation4 + $0xbb8] sm:$0xff]
    %v826 = vld [vmem:[#allocation4 + $0xbc0] sm:$0xff]
    %v827 = vld [vmem:[#allocation4 + $0xbc8] sm:$0xff]
    %v828 = vld [vmem:[#allocation4 + $0xbd0] sm:$0xff]
    %v829 = vld [vmem:[#allocation4 + $0xbd8] sm:$0xff]
    %v830 = vld [vmem:[#allocation4 + $0xbe0] sm:$0xff]
    %v831 = vld [vmem:[#allocation4 + $0xbe8] sm:$0xff]
    %v832 = vld [vmem:[#allocation4 + $0xbf0] sm:$0xff]
    %v833 = vld [vmem:[#allocation4 + $0xbf8] sm:$0xff]
    %v834 = vld [vmem:[#allocation4 + $0xc00] sm:$0xff]
    %v835 = vld [vmem:[#allocation4 + $0xc08] sm:$0xff]
    %v836 = vld [vmem:[#allocation4 + $0xc10] sm:$0xff]
    %v837 = vld [vmem:[#allocation4 + $0xc18] sm:$0xff]
    %v838 = vld [vmem:[#allocation4 + $0xc20] sm:$0xff]
    %v839 = vld [vmem:[#allocation4 + $0xc28] sm:$0xff]
    %v840 = vld [vmem:[#allocation4 + $0xc30] sm:$0xff]
    %v841 = vld [vmem:[#allocation4 + $0xc38] sm:$0xff]
    %v842 = vld [vmem:[#allocation4 + $0xc40] sm:$0xff]
    %v843 = vld [vmem:[#allocation4 + $0xc48] sm:$0xff]
    %v844 = vld [vmem:[#allocation4 + $0xc50] sm:$0xff]
    %v845 = vld [vmem:[#allocation4 + $0xc58] sm:$0xff]
    %v846 = vld [vmem:[#allocation4 + $0xc60] sm:$0xff]
    %v847 = vld [vmem:[#allocation4 + $0xc68] sm:$0xff]
    %v848 = vld [vmem:[#allocation4 + $0xc70] sm:$0xff]
    %v849 = vld [vmem:[#allocation4 + $0xc78] sm:$0xff]
    %v850 = vld [vmem:[#allocation4 + $0xc80] sm:$0xff]
    %v851 = vld [vmem:[#allocation4 + $0xc88] sm:$0xff]
    %v852 = vld [vmem:[#allocation4 + $0xc90] sm:$0xff]
    %v853 = vld [vmem:[#allocation4 + $0xc98] sm:$0xff]
    %v854 = vld [vmem:[#allocation4 + $0xca0] sm:$0xff]
    %v855 = vld [vmem:[#allocation4 + $0xca8] sm:$0xff]
    %v856 = vld [vmem:[#allocation4 + $0xcb0] sm:$0xff]
    %v857 = vld [vmem:[#allocation4 + $0xcb8] sm:$0xff]
    %v858 = vld [vmem:[#allocation4 + $0xcc0] sm:$0xff]
    %v859 = vld [vmem:[#allocation4 + $0xcc8] sm:$0xff]
    %v860 = vld [vmem:[#allocation4 + $0xcd0] sm:$0xff]
    %v861 = vld [vmem:[#allocation4 + $0xcd8] sm:$0xff]
    %v862 = vld [vmem:[#allocation4 + $0xce0] sm:$0xff]
    %v863 = vld [vmem:[#allocation4 + $0xce8] sm:$0xff]
    %v864 = vld [vmem:[#allocation4 + $0xcf0] sm:$0xff]
    %v865 = vld [vmem:[#allocation4 + $0xcf8] sm:$0xff]
    %v866 = vld [vmem:[#allocation4 + $0xd00] sm:$0xff]
    %v867 = vld [vmem:[#allocation4 + $0xd08] sm:$0xff]
    %v868 = vld [vmem:[#allocation4 + $0xd10] sm:$0xff]
    %v869 = vld [vmem:[#allocation4 + $0xd18] sm:$0xff]
    %v870 = vld [vmem:[#allocation4 + $0xd20] sm:$0xff]
    %v871 = vld [vmem:[#allocation4 + $0xd28] sm:$0xff]
    %v872 = vld [vmem:[#allocation4 + $0xd30] sm:$0xff]
    %v873 = vld [vmem:[#allocation4 + $0xd38] sm:$0xff]
    %v874 = vld [vmem:[#allocation4 + $0xd40] sm:$0xff]
    %v875 = vld [vmem:[#allocation4 + $0xd48] sm:$0xff]
    %v876 = vld [vmem:[#allocation4 + $0xd50] sm:$0xff]
    %v877 = vld [vmem:[#allocation4 + $0xd58] sm:$0xff]
    %v878 = vld [vmem:[#allocation4 + $0xd60] sm:$0xff]
    %v879 = vld [vmem:[#allocation4 + $0xd68] sm:$0xff]
    %v880 = vld [vmem:[#allocation4 + $0xd70] sm:$0xff]
    %v881 = vld [vmem:[#allocation4 + $0xd78] sm:$0xff]
    %v882 = vld [vmem:[#allocation4 + $0xd80] sm:$0xff]
    %v883 = vld [vmem:[#allocation4 + $0xd88] sm:$0xff]
    %v884 = vld [vmem:[#allocation4 + $0xd90] sm:$0xff]
    %v885 = vld [vmem:[#allocation4 + $0xd98] sm:$0xff]
    %v886 = vld [vmem:[#allocation4 + $0xda0] sm:$0xff]
    %v887 = vld [vmem:[#allocation4 + $0xda8] sm:$0xff]
    %v888 = vld [vmem:[#allocation4 + $0xdb0] sm:$0xff]
    %v889 = vld [vmem:[#allocation4 + $0xdb8] sm:$0xff]
    %v890 = vld [vmem:[#allocation4 + $0xdc0] sm:$0xff]
    %v891 = vld [vmem:[#allocation4 + $0xdc8] sm:$0xff]
    %v892 = vld [vmem:[#allocation4 + $0xdd0] sm:$0xff]
    %v893 = vld [vmem:[#allocation4 + $0xdd8] sm:$0xff]
    %v894 = vld [vmem:[#allocation4 + $0xde0] sm:$0xff]
    %v895 = vld [vmem:[#allocation4 + $0xde8] sm:$0xff]
    %v896 = vld [vmem:[#allocation4 + $0xdf0] sm:$0xff]
    %v897 = vld [vmem:[#allocation4 + $0xdf8] sm:$0xff]
    %v898 = vld [vmem:[#allocation4 + $0xe00] sm:$0xff]
    %v899 = vld [vmem:[#allocation4 + $0xe08] sm:$0xff]
    %v900 = vld [vmem:[#allocation4 + $0xe10] sm:$0xff]
    %v901 = vld [vmem:[#allocation4 + $0xe18] sm:$0xff]
    %v902 = vld [vmem:[#allocation4 + $0xe20] sm:$0xff]
    %v903 = vld [vmem:[#allocation4 + $0xe28] sm:$0xff]
    %v904 = vld [vmem:[#allocation4 + $0xe30] sm:$0xff]
    %v905 = vld [vmem:[#allocation4 + $0xe38] sm:$0xff]
    %v906 = vld [vmem:[#allocation4 + $0xe40] sm:$0xff]
    %v907 = vld [vmem:[#allocation4 + $0xe48] sm:$0xff]
    %v908 = vld [vmem:[#allocation4 + $0xe50] sm:$0xff]
    %v909 = vld [vmem:[#allocation4 + $0xe58] sm:$0xff]
    %v910 = vld [vmem:[#allocation4 + $0xe60] sm:$0xff]
    %v911 = vld [vmem:[#allocation4 + $0xe68] sm:$0xff]
    %v912 = vld [vmem:[#allocation4 + $0xe70] sm:$0xff]
    %v913 = vld [vmem:[#allocation4 + $0xe78] sm:$0xff]
    %v914 = vld [vmem:[#allocation4 + $0xe80] sm:$0xff]
    %v915 = vld [vmem:[#allocation4 + $0xe88] sm:$0xff]
    %v916 = vld [vmem:[#allocation4 + $0xe90] sm:$0xff]
    %v917 = vld [vmem:[#allocation4 + $0xe98] sm:$0xff]
    %v918 = vld [vmem:[#allocation4 + $0xea0] sm:$0xff]
    %v919 = vld [vmem:[#allocation4 + $0xea8] sm:$0xff]
    %v920 = vld [vmem:[#allocation4 + $0xeb0] sm:$0xff]
    %v921 = vld [vmem:[#allocation4 + $0xeb8] sm:$0xff]
    %v922 = vld [vmem:[#allocation4 + $0xec0] sm:$0xff]
    %v923 = vld [vmem:[#allocation4 + $0xec8] sm:$0xff]
    %v924 = vld [vmem:[#allocation4 + $0xed0] sm:$0xff]
    %v925 = vld [vmem:[#allocation4 + $0xed8] sm:$0xff]
    %v926 = vld [vmem:[#allocation4 + $0xee0] sm:$0xff]
    %v927 = vld [vmem:[#allocation4 + $0xee8] sm:$0xff]
    %v928 = vld [vmem:[#allocation4 + $0xef0] sm:$0xff]
    %v929 = vld [vmem:[#allocation4 + $0xef8] sm:$0xff]
    %v930 = vld [vmem:[#allocation4 + $0xf00] sm:$0xff]
    %v931 = vld [vmem:[#allocation4 + $0xf08] sm:$0xff]
    %v932 = vld [vmem:[#allocation4 + $0xf10] sm:$0xff]
    %v933 = vld [vmem:[#allocation4 + $0xf18] sm:$0xff]
    %v934 = vld [vmem:[#allocation4 + $0xf20] sm:$0xff]
    %v935 = vld [vmem:[#allocation4 + $0xf28] sm:$0xff]
    %v936 = vld [vmem:[#allocation4 + $0xf30] sm:$0xff]
    %v937 = vld [vmem:[#allocation4 + $0xf38] sm:$0xff]
    %v938 = vld [vmem:[#allocation4 + $0xf40] sm:$0xff]
    %v939 = vld [vmem:[#allocation4 + $0xf48] sm:$0xff]
    %v940 = vld [vmem:[#allocation4 + $0xf50] sm:$0xff]
    %v941 = vld [vmem:[#allocation4 + $0xf58] sm:$0xff]
    %v942 = vld [vmem:[#allocation4 + $0xf60] sm:$0xff]
    %v943 = vld [vmem:[#allocation4 + $0xf68] sm:$0xff]
    %v944 = vld [vmem:[#allocation4 + $0xf70] sm:$0xff]
    %v945 = vld [vmem:[#allocation4 + $0xf78] sm:$0xff]
    %v946 = vld [vmem:[#allocation4 + $0xf80] sm:$0xff]
    %v947 = vld [vmem:[#allocation4 + $0xf88] sm:$0xff]
    %v948 = vld [vmem:[#allocation4 + $0xf90] sm:$0xff]
    %v949 = vld [vmem:[#allocation4 + $0xf98] sm:$0xff]
    %v950 = vld [vmem:[#allocation4 + $0xfa0] sm:$0xff]
    %v951 = vld [vmem:[#allocation4 + $0xfa8] sm:$0xff]
    %v952 = vld [vmem:[#allocation4 + $0xfb0] sm:$0xff]
    %v953 = vld [vmem:[#allocation4 + $0xfb8] sm:$0xff]
    %v954 = vld [vmem:[#allocation4 + $0xfc0] sm:$0xff]
    %v955 = vld [vmem:[#allocation4 + $0xfc8] sm:$0xff]
    %v956 = vld [vmem:[#allocation4 + $0xfd0] sm:$0xff]
    %v957 = vld [vmem:[#allocation4 + $0xfd8] sm:$0xff]
    %v958 = vld [vmem:[#allocation4 + $0xfe0] sm:$0xff]
    %v959 = vld [vmem:[#allocation4 + $0xfe8] sm:$0xff]
    %v960 = vld [vmem:[#allocation4 + $0xff0] sm:$0xff]
    %v961 = vld [vmem:[#allocation4 + $0xff8] sm:$0xff]
    %v962 = vld [vmem:[#allocation7] sm:$0xf]
    %v964 = vlaneseq
    %v965 = vshrl.u32 %v964, 7
    %v966 = vsub.s32 0, %v965
    %v967 = vrot.slane %v962, %v966
    %v968 = vlaneseq
    %v969 = vshrl.u32 %v968, 7
    %v970 = vsub.s32 1, %v969
    %v971 = vrot.slane %v962, %v970
    %v972 = vlaneseq
    %v973 = vshrl.u32 %v972, 7
    %v974 = vsub.s32 2, %v973
    %v975 = vrot.slane %v962, %v974
    %v976 = vlaneseq
    %v977 = vshrl.u32 %v976, 7
    %v978 = vsub.s32 3, %v977
    %v979 = vrot.slane %v962, %v978
    %v1496 = vunpack.c.l.b16 %v450
    %v1497 = vunpack.c.h.b16 %v450
    %v1498 = vunpack.c.l.b16 %v451
    %v1499 = vunpack.c.h.b16 %v451
    %v1500 = vunpack.c.l.b16 %v452
    %v1501 = vunpack.c.h.b16 %v452
    %v1502 = vunpack.c.l.b16 %v453
    %v1503 = vunpack.c.h.b16 %v453
    %v1504 = vunpack.c.l.b16 %v454
    %v1505 = vunpack.c.h.b16 %v454
    %v1506 = vunpack.c.l.b16 %v455
    %v1507 = vunpack.c.h.b16 %v455
    %v1508 = vunpack.c.l.b16 %v456
    %v1509 = vunpack.c.h.b16 %v456
    %v1510 = vunpack.c.l.b16 %v457
    %v1511 = vunpack.c.h.b16 %v457
    %v1512 = vunpack.c.l.b16 %v458
    %v1513 = vunpack.c.h.b16 %v458
    %v1514 = vunpack.c.l.b16 %v459
    %v1515 = vunpack.c.h.b16 %v459
    %v1516 = vunpack.c.l.b16 %v460
    %v1517 = vunpack.c.h.b16 %v460
    %v1518 = vunpack.c.l.b16 %v461
    %v1519 = vunpack.c.h.b16 %v461
    %v1520 = vunpack.c.l.b16 %v462
    %v1521 = vunpack.c.h.b16 %v462
    %v1522 = vunpack.c.l.b16 %v463
    %v1523 = vunpack.c.h.b16 %v463
    %v1524 = vunpack.c.l.b16 %v464
    %v1525 = vunpack.c.h.b16 %v464
    %v1526 = vunpack.c.l.b16 %v465
    %v1527 = vunpack.c.h.b16 %v465
    %v1528 = vunpack.c.l.b16 %v466
    %v1529 = vunpack.c.h.b16 %v466
    %v1530 = vunpack.c.l.b16 %v467
    %v1531 = vunpack.c.h.b16 %v467
    %v1532 = vunpack.c.l.b16 %v468
    %v1533 = vunpack.c.h.b16 %v468
    %v1534 = vunpack.c.l.b16 %v469
    %v1535 = vunpack.c.h.b16 %v469
    %v1536 = vunpack.c.l.b16 %v470
    %v1537 = vunpack.c.h.b16 %v470
    %v1538 = vunpack.c.l.b16 %v471
    %v1539 = vunpack.c.h.b16 %v471
    %v1540 = vunpack.c.l.b16 %v472
    %v1541 = vunpack.c.h.b16 %v472
    %v1542 = vunpack.c.l.b16 %v473
    %v1543 = vunpack.c.h.b16 %v473
    %v1544 = vunpack.c.l.b16 %v474
    %v1545 = vunpack.c.h.b16 %v474
    %v1546 = vunpack.c.l.b16 %v475
    %v1547 = vunpack.c.h.b16 %v475
    %v1548 = vunpack.c.l.b16 %v476
    %v1549 = vunpack.c.h.b16 %v476
    %v1550 = vunpack.c.l.b16 %v477
    %v1551 = vunpack.c.h.b16 %v477
    %v1552 = vunpack.c.l.b16 %v478
    %v1553 = vunpack.c.h.b16 %v478
    %v1554 = vunpack.c.l.b16 %v479
    %v1555 = vunpack.c.h.b16 %v479
    %v1556 = vunpack.c.l.b16 %v480
    %v1557 = vunpack.c.h.b16 %v480
    %v1558 = vunpack.c.l.b16 %v481
    %v1559 = vunpack.c.h.b16 %v481
    %v1560 = vunpack.c.l.b16 %v482
    %v1561 = vunpack.c.h.b16 %v482
    %v1562 = vunpack.c.l.b16 %v483
    %v1563 = vunpack.c.h.b16 %v483
    %v1564 = vunpack.c.l.b16 %v484
    %v1565 = vunpack.c.h.b16 %v484
    %v1566 = vunpack.c.l.b16 %v485
    %v1567 = vunpack.c.h.b16 %v485
    %v1568 = vunpack.c.l.b16 %v486
    %v1569 = vunpack.c.h.b16 %v486
    %v1570 = vunpack.c.l.b16 %v487
    %v1571 = vunpack.c.h.b16 %v487
    %v1572 = vunpack.c.l.b16 %v488
    %v1573 = vunpack.c.h.b16 %v488
    %v1574 = vunpack.c.l.b16 %v489
    %v1575 = vunpack.c.h.b16 %v489
    %v1576 = vunpack.c.l.b16 %v490
    %v1577 = vunpack.c.h.b16 %v490
    %v1578 = vunpack.c.l.b16 %v491
    %v1579 = vunpack.c.h.b16 %v491
    %v1580 = vunpack.c.l.b16 %v492
    %v1581 = vunpack.c.h.b16 %v492
    %v1582 = vunpack.c.l.b16 %v493
    %v1583 = vunpack.c.h.b16 %v493
    %v1584 = vunpack.c.l.b16 %v494
    %v1585 = vunpack.c.h.b16 %v494
    %v1586 = vunpack.c.l.b16 %v495
    %v1587 = vunpack.c.h.b16 %v495
    %v1588 = vunpack.c.l.b16 %v496
    %v1589 = vunpack.c.h.b16 %v496
    %v1590 = vunpack.c.l.b16 %v497
    %v1591 = vunpack.c.h.b16 %v497
    %v1592 = vunpack.c.l.b16 %v498
    %v1593 = vunpack.c.h.b16 %v498
    %v1594 = vunpack.c.l.b16 %v499
    %v1595 = vunpack.c.h.b16 %v499
    %v1596 = vunpack.c.l.b16 %v500
    %v1597 = vunpack.c.h.b16 %v500
    %v1598 = vunpack.c.l.b16 %v501
    %v1599 = vunpack.c.h.b16 %v501
    %v1600 = vunpack.c.l.b16 %v502
    %v1601 = vunpack.c.h.b16 %v502
    %v1602 = vunpack.c.l.b16 %v503
    %v1603 = vunpack.c.h.b16 %v503
    %v1604 = vunpack.c.l.b16 %v504
    %v1605 = vunpack.c.h.b16 %v504
    %v1606 = vunpack.c.l.b16 %v505
    %v1607 = vunpack.c.h.b16 %v505
    %v1608 = vunpack.c.l.b16 %v506
    %v1609 = vunpack.c.h.b16 %v506
    %v1610 = vunpack.c.l.b16 %v507
    %v1611 = vunpack.c.h.b16 %v507
    %v1612 = vunpack.c.l.b16 %v508
    %v1613 = vunpack.c.h.b16 %v508
    %v1614 = vunpack.c.l.b16 %v509
    %v1615 = vunpack.c.h.b16 %v509
    %v1616 = vunpack.c.l.b16 %v510
    %v1617 = vunpack.c.h.b16 %v510
    %v1618 = vunpack.c.l.b16 %v511
    %v1619 = vunpack.c.h.b16 %v511
    %v1620 = vunpack.c.l.b16 %v512
    %v1621 = vunpack.c.h.b16 %v512
    %v1622 = vunpack.c.l.b16 %v513
    %v1623 = vunpack.c.h.b16 %v513
    %v1624 = vunpack.c.l.b16 %v514
    %v1625 = vunpack.c.h.b16 %v514
    %v1626 = vunpack.c.l.b16 %v515
    %v1627 = vunpack.c.h.b16 %v515
    %v1628 = vunpack.c.l.b16 %v516
    %v1629 = vunpack.c.h.b16 %v516
    %v1630 = vunpack.c.l.b16 %v517
    %v1631 = vunpack.c.h.b16 %v517
    %v1632 = vunpack.c.l.b16 %v518
    %v1633 = vunpack.c.h.b16 %v518
    %v1634 = vunpack.c.l.b16 %v519
    %v1635 = vunpack.c.h.b16 %v519
    %v1636 = vunpack.c.l.b16 %v520
    %v1637 = vunpack.c.h.b16 %v520
    %v1638 = vunpack.c.l.b16 %v521
    %v1639 = vunpack.c.h.b16 %v521
    %v1640 = vunpack.c.l.b16 %v522
    %v1641 = vunpack.c.h.b16 %v522
    %v1642 = vunpack.c.l.b16 %v523
    %v1643 = vunpack.c.h.b16 %v523
    %v1644 = vunpack.c.l.b16 %v524
    %v1645 = vunpack.c.h.b16 %v524
    %v1646 = vunpack.c.l.b16 %v525
    %v1647 = vunpack.c.h.b16 %v525
    %v1648 = vunpack.c.l.b16 %v526
    %v1649 = vunpack.c.h.b16 %v526
    %v1650 = vunpack.c.l.b16 %v527
    %v1651 = vunpack.c.h.b16 %v527
    %v1652 = vunpack.c.l.b16 %v528
    %v1653 = vunpack.c.h.b16 %v528
    %v1654 = vunpack.c.l.b16 %v529
    %v1655 = vunpack.c.h.b16 %v529
    %v1656 = vunpack.c.l.b16 %v530
    %v1657 = vunpack.c.h.b16 %v530
    %v1658 = vunpack.c.l.b16 %v531
    %v1659 = vunpack.c.h.b16 %v531
    %v1660 = vunpack.c.l.b16 %v532
    %v1661 = vunpack.c.h.b16 %v532
    %v1662 = vunpack.c.l.b16 %v533
    %v1663 = vunpack.c.h.b16 %v533
    %v1664 = vunpack.c.l.b16 %v534
    %v1665 = vunpack.c.h.b16 %v534
    %v1666 = vunpack.c.l.b16 %v535
    %v1667 = vunpack.c.h.b16 %v535
    %v1668 = vunpack.c.l.b16 %v536
    %v1669 = vunpack.c.h.b16 %v536
    %v1670 = vunpack.c.l.b16 %v537
    %v1671 = vunpack.c.h.b16 %v537
    %v1672 = vunpack.c.l.b16 %v538
    %v1673 = vunpack.c.h.b16 %v538
    %v1674 = vunpack.c.l.b16 %v539
    %v1675 = vunpack.c.h.b16 %v539
    %v1676 = vunpack.c.l.b16 %v540
    %v1677 = vunpack.c.h.b16 %v540
    %v1678 = vunpack.c.l.b16 %v541
    %v1679 = vunpack.c.h.b16 %v541
    %v1680 = vunpack.c.l.b16 %v542
    %v1681 = vunpack.c.h.b16 %v542
    %v1682 = vunpack.c.l.b16 %v543
    %v1683 = vunpack.c.h.b16 %v543
    %v1684 = vunpack.c.l.b16 %v544
    %v1685 = vunpack.c.h.b16 %v544
    %v1686 = vunpack.c.l.b16 %v545
    %v1687 = vunpack.c.h.b16 %v545
    %v1688 = vunpack.c.l.b16 %v546
    %v1689 = vunpack.c.h.b16 %v546
    %v1690 = vunpack.c.l.b16 %v547
    %v1691 = vunpack.c.h.b16 %v547
    %v1692 = vunpack.c.l.b16 %v548
    %v1693 = vunpack.c.h.b16 %v548
    %v1694 = vunpack.c.l.b16 %v549
    %v1695 = vunpack.c.h.b16 %v549
    %v1696 = vunpack.c.l.b16 %v550
    %v1697 = vunpack.c.h.b16 %v550
    %v1698 = vunpack.c.l.b16 %v551
    %v1699 = vunpack.c.h.b16 %v551
    %v1700 = vunpack.c.l.b16 %v552
    %v1701 = vunpack.c.h.b16 %v552
    %v1702 = vunpack.c.l.b16 %v553
    %v1703 = vunpack.c.h.b16 %v553
    %v1704 = vunpack.c.l.b16 %v554
    %v1705 = vunpack.c.h.b16 %v554
    %v1706 = vunpack.c.l.b16 %v555
    %v1707 = vunpack.c.h.b16 %v555
    %v1708 = vunpack.c.l.b16 %v556
    %v1709 = vunpack.c.h.b16 %v556
    %v1710 = vunpack.c.l.b16 %v557
    %v1711 = vunpack.c.h.b16 %v557
    %v1712 = vunpack.c.l.b16 %v558
    %v1713 = vunpack.c.h.b16 %v558
    %v1714 = vunpack.c.l.b16 %v559
    %v1715 = vunpack.c.h.b16 %v559
    %v1716 = vunpack.c.l.b16 %v560
    %v1717 = vunpack.c.h.b16 %v560
    %v1718 = vunpack.c.l.b16 %v561
    %v1719 = vunpack.c.h.b16 %v561
    %v1720 = vunpack.c.l.b16 %v562
    %v1721 = vunpack.c.h.b16 %v562
    %v1722 = vunpack.c.l.b16 %v563
    %v1723 = vunpack.c.h.b16 %v563
    %v1724 = vunpack.c.l.b16 %v564
    %v1725 = vunpack.c.h.b16 %v564
    %v1726 = vunpack.c.l.b16 %v565
    %v1727 = vunpack.c.h.b16 %v565
    %v1728 = vunpack.c.l.b16 %v566
    %v1729 = vunpack.c.h.b16 %v566
    %v1730 = vunpack.c.l.b16 %v567
    %v1731 = vunpack.c.h.b16 %v567
    %v1732 = vunpack.c.l.b16 %v568
    %v1733 = vunpack.c.h.b16 %v568
    %v1734 = vunpack.c.l.b16 %v569
    %v1735 = vunpack.c.h.b16 %v569
    %v1736 = vunpack.c.l.b16 %v570
    %v1737 = vunpack.c.h.b16 %v570
    %v1738 = vunpack.c.l.b16 %v571
    %v1739 = vunpack.c.h.b16 %v571
    %v1740 = vunpack.c.l.b16 %v572
    %v1741 = vunpack.c.h.b16 %v572
    %v1742 = vunpack.c.l.b16 %v573
    %v1743 = vunpack.c.h.b16 %v573
    %v1744 = vunpack.c.l.b16 %v574
    %v1745 = vunpack.c.h.b16 %v574
    %v1746 = vunpack.c.l.b16 %v575
    %v1747 = vunpack.c.h.b16 %v575
    %v1748 = vunpack.c.l.b16 %v576
    %v1749 = vunpack.c.h.b16 %v576
    %v1750 = vunpack.c.l.b16 %v577
    %v1751 = vunpack.c.h.b16 %v577
    %v1752 = vunpack.c.l.b16 %v578
    %v1753 = vunpack.c.h.b16 %v578
    %v1754 = vunpack.c.l.b16 %v579
    %v1755 = vunpack.c.h.b16 %v579
    %v1756 = vunpack.c.l.b16 %v580
    %v1757 = vunpack.c.h.b16 %v580
    %v1758 = vunpack.c.l.b16 %v581
    %v1759 = vunpack.c.h.b16 %v581
    %v1760 = vunpack.c.l.b16 %v582
    %v1761 = vunpack.c.h.b16 %v582
    %v1762 = vunpack.c.l.b16 %v583
    %v1763 = vunpack.c.h.b16 %v583
    %v1764 = vunpack.c.l.b16 %v584
    %v1765 = vunpack.c.h.b16 %v584
    %v1766 = vunpack.c.l.b16 %v585
    %v1767 = vunpack.c.h.b16 %v585
    %v1768 = vunpack.c.l.b16 %v586
    %v1769 = vunpack.c.h.b16 %v586
    %v1770 = vunpack.c.l.b16 %v587
    %v1771 = vunpack.c.h.b16 %v587
    %v1772 = vunpack.c.l.b16 %v588
    %v1773 = vunpack.c.h.b16 %v588
    %v1774 = vunpack.c.l.b16 %v589
    %v1775 = vunpack.c.h.b16 %v589
    %v1776 = vunpack.c.l.b16 %v590
    %v1777 = vunpack.c.h.b16 %v590
    %v1778 = vunpack.c.l.b16 %v591
    %v1779 = vunpack.c.h.b16 %v591
    %v1780 = vunpack.c.l.b16 %v592
    %v1781 = vunpack.c.h.b16 %v592
    %v1782 = vunpack.c.l.b16 %v593
    %v1783 = vunpack.c.h.b16 %v593
    %v1784 = vunpack.c.l.b16 %v594
    %v1785 = vunpack.c.h.b16 %v594
    %v1786 = vunpack.c.l.b16 %v595
    %v1787 = vunpack.c.h.b16 %v595
    %v1788 = vunpack.c.l.b16 %v596
    %v1789 = vunpack.c.h.b16 %v596
    %v1790 = vunpack.c.l.b16 %v597
    %v1791 = vunpack.c.h.b16 %v597
    %v1792 = vunpack.c.l.b16 %v598
    %v1793 = vunpack.c.h.b16 %v598
    %v1794 = vunpack.c.l.b16 %v599
    %v1795 = vunpack.c.h.b16 %v599
    %v1796 = vunpack.c.l.b16 %v600
    %v1797 = vunpack.c.h.b16 %v600
    %v1798 = vunpack.c.l.b16 %v601
    %v1799 = vunpack.c.h.b16 %v601
    %v1800 = vunpack.c.l.b16 %v602
    %v1801 = vunpack.c.h.b16 %v602
    %v1802 = vunpack.c.l.b16 %v603
    %v1803 = vunpack.c.h.b16 %v603
    %v1804 = vunpack.c.l.b16 %v604
    %v1805 = vunpack.c.h.b16 %v604
    %v1806 = vunpack.c.l.b16 %v605
    %v1807 = vunpack.c.h.b16 %v605
    %v1808 = vunpack.c.l.b16 %v606
    %v1809 = vunpack.c.h.b16 %v606
    %v1810 = vunpack.c.l.b16 %v607
    %v1811 = vunpack.c.h.b16 %v607
    %v1812 = vunpack.c.l.b16 %v608
    %v1813 = vunpack.c.h.b16 %v608
    %v1814 = vunpack.c.l.b16 %v609
    %v1815 = vunpack.c.h.b16 %v609
    %v1816 = vunpack.c.l.b16 %v610
    %v1817 = vunpack.c.h.b16 %v610
    %v1818 = vunpack.c.l.b16 %v611
    %v1819 = vunpack.c.h.b16 %v611
    %v1820 = vunpack.c.l.b16 %v612
    %v1821 = vunpack.c.h.b16 %v612
    %v1822 = vunpack.c.l.b16 %v613
    %v1823 = vunpack.c.h.b16 %v613
    %v1824 = vunpack.c.l.b16 %v614
    %v1825 = vunpack.c.h.b16 %v614
    %v1826 = vunpack.c.l.b16 %v615
    %v1827 = vunpack.c.h.b16 %v615
    %v1828 = vunpack.c.l.b16 %v616
    %v1829 = vunpack.c.h.b16 %v616
    %v1830 = vunpack.c.l.b16 %v617
    %v1831 = vunpack.c.h.b16 %v617
    %v1832 = vunpack.c.l.b16 %v618
    %v1833 = vunpack.c.h.b16 %v618
    %v1834 = vunpack.c.l.b16 %v619
    %v1835 = vunpack.c.h.b16 %v619
    %v1836 = vunpack.c.l.b16 %v620
    %v1837 = vunpack.c.h.b16 %v620
    %v1838 = vunpack.c.l.b16 %v621
    %v1839 = vunpack.c.h.b16 %v621
    %v1840 = vunpack.c.l.b16 %v622
    %v1841 = vunpack.c.h.b16 %v622
    %v1842 = vunpack.c.l.b16 %v623
    %v1843 = vunpack.c.h.b16 %v623
    %v1844 = vunpack.c.l.b16 %v624
    %v1845 = vunpack.c.h.b16 %v624
    %v1846 = vunpack.c.l.b16 %v625
    %v1847 = vunpack.c.h.b16 %v625
    %v1848 = vunpack.c.l.b16 %v626
    %v1849 = vunpack.c.h.b16 %v626
    %v1850 = vunpack.c.l.b16 %v627
    %v1851 = vunpack.c.h.b16 %v627
    %v1852 = vunpack.c.l.b16 %v628
    %v1853 = vunpack.c.h.b16 %v628
    %v1854 = vunpack.c.l.b16 %v629
    %v1855 = vunpack.c.h.b16 %v629
    %v1856 = vunpack.c.l.b16 %v630
    %v1857 = vunpack.c.h.b16 %v630
    %v1858 = vunpack.c.l.b16 %v631
    %v1859 = vunpack.c.h.b16 %v631
    %v1860 = vunpack.c.l.b16 %v632
    %v1861 = vunpack.c.h.b16 %v632
    %v1862 = vunpack.c.l.b16 %v633
    %v1863 = vunpack.c.h.b16 %v633
    %v1864 = vunpack.c.l.b16 %v634
    %v1865 = vunpack.c.h.b16 %v634
    %v1866 = vunpack.c.l.b16 %v635
    %v1867 = vunpack.c.h.b16 %v635
    %v1868 = vunpack.c.l.b16 %v636
    %v1869 = vunpack.c.h.b16 %v636
    %v1870 = vunpack.c.l.b16 %v637
    %v1871 = vunpack.c.h.b16 %v637
    %v1872 = vunpack.c.l.b16 %v638
    %v1873 = vunpack.c.h.b16 %v638
    %v1874 = vunpack.c.l.b16 %v639
    %v1875 = vunpack.c.h.b16 %v639
    %v1876 = vunpack.c.l.b16 %v640
    %v1877 = vunpack.c.h.b16 %v640
    %v1878 = vunpack.c.l.b16 %v641
    %v1879 = vunpack.c.h.b16 %v641
    %v1880 = vunpack.c.l.b16 %v642
    %v1881 = vunpack.c.h.b16 %v642
    %v1882 = vunpack.c.l.b16 %v643
    %v1883 = vunpack.c.h.b16 %v643
    %v1884 = vunpack.c.l.b16 %v644
    %v1885 = vunpack.c.h.b16 %v644
    %v1886 = vunpack.c.l.b16 %v645
    %v1887 = vunpack.c.h.b16 %v645
    %v1888 = vunpack.c.l.b16 %v646
    %v1889 = vunpack.c.h.b16 %v646
    %v1890 = vunpack.c.l.b16 %v647
    %v1891 = vunpack.c.h.b16 %v647
    %v1892 = vunpack.c.l.b16 %v648
    %v1893 = vunpack.c.h.b16 %v648
    %v1894 = vunpack.c.l.b16 %v649
    %v1895 = vunpack.c.h.b16 %v649
    %v1896 = vunpack.c.l.b16 %v650
    %v1897 = vunpack.c.h.b16 %v650
    %v1898 = vunpack.c.l.b16 %v651
    %v1899 = vunpack.c.h.b16 %v651
    %v1900 = vunpack.c.l.b16 %v652
    %v1901 = vunpack.c.h.b16 %v652
    %v1902 = vunpack.c.l.b16 %v653
    %v1903 = vunpack.c.h.b16 %v653
    %v1904 = vunpack.c.l.b16 %v654
    %v1905 = vunpack.c.h.b16 %v654
    %v1906 = vunpack.c.l.b16 %v655
    %v1907 = vunpack.c.h.b16 %v655
    %v1908 = vunpack.c.l.b16 %v656
    %v1909 = vunpack.c.h.b16 %v656
    %v1910 = vunpack.c.l.b16 %v657
    %v1911 = vunpack.c.h.b16 %v657
    %v1912 = vunpack.c.l.b16 %v658
    %v1913 = vunpack.c.h.b16 %v658
    %v1914 = vunpack.c.l.b16 %v659
    %v1915 = vunpack.c.h.b16 %v659
    %v1916 = vunpack.c.l.b16 %v660
    %v1917 = vunpack.c.h.b16 %v660
    %v1918 = vunpack.c.l.b16 %v661
    %v1919 = vunpack.c.h.b16 %v661
    %v1920 = vunpack.c.l.b16 %v662
    %v1921 = vunpack.c.h.b16 %v662
    %v1922 = vunpack.c.l.b16 %v663
    %v1923 = vunpack.c.h.b16 %v663
    %v1924 = vunpack.c.l.b16 %v664
    %v1925 = vunpack.c.h.b16 %v664
    %v1926 = vunpack.c.l.b16 %v665
    %v1927 = vunpack.c.h.b16 %v665
    %v1928 = vunpack.c.l.b16 %v666
    %v1929 = vunpack.c.h.b16 %v666
    %v1930 = vunpack.c.l.b16 %v667
    %v1931 = vunpack.c.h.b16 %v667
    %v1932 = vunpack.c.l.b16 %v668
    %v1933 = vunpack.c.h.b16 %v668
    %v1934 = vunpack.c.l.b16 %v669
    %v1935 = vunpack.c.h.b16 %v669
    %v1936 = vunpack.c.l.b16 %v670
    %v1937 = vunpack.c.h.b16 %v670
    %v1938 = vunpack.c.l.b16 %v671
    %v1939 = vunpack.c.h.b16 %v671
    %v1940 = vunpack.c.l.b16 %v672
    %v1941 = vunpack.c.h.b16 %v672
    %v1942 = vunpack.c.l.b16 %v673
    %v1943 = vunpack.c.h.b16 %v673
    %v1944 = vunpack.c.l.b16 %v674
    %v1945 = vunpack.c.h.b16 %v674
    %v1946 = vunpack.c.l.b16 %v675
    %v1947 = vunpack.c.h.b16 %v675
    %v1948 = vunpack.c.l.b16 %v676
    %v1949 = vunpack.c.h.b16 %v676
    %v1950 = vunpack.c.l.b16 %v677
    %v1951 = vunpack.c.h.b16 %v677
    %v1952 = vunpack.c.l.b16 %v678
    %v1953 = vunpack.c.h.b16 %v678
    %v1954 = vunpack.c.l.b16 %v679
    %v1955 = vunpack.c.h.b16 %v679
    %v1956 = vunpack.c.l.b16 %v680
    %v1957 = vunpack.c.h.b16 %v680
    %v1958 = vunpack.c.l.b16 %v681
    %v1959 = vunpack.c.h.b16 %v681
    %v1960 = vunpack.c.l.b16 %v682
    %v1961 = vunpack.c.h.b16 %v682
    %v1962 = vunpack.c.l.b16 %v683
    %v1963 = vunpack.c.h.b16 %v683
    %v1964 = vunpack.c.l.b16 %v684
    %v1965 = vunpack.c.h.b16 %v684
    %v1966 = vunpack.c.l.b16 %v685
    %v1967 = vunpack.c.h.b16 %v685
    %v1968 = vunpack.c.l.b16 %v686
    %v1969 = vunpack.c.h.b16 %v686
    %v1970 = vunpack.c.l.b16 %v687
    %v1971 = vunpack.c.h.b16 %v687
    %v1972 = vunpack.c.l.b16 %v688
    %v1973 = vunpack.c.h.b16 %v688
    %v1974 = vunpack.c.l.b16 %v689
    %v1975 = vunpack.c.h.b16 %v689
    %v1976 = vunpack.c.l.b16 %v690
    %v1977 = vunpack.c.h.b16 %v690
    %v1978 = vunpack.c.l.b16 %v691
    %v1979 = vunpack.c.h.b16 %v691
    %v1980 = vunpack.c.l.b16 %v692
    %v1981 = vunpack.c.h.b16 %v692
    %v1982 = vunpack.c.l.b16 %v693
    %v1983 = vunpack.c.h.b16 %v693
    %v1984 = vunpack.c.l.b16 %v694
    %v1985 = vunpack.c.h.b16 %v694
    %v1986 = vunpack.c.l.b16 %v695
    %v1987 = vunpack.c.h.b16 %v695
    %v1988 = vunpack.c.l.b16 %v696
    %v1989 = vunpack.c.h.b16 %v696
    %v1990 = vunpack.c.l.b16 %v697
    %v1991 = vunpack.c.h.b16 %v697
    %v1992 = vunpack.c.l.b16 %v698
    %v1993 = vunpack.c.h.b16 %v698
    %v1994 = vunpack.c.l.b16 %v699
    %v1995 = vunpack.c.h.b16 %v699
    %v1996 = vunpack.c.l.b16 %v700
    %v1997 = vunpack.c.h.b16 %v700
    %v1998 = vunpack.c.l.b16 %v701
    %v1999 = vunpack.c.h.b16 %v701
    %v2000 = vunpack.c.l.b16 %v702
    %v2001 = vunpack.c.h.b16 %v702
    %v2002 = vunpack.c.l.b16 %v703
    %v2003 = vunpack.c.h.b16 %v703
    %v2004 = vunpack.c.l.b16 %v704
    %v2005 = vunpack.c.h.b16 %v704
    %v2006 = vunpack.c.l.b16 %v705
    %v2007 = vunpack.c.h.b16 %v705
    %v2008 = vunpack.c.l.b16 %v706
    %v2009 = vunpack.c.h.b16 %v706
    %v2010 = vunpack.c.l.b16 %v707
    %v2011 = vunpack.c.h.b16 %v707
    %v2012 = vunpack.c.l.b16 %v708
    %v2013 = vunpack.c.h.b16 %v708
    %v2014 = vunpack.c.l.b16 %v709
    %v2015 = vunpack.c.h.b16 %v709
    %v2016 = vunpack.c.l.b16 %v710
    %v2017 = vunpack.c.h.b16 %v710
    %v2018 = vunpack.c.l.b16 %v711
    %v2019 = vunpack.c.h.b16 %v711
    %v2020 = vunpack.c.l.b16 %v712
    %v2021 = vunpack.c.h.b16 %v712
    %v2022 = vunpack.c.l.b16 %v713
    %v2023 = vunpack.c.h.b16 %v713
    %v2024 = vunpack.c.l.b16 %v714
    %v2025 = vunpack.c.h.b16 %v714
    %v2026 = vunpack.c.l.b16 %v715
    %v2027 = vunpack.c.h.b16 %v715
    %v2028 = vunpack.c.l.b16 %v716
    %v2029 = vunpack.c.h.b16 %v716
    %v2030 = vunpack.c.l.b16 %v717
    %v2031 = vunpack.c.h.b16 %v717
    %v2032 = vunpack.c.l.b16 %v718
    %v2033 = vunpack.c.h.b16 %v718
    %v2034 = vunpack.c.l.b16 %v719
    %v2035 = vunpack.c.h.b16 %v719
    %v2036 = vunpack.c.l.b16 %v720
    %v2037 = vunpack.c.h.b16 %v720
    %v2038 = vunpack.c.l.b16 %v721
    %v2039 = vunpack.c.h.b16 %v721
    %v2040 = vunpack.c.l.b16 %v722
    %v2041 = vunpack.c.h.b16 %v722
    %v2042 = vunpack.c.l.b16 %v723
    %v2043 = vunpack.c.h.b16 %v723
    %v2044 = vunpack.c.l.b16 %v724
    %v2045 = vunpack.c.h.b16 %v724
    %v2046 = vunpack.c.l.b16 %v725
    %v2047 = vunpack.c.h.b16 %v725
    %v2048 = vunpack.c.l.b16 %v726
    %v2049 = vunpack.c.h.b16 %v726
    %v2050 = vunpack.c.l.b16 %v727
    %v2051 = vunpack.c.h.b16 %v727
    %v2052 = vunpack.c.l.b16 %v728
    %v2053 = vunpack.c.h.b16 %v728
    %v2054 = vunpack.c.l.b16 %v729
    %v2055 = vunpack.c.h.b16 %v729
    %v2056 = vunpack.c.l.b16 %v730
    %v2057 = vunpack.c.h.b16 %v730
    %v2058 = vunpack.c.l.b16 %v731
    %v2059 = vunpack.c.h.b16 %v731
    %v2060 = vunpack.c.l.b16 %v732
    %v2061 = vunpack.c.h.b16 %v732
    %v2062 = vunpack.c.l.b16 %v733
    %v2063 = vunpack.c.h.b16 %v733
    %v2064 = vunpack.c.l.b16 %v734
    %v2065 = vunpack.c.h.b16 %v734
    %v2066 = vunpack.c.l.b16 %v735
    %v2067 = vunpack.c.h.b16 %v735
    %v2068 = vunpack.c.l.b16 %v736
    %v2069 = vunpack.c.h.b16 %v736
    %v2070 = vunpack.c.l.b16 %v737
    %v2071 = vunpack.c.h.b16 %v737
    %v2072 = vunpack.c.l.b16 %v738
    %v2073 = vunpack.c.h.b16 %v738
    %v2074 = vunpack.c.l.b16 %v739
    %v2075 = vunpack.c.h.b16 %v739
    %v2076 = vunpack.c.l.b16 %v740
    %v2077 = vunpack.c.h.b16 %v740
    %v2078 = vunpack.c.l.b16 %v741
    %v2079 = vunpack.c.h.b16 %v741
    %v2080 = vunpack.c.l.b16 %v742
    %v2081 = vunpack.c.h.b16 %v742
    %v2082 = vunpack.c.l.b16 %v743
    %v2083 = vunpack.c.h.b16 %v743
    %v2084 = vunpack.c.l.b16 %v744
    %v2085 = vunpack.c.h.b16 %v744
    %v2086 = vunpack.c.l.b16 %v745
    %v2087 = vunpack.c.h.b16 %v745
    %v2088 = vunpack.c.l.b16 %v746
    %v2089 = vunpack.c.h.b16 %v746
    %v2090 = vunpack.c.l.b16 %v747
    %v2091 = vunpack.c.h.b16 %v747
    %v2092 = vunpack.c.l.b16 %v748
    %v2093 = vunpack.c.h.b16 %v748
    %v2094 = vunpack.c.l.b16 %v749
    %v2095 = vunpack.c.h.b16 %v749
    %v2096 = vunpack.c.l.b16 %v750
    %v2097 = vunpack.c.h.b16 %v750
    %v2098 = vunpack.c.l.b16 %v751
    %v2099 = vunpack.c.h.b16 %v751
    %v2100 = vunpack.c.l.b16 %v752
    %v2101 = vunpack.c.h.b16 %v752
    %v2102 = vunpack.c.l.b16 %v753
    %v2103 = vunpack.c.h.b16 %v753
    %v2104 = vunpack.c.l.b16 %v754
    %v2105 = vunpack.c.h.b16 %v754
    %v2106 = vunpack.c.l.b16 %v755
    %v2107 = vunpack.c.h.b16 %v755
    %v2108 = vunpack.c.l.b16 %v756
    %v2109 = vunpack.c.h.b16 %v756
    %v2110 = vunpack.c.l.b16 %v757
    %v2111 = vunpack.c.h.b16 %v757
    %v2112 = vunpack.c.l.b16 %v758
    %v2113 = vunpack.c.h.b16 %v758
    %v2114 = vunpack.c.l.b16 %v759
    %v2115 = vunpack.c.h.b16 %v759
    %v2116 = vunpack.c.l.b16 %v760
    %v2117 = vunpack.c.h.b16 %v760
    %v2118 = vunpack.c.l.b16 %v761
    %v2119 = vunpack.c.h.b16 %v761
    %v2120 = vunpack.c.l.b16 %v762
    %v2121 = vunpack.c.h.b16 %v762
    %v2122 = vunpack.c.l.b16 %v763
    %v2123 = vunpack.c.h.b16 %v763
    %v2124 = vunpack.c.l.b16 %v764
    %v2125 = vunpack.c.h.b16 %v764
    %v2126 = vunpack.c.l.b16 %v765
    %v2127 = vunpack.c.h.b16 %v765
    %v2128 = vunpack.c.l.b16 %v766
    %v2129 = vunpack.c.h.b16 %v766
    %v2130 = vunpack.c.l.b16 %v767
    %v2131 = vunpack.c.h.b16 %v767
    %v2132 = vunpack.c.l.b16 %v768
    %v2133 = vunpack.c.h.b16 %v768
    %v2134 = vunpack.c.l.b16 %v769
    %v2135 = vunpack.c.h.b16 %v769
    %v2136 = vunpack.c.l.b16 %v770
    %v2137 = vunpack.c.h.b16 %v770
    %v2138 = vunpack.c.l.b16 %v771
    %v2139 = vunpack.c.h.b16 %v771
    %v2140 = vunpack.c.l.b16 %v772
    %v2141 = vunpack.c.h.b16 %v772
    %v2142 = vunpack.c.l.b16 %v773
    %v2143 = vunpack.c.h.b16 %v773
    %v2144 = vunpack.c.l.b16 %v774
    %v2145 = vunpack.c.h.b16 %v774
    %v2146 = vunpack.c.l.b16 %v775
    %v2147 = vunpack.c.h.b16 %v775
    %v2148 = vunpack.c.l.b16 %v776
    %v2149 = vunpack.c.h.b16 %v776
    %v2150 = vunpack.c.l.b16 %v777
    %v2151 = vunpack.c.h.b16 %v777
    %v2152 = vunpack.c.l.b16 %v778
    %v2153 = vunpack.c.h.b16 %v778
    %v2154 = vunpack.c.l.b16 %v779
    %v2155 = vunpack.c.h.b16 %v779
    %v2156 = vunpack.c.l.b16 %v780
    %v2157 = vunpack.c.h.b16 %v780
    %v2158 = vunpack.c.l.b16 %v781
    %v2159 = vunpack.c.h.b16 %v781
    %v2160 = vunpack.c.l.b16 %v782
    %v2161 = vunpack.c.h.b16 %v782
    %v2162 = vunpack.c.l.b16 %v783
    %v2163 = vunpack.c.h.b16 %v783
    %v2164 = vunpack.c.l.b16 %v784
    %v2165 = vunpack.c.h.b16 %v784
    %v2166 = vunpack.c.l.b16 %v785
    %v2167 = vunpack.c.h.b16 %v785
    %v2168 = vunpack.c.l.b16 %v786
    %v2169 = vunpack.c.h.b16 %v786
    %v2170 = vunpack.c.l.b16 %v787
    %v2171 = vunpack.c.h.b16 %v787
    %v2172 = vunpack.c.l.b16 %v788
    %v2173 = vunpack.c.h.b16 %v788
    %v2174 = vunpack.c.l.b16 %v789
    %v2175 = vunpack.c.h.b16 %v789
    %v2176 = vunpack.c.l.b16 %v790
    %v2177 = vunpack.c.h.b16 %v790
    %v2178 = vunpack.c.l.b16 %v791
    %v2179 = vunpack.c.h.b16 %v791
    %v2180 = vunpack.c.l.b16 %v792
    %v2181 = vunpack.c.h.b16 %v792
    %v2182 = vunpack.c.l.b16 %v793
    %v2183 = vunpack.c.h.b16 %v793
    %v2184 = vunpack.c.l.b16 %v794
    %v2185 = vunpack.c.h.b16 %v794
    %v2186 = vunpack.c.l.b16 %v795
    %v2187 = vunpack.c.h.b16 %v795
    %v2188 = vunpack.c.l.b16 %v796
    %v2189 = vunpack.c.h.b16 %v796
    %v2190 = vunpack.c.l.b16 %v797
    %v2191 = vunpack.c.h.b16 %v797
    %v2192 = vunpack.c.l.b16 %v798
    %v2193 = vunpack.c.h.b16 %v798
    %v2194 = vunpack.c.l.b16 %v799
    %v2195 = vunpack.c.h.b16 %v799
    %v2196 = vunpack.c.l.b16 %v800
    %v2197 = vunpack.c.h.b16 %v800
    %v2198 = vunpack.c.l.b16 %v801
    %v2199 = vunpack.c.h.b16 %v801
    %v2200 = vunpack.c.l.b16 %v802
    %v2201 = vunpack.c.h.b16 %v802
    %v2202 = vunpack.c.l.b16 %v803
    %v2203 = vunpack.c.h.b16 %v803
    %v2204 = vunpack.c.l.b16 %v804
    %v2205 = vunpack.c.h.b16 %v804
    %v2206 = vunpack.c.l.b16 %v805
    %v2207 = vunpack.c.h.b16 %v805
    %v2208 = vunpack.c.l.b16 %v806
    %v2209 = vunpack.c.h.b16 %v806
    %v2210 = vunpack.c.l.b16 %v807
    %v2211 = vunpack.c.h.b16 %v807
    %v2212 = vunpack.c.l.b16 %v808
    %v2213 = vunpack.c.h.b16 %v808
    %v2214 = vunpack.c.l.b16 %v809
    %v2215 = vunpack.c.h.b16 %v809
    %v2216 = vunpack.c.l.b16 %v810
    %v2217 = vunpack.c.h.b16 %v810
    %v2218 = vunpack.c.l.b16 %v811
    %v2219 = vunpack.c.h.b16 %v811
    %v2220 = vunpack.c.l.b16 %v812
    %v2221 = vunpack.c.h.b16 %v812
    %v2222 = vunpack.c.l.b16 %v813
    %v2223 = vunpack.c.h.b16 %v813
    %v2224 = vunpack.c.l.b16 %v814
    %v2225 = vunpack.c.h.b16 %v814
    %v2226 = vunpack.c.l.b16 %v815
    %v2227 = vunpack.c.h.b16 %v815
    %v2228 = vunpack.c.l.b16 %v816
    %v2229 = vunpack.c.h.b16 %v816
    %v2230 = vunpack.c.l.b16 %v817
    %v2231 = vunpack.c.h.b16 %v817
    %v2232 = vunpack.c.l.b16 %v818
    %v2233 = vunpack.c.h.b16 %v818
    %v2234 = vunpack.c.l.b16 %v819
    %v2235 = vunpack.c.h.b16 %v819
    %v2236 = vunpack.c.l.b16 %v820
    %v2237 = vunpack.c.h.b16 %v820
    %v2238 = vunpack.c.l.b16 %v821
    %v2239 = vunpack.c.h.b16 %v821
    %v2240 = vunpack.c.l.b16 %v822
    %v2241 = vunpack.c.h.b16 %v822
    %v2242 = vunpack.c.l.b16 %v823
    %v2243 = vunpack.c.h.b16 %v823
    %v2244 = vunpack.c.l.b16 %v824
    %v2245 = vunpack.c.h.b16 %v824
    %v2246 = vunpack.c.l.b16 %v825
    %v2247 = vunpack.c.h.b16 %v825
    %v2248 = vunpack.c.l.b16 %v826
    %v2249 = vunpack.c.h.b16 %v826
    %v2250 = vunpack.c.l.b16 %v827
    %v2251 = vunpack.c.h.b16 %v827
    %v2252 = vunpack.c.l.b16 %v828
    %v2253 = vunpack.c.h.b16 %v828
    %v2254 = vunpack.c.l.b16 %v829
    %v2255 = vunpack.c.h.b16 %v829
    %v2256 = vunpack.c.l.b16 %v830
    %v2257 = vunpack.c.h.b16 %v830
    %v2258 = vunpack.c.l.b16 %v831
    %v2259 = vunpack.c.h.b16 %v831
    %v2260 = vunpack.c.l.b16 %v832
    %v2261 = vunpack.c.h.b16 %v832
    %v2262 = vunpack.c.l.b16 %v833
    %v2263 = vunpack.c.h.b16 %v833
    %v2264 = vunpack.c.l.b16 %v834
    %v2265 = vunpack.c.h.b16 %v834
    %v2266 = vunpack.c.l.b16 %v835
    %v2267 = vunpack.c.h.b16 %v835
    %v2268 = vunpack.c.l.b16 %v836
    %v2269 = vunpack.c.h.b16 %v836
    %v2270 = vunpack.c.l.b16 %v837
    %v2271 = vunpack.c.h.b16 %v837
    %v2272 = vunpack.c.l.b16 %v838
    %v2273 = vunpack.c.h.b16 %v838
    %v2274 = vunpack.c.l.b16 %v839
    %v2275 = vunpack.c.h.b16 %v839
    %v2276 = vunpack.c.l.b16 %v840
    %v2277 = vunpack.c.h.b16 %v840
    %v2278 = vunpack.c.l.b16 %v841
    %v2279 = vunpack.c.h.b16 %v841
    %v2280 = vunpack.c.l.b16 %v842
    %v2281 = vunpack.c.h.b16 %v842
    %v2282 = vunpack.c.l.b16 %v843
    %v2283 = vunpack.c.h.b16 %v843
    %v2284 = vunpack.c.l.b16 %v844
    %v2285 = vunpack.c.h.b16 %v844
    %v2286 = vunpack.c.l.b16 %v845
    %v2287 = vunpack.c.h.b16 %v845
    %v2288 = vunpack.c.l.b16 %v846
    %v2289 = vunpack.c.h.b16 %v846
    %v2290 = vunpack.c.l.b16 %v847
    %v2291 = vunpack.c.h.b16 %v847
    %v2292 = vunpack.c.l.b16 %v848
    %v2293 = vunpack.c.h.b16 %v848
    %v2294 = vunpack.c.l.b16 %v849
    %v2295 = vunpack.c.h.b16 %v849
    %v2296 = vunpack.c.l.b16 %v850
    %v2297 = vunpack.c.h.b16 %v850
    %v2298 = vunpack.c.l.b16 %v851
    %v2299 = vunpack.c.h.b16 %v851
    %v2300 = vunpack.c.l.b16 %v852
    %v2301 = vunpack.c.h.b16 %v852
    %v2302 = vunpack.c.l.b16 %v853
    %v2303 = vunpack.c.h.b16 %v853
    %v2304 = vunpack.c.l.b16 %v854
    %v2305 = vunpack.c.h.b16 %v854
    %v2306 = vunpack.c.l.b16 %v855
    %v2307 = vunpack.c.h.b16 %v855
    %v2308 = vunpack.c.l.b16 %v856
    %v2309 = vunpack.c.h.b16 %v856
    %v2310 = vunpack.c.l.b16 %v857
    %v2311 = vunpack.c.h.b16 %v857
    %v2312 = vunpack.c.l.b16 %v858
    %v2313 = vunpack.c.h.b16 %v858
    %v2314 = vunpack.c.l.b16 %v859
    %v2315 = vunpack.c.h.b16 %v859
    %v2316 = vunpack.c.l.b16 %v860
    %v2317 = vunpack.c.h.b16 %v860
    %v2318 = vunpack.c.l.b16 %v861
    %v2319 = vunpack.c.h.b16 %v861
    %v2320 = vunpack.c.l.b16 %v862
    %v2321 = vunpack.c.h.b16 %v862
    %v2322 = vunpack.c.l.b16 %v863
    %v2323 = vunpack.c.h.b16 %v863
    %v2324 = vunpack.c.l.b16 %v864
    %v2325 = vunpack.c.h.b16 %v864
    %v2326 = vunpack.c.l.b16 %v865
    %v2327 = vunpack.c.h.b16 %v865
    %v2328 = vunpack.c.l.b16 %v866
    %v2329 = vunpack.c.h.b16 %v866
    %v2330 = vunpack.c.l.b16 %v867
    %v2331 = vunpack.c.h.b16 %v867
    %v2332 = vunpack.c.l.b16 %v868
    %v2333 = vunpack.c.h.b16 %v868
    %v2334 = vunpack.c.l.b16 %v869
    %v2335 = vunpack.c.h.b16 %v869
    %v2336 = vunpack.c.l.b16 %v870
    %v2337 = vunpack.c.h.b16 %v870
    %v2338 = vunpack.c.l.b16 %v871
    %v2339 = vunpack.c.h.b16 %v871
    %v2340 = vunpack.c.l.b16 %v872
    %v2341 = vunpack.c.h.b16 %v872
    %v2342 = vunpack.c.l.b16 %v873
    %v2343 = vunpack.c.h.b16 %v873
    %v2344 = vunpack.c.l.b16 %v874
    %v2345 = vunpack.c.h.b16 %v874
    %v2346 = vunpack.c.l.b16 %v875
    %v2347 = vunpack.c.h.b16 %v875
    %v2348 = vunpack.c.l.b16 %v876
    %v2349 = vunpack.c.h.b16 %v876
    %v2350 = vunpack.c.l.b16 %v877
    %v2351 = vunpack.c.h.b16 %v877
    %v2352 = vunpack.c.l.b16 %v878
    %v2353 = vunpack.c.h.b16 %v878
    %v2354 = vunpack.c.l.b16 %v879
    %v2355 = vunpack.c.h.b16 %v879
    %v2356 = vunpack.c.l.b16 %v880
    %v2357 = vunpack.c.h.b16 %v880
    %v2358 = vunpack.c.l.b16 %v881
    %v2359 = vunpack.c.h.b16 %v881
    %v2360 = vunpack.c.l.b16 %v882
    %v2361 = vunpack.c.h.b16 %v882
    %v2362 = vunpack.c.l.b16 %v883
    %v2363 = vunpack.c.h.b16 %v883
    %v2364 = vunpack.c.l.b16 %v884
    %v2365 = vunpack.c.h.b16 %v884
    %v2366 = vunpack.c.l.b16 %v885
    %v2367 = vunpack.c.h.b16 %v885
    %v2368 = vunpack.c.l.b16 %v886
    %v2369 = vunpack.c.h.b16 %v886
    %v2370 = vunpack.c.l.b16 %v887
    %v2371 = vunpack.c.h.b16 %v887
    %v2372 = vunpack.c.l.b16 %v888
    %v2373 = vunpack.c.h.b16 %v888
    %v2374 = vunpack.c.l.b16 %v889
    %v2375 = vunpack.c.h.b16 %v889
    %v2376 = vunpack.c.l.b16 %v890
    %v2377 = vunpack.c.h.b16 %v890
    %v2378 = vunpack.c.l.b16 %v891
    %v2379 = vunpack.c.h.b16 %v891
    %v2380 = vunpack.c.l.b16 %v892
    %v2381 = vunpack.c.h.b16 %v892
    %v2382 = vunpack.c.l.b16 %v893
    %v2383 = vunpack.c.h.b16 %v893
    %v2384 = vunpack.c.l.b16 %v894
    %v2385 = vunpack.c.h.b16 %v894
    %v2386 = vunpack.c.l.b16 %v895
    %v2387 = vunpack.c.h.b16 %v895
    %v2388 = vunpack.c.l.b16 %v896
    %v2389 = vunpack.c.h.b16 %v896
    %v2390 = vunpack.c.l.b16 %v897
    %v2391 = vunpack.c.h.b16 %v897
    %v2392 = vunpack.c.l.b16 %v898
    %v2393 = vunpack.c.h.b16 %v898
    %v2394 = vunpack.c.l.b16 %v899
    %v2395 = vunpack.c.h.b16 %v899
    %v2396 = vunpack.c.l.b16 %v900
    %v2397 = vunpack.c.h.b16 %v900
    %v2398 = vunpack.c.l.b16 %v901
    %v2399 = vunpack.c.h.b16 %v901
    %v2400 = vunpack.c.l.b16 %v902
    %v2401 = vunpack.c.h.b16 %v902
    %v2402 = vunpack.c.l.b16 %v903
    %v2403 = vunpack.c.h.b16 %v903
    %v2404 = vunpack.c.l.b16 %v904
    %v2405 = vunpack.c.h.b16 %v904
    %v2406 = vunpack.c.l.b16 %v905
    %v2407 = vunpack.c.h.b16 %v905
    %v2408 = vunpack.c.l.b16 %v906
    %v2409 = vunpack.c.h.b16 %v906
    %v2410 = vunpack.c.l.b16 %v907
    %v2411 = vunpack.c.h.b16 %v907
    %v2412 = vunpack.c.l.b16 %v908
    %v2413 = vunpack.c.h.b16 %v908
    %v2414 = vunpack.c.l.b16 %v909
    %v2415 = vunpack.c.h.b16 %v909
    %v2416 = vunpack.c.l.b16 %v910
    %v2417 = vunpack.c.h.b16 %v910
    %v2418 = vunpack.c.l.b16 %v911
    %v2419 = vunpack.c.h.b16 %v911
    %v2420 = vunpack.c.l.b16 %v912
    %v2421 = vunpack.c.h.b16 %v912
    %v2422 = vunpack.c.l.b16 %v913
    %v2423 = vunpack.c.h.b16 %v913
    %v2424 = vunpack.c.l.b16 %v914
    %v2425 = vunpack.c.h.b16 %v914
    %v2426 = vunpack.c.l.b16 %v915
    %v2427 = vunpack.c.h.b16 %v915
    %v2428 = vunpack.c.l.b16 %v916
    %v2429 = vunpack.c.h.b16 %v916
    %v2430 = vunpack.c.l.b16 %v917
    %v2431 = vunpack.c.h.b16 %v917
    %v2432 = vunpack.c.l.b16 %v918
    %v2433 = vunpack.c.h.b16 %v918
    %v2434 = vunpack.c.l.b16 %v919
    %v2435 = vunpack.c.h.b16 %v919
    %v2436 = vunpack.c.l.b16 %v920
    %v2437 = vunpack.c.h.b16 %v920
    %v2438 = vunpack.c.l.b16 %v921
    %v2439 = vunpack.c.h.b16 %v921
    %v2440 = vunpack.c.l.b16 %v922
    %v2441 = vunpack.c.h.b16 %v922
    %v2442 = vunpack.c.l.b16 %v923
    %v2443 = vunpack.c.h.b16 %v923
    %v2444 = vunpack.c.l.b16 %v924
    %v2445 = vunpack.c.h.b16 %v924
    %v2446 = vunpack.c.l.b16 %v925
    %v2447 = vunpack.c.h.b16 %v925
    %v2448 = vunpack.c.l.b16 %v926
    %v2449 = vunpack.c.h.b16 %v926
    %v2450 = vunpack.c.l.b16 %v927
    %v2451 = vunpack.c.h.b16 %v927
    %v2452 = vunpack.c.l.b16 %v928
    %v2453 = vunpack.c.h.b16 %v928
    %v2454 = vunpack.c.l.b16 %v929
    %v2455 = vunpack.c.h.b16 %v929
    %v2456 = vunpack.c.l.b16 %v930
    %v2457 = vunpack.c.h.b16 %v930
    %v2458 = vunpack.c.l.b16 %v931
    %v2459 = vunpack.c.h.b16 %v931
    %v2460 = vunpack.c.l.b16 %v932
    %v2461 = vunpack.c.h.b16 %v932
    %v2462 = vunpack.c.l.b16 %v933
    %v2463 = vunpack.c.h.b16 %v933
    %v2464 = vunpack.c.l.b16 %v934
    %v2465 = vunpack.c.h.b16 %v934
    %v2466 = vunpack.c.l.b16 %v935
    %v2467 = vunpack.c.h.b16 %v935
    %v2468 = vunpack.c.l.b16 %v936
    %v2469 = vunpack.c.h.b16 %v936
    %v2470 = vunpack.c.l.b16 %v937
    %v2471 = vunpack.c.h.b16 %v937
    %v2472 = vunpack.c.l.b16 %v938
    %v2473 = vunpack.c.h.b16 %v938
    %v2474 = vunpack.c.l.b16 %v939
    %v2475 = vunpack.c.h.b16 %v939
    %v2476 = vunpack.c.l.b16 %v940
    %v2477 = vunpack.c.h.b16 %v940
    %v2478 = vunpack.c.l.b16 %v941
    %v2479 = vunpack.c.h.b16 %v941
    %v2480 = vunpack.c.l.b16 %v942
    %v2481 = vunpack.c.h.b16 %v942
    %v2482 = vunpack.c.l.b16 %v943
    %v2483 = vunpack.c.h.b16 %v943
    %v2484 = vunpack.c.l.b16 %v944
    %v2485 = vunpack.c.h.b16 %v944
    %v2486 = vunpack.c.l.b16 %v945
    %v2487 = vunpack.c.h.b16 %v945
    %v2488 = vunpack.c.l.b16 %v946
    %v2489 = vunpack.c.h.b16 %v946
    %v2490 = vunpack.c.l.b16 %v947
    %v2491 = vunpack.c.h.b16 %v947
    %v2492 = vunpack.c.l.b16 %v948
    %v2493 = vunpack.c.h.b16 %v948
    %v2494 = vunpack.c.l.b16 %v949
    %v2495 = vunpack.c.h.b16 %v949
    %v2496 = vunpack.c.l.b16 %v950
    %v2497 = vunpack.c.h.b16 %v950
    %v2498 = vunpack.c.l.b16 %v951
    %v2499 = vunpack.c.h.b16 %v951
    %v2500 = vunpack.c.l.b16 %v952
    %v2501 = vunpack.c.h.b16 %v952
    %v2502 = vunpack.c.l.b16 %v953
    %v2503 = vunpack.c.h.b16 %v953
    %v2504 = vunpack.c.l.b16 %v954
    %v2505 = vunpack.c.h.b16 %v954
    %v2506 = vunpack.c.l.b16 %v955
    %v2507 = vunpack.c.h.b16 %v955
    %v2508 = vunpack.c.l.b16 %v956
    %v2509 = vunpack.c.h.b16 %v956
    %v2510 = vunpack.c.l.b16 %v957
    %v2511 = vunpack.c.h.b16 %v957
    %v2512 = vunpack.c.l.b16 %v958
    %v2513 = vunpack.c.h.b16 %v958
    %v2514 = vunpack.c.l.b16 %v959
    %v2515 = vunpack.c.h.b16 %v959
    %v2516 = vunpack.c.l.b16 %v960
    %v2517 = vunpack.c.h.b16 %v960
    %v2518 = vunpack.c.l.b16 %v961
    %v2519 = vunpack.c.h.b16 %v961
    %v2520 = vpack.c.b16 %v1500, %v1496
    %v2521 = vpack.c.b16 %v1501, %v1497
    %v2522 = vpack.c.b16 %v1502, %v1498
    %v2523 = vpack.c.b16 %v1503, %v1499
    %v2524 = vpack.c.b16 %v1508, %v1504
    %v2525 = vpack.c.b16 %v1509, %v1505
    %v2526 = vpack.c.b16 %v1510, %v1506
    %v2527 = vpack.c.b16 %v1511, %v1507
    %v2528 = vpack.c.b16 %v1516, %v1512
    %v2529 = vpack.c.b16 %v1517, %v1513
    %v2530 = vpack.c.b16 %v1518, %v1514
    %v2531 = vpack.c.b16 %v1519, %v1515
    %v2532 = vpack.c.b16 %v1524, %v1520
    %v2533 = vpack.c.b16 %v1525, %v1521
    %v2534 = vpack.c.b16 %v1526, %v1522
    %v2535 = vpack.c.b16 %v1527, %v1523
    %v2536 = vpack.c.b16 %v1532, %v1528
    %v2537 = vpack.c.b16 %v1533, %v1529
    %v2538 = vpack.c.b16 %v1534, %v1530
    %v2539 = vpack.c.b16 %v1535, %v1531
    %v2540 = vpack.c.b16 %v1540, %v1536
    %v2541 = vpack.c.b16 %v1541, %v1537
    %v2542 = vpack.c.b16 %v1542, %v1538
    %v2543 = vpack.c.b16 %v1543, %v1539
    %v2544 = vpack.c.b16 %v1548, %v1544
    %v2545 = vpack.c.b16 %v1549, %v1545
    %v2546 = vpack.c.b16 %v1550, %v1546
    %v2547 = vpack.c.b16 %v1551, %v1547
    %v2548 = vpack.c.b16 %v1556, %v1552
    %v2549 = vpack.c.b16 %v1557, %v1553
    %v2550 = vpack.c.b16 %v1558, %v1554
    %v2551 = vpack.c.b16 %v1559, %v1555
    %v2552 = vpack.c.b16 %v1564, %v1560
    %v2553 = vpack.c.b16 %v1565, %v1561
    %v2554 = vpack.c.b16 %v1566, %v1562
    %v2555 = vpack.c.b16 %v1567, %v1563
    %v2556 = vpack.c.b16 %v1572, %v1568
    %v2557 = vpack.c.b16 %v1573, %v1569
    %v2558 = vpack.c.b16 %v1574, %v1570
    %v2559 = vpack.c.b16 %v1575, %v1571
    %v2560 = vpack.c.b16 %v1580, %v1576
    %v2561 = vpack.c.b16 %v1581, %v1577
    %v2562 = vpack.c.b16 %v1582, %v1578
    %v2563 = vpack.c.b16 %v1583, %v1579
    %v2564 = vpack.c.b16 %v1588, %v1584
    %v2565 = vpack.c.b16 %v1589, %v1585
    %v2566 = vpack.c.b16 %v1590, %v1586
    %v2567 = vpack.c.b16 %v1591, %v1587
    %v2568 = vpack.c.b16 %v1596, %v1592
    %v2569 = vpack.c.b16 %v1597, %v1593
    %v2570 = vpack.c.b16 %v1598, %v1594
    %v2571 = vpack.c.b16 %v1599, %v1595
    %v2572 = vpack.c.b16 %v1604, %v1600
    %v2573 = vpack.c.b16 %v1605, %v1601
    %v2574 = vpack.c.b16 %v1606, %v1602
    %v2575 = vpack.c.b16 %v1607, %v1603
    %v2576 = vpack.c.b16 %v1612, %v1608
    %v2577 = vpack.c.b16 %v1613, %v1609
    %v2578 = vpack.c.b16 %v1614, %v1610
    %v2579 = vpack.c.b16 %v1615, %v1611
    %v2580 = vpack.c.b16 %v1620, %v1616
    %v2581 = vpack.c.b16 %v1621, %v1617
    %v2582 = vpack.c.b16 %v1622, %v1618
    %v2583 = vpack.c.b16 %v1623, %v1619
    %v2584 = vpack.c.b16 %v1628, %v1624
    %v2585 = vpack.c.b16 %v1629, %v1625
    %v2586 = vpack.c.b16 %v1630, %v1626
    %v2587 = vpack.c.b16 %v1631, %v1627
    %v2588 = vpack.c.b16 %v1636, %v1632
    %v2589 = vpack.c.b16 %v1637, %v1633
    %v2590 = vpack.c.b16 %v1638, %v1634
    %v2591 = vpack.c.b16 %v1639, %v1635
    %v2592 = vpack.c.b16 %v1644, %v1640
    %v2593 = vpack.c.b16 %v1645, %v1641
    %v2594 = vpack.c.b16 %v1646, %v1642
    %v2595 = vpack.c.b16 %v1647, %v1643
    %v2596 = vpack.c.b16 %v1652, %v1648
    %v2597 = vpack.c.b16 %v1653, %v1649
    %v2598 = vpack.c.b16 %v1654, %v1650
    %v2599 = vpack.c.b16 %v1655, %v1651
    %v2600 = vpack.c.b16 %v1660, %v1656
    %v2601 = vpack.c.b16 %v1661, %v1657
    %v2602 = vpack.c.b16 %v1662, %v1658
    %v2603 = vpack.c.b16 %v1663, %v1659
    %v2604 = vpack.c.b16 %v1668, %v1664
    %v2605 = vpack.c.b16 %v1669, %v1665
    %v2606 = vpack.c.b16 %v1670, %v1666
    %v2607 = vpack.c.b16 %v1671, %v1667
    %v2608 = vpack.c.b16 %v1676, %v1672
    %v2609 = vpack.c.b16 %v1677, %v1673
    %v2610 = vpack.c.b16 %v1678, %v1674
    %v2611 = vpack.c.b16 %v1679, %v1675
    %v2612 = vpack.c.b16 %v1684, %v1680
    %v2613 = vpack.c.b16 %v1685, %v1681
    %v2614 = vpack.c.b16 %v1686, %v1682
    %v2615 = vpack.c.b16 %v1687, %v1683
    %v2616 = vpack.c.b16 %v1692, %v1688
    %v2617 = vpack.c.b16 %v1693, %v1689
    %v2618 = vpack.c.b16 %v1694, %v1690
    %v2619 = vpack.c.b16 %v1695, %v1691
    %v2620 = vpack.c.b16 %v1700, %v1696
    %v2621 = vpack.c.b16 %v1701, %v1697
    %v2622 = vpack.c.b16 %v1702, %v1698
    %v2623 = vpack.c.b16 %v1703, %v1699
    %v2624 = vpack.c.b16 %v1708, %v1704
    %v2625 = vpack.c.b16 %v1709, %v1705
    %v2626 = vpack.c.b16 %v1710, %v1706
    %v2627 = vpack.c.b16 %v1711, %v1707
    %v2628 = vpack.c.b16 %v1716, %v1712
    %v2629 = vpack.c.b16 %v1717, %v1713
    %v2630 = vpack.c.b16 %v1718, %v1714
    %v2631 = vpack.c.b16 %v1719, %v1715
    %v2632 = vpack.c.b16 %v1724, %v1720
    %v2633 = vpack.c.b16 %v1725, %v1721
    %v2634 = vpack.c.b16 %v1726, %v1722
    %v2635 = vpack.c.b16 %v1727, %v1723
    %v2636 = vpack.c.b16 %v1732, %v1728
    %v2637 = vpack.c.b16 %v1733, %v1729
    %v2638 = vpack.c.b16 %v1734, %v1730
    %v2639 = vpack.c.b16 %v1735, %v1731
    %v2640 = vpack.c.b16 %v1740, %v1736
    %v2641 = vpack.c.b16 %v1741, %v1737
    %v2642 = vpack.c.b16 %v1742, %v1738
    %v2643 = vpack.c.b16 %v1743, %v1739
    %v2644 = vpack.c.b16 %v1748, %v1744
    %v2645 = vpack.c.b16 %v1749, %v1745
    %v2646 = vpack.c.b16 %v1750, %v1746
    %v2647 = vpack.c.b16 %v1751, %v1747
    %v2648 = vpack.c.b16 %v1756, %v1752
    %v2649 = vpack.c.b16 %v1757, %v1753
    %v2650 = vpack.c.b16 %v1758, %v1754
    %v2651 = vpack.c.b16 %v1759, %v1755
    %v2652 = vpack.c.b16 %v1764, %v1760
    %v2653 = vpack.c.b16 %v1765, %v1761
    %v2654 = vpack.c.b16 %v1766, %v1762
    %v2655 = vpack.c.b16 %v1767, %v1763
    %v2656 = vpack.c.b16 %v1772, %v1768
    %v2657 = vpack.c.b16 %v1773, %v1769
    %v2658 = vpack.c.b16 %v1774, %v1770
    %v2659 = vpack.c.b16 %v1775, %v1771
    %v2660 = vpack.c.b16 %v1780, %v1776
    %v2661 = vpack.c.b16 %v1781, %v1777
    %v2662 = vpack.c.b16 %v1782, %v1778
    %v2663 = vpack.c.b16 %v1783, %v1779
    %v2664 = vpack.c.b16 %v1788, %v1784
    %v2665 = vpack.c.b16 %v1789, %v1785
    %v2666 = vpack.c.b16 %v1790, %v1786
    %v2667 = vpack.c.b16 %v1791, %v1787
    %v2668 = vpack.c.b16 %v1796, %v1792
    %v2669 = vpack.c.b16 %v1797, %v1793
    %v2670 = vpack.c.b16 %v1798, %v1794
    %v2671 = vpack.c.b16 %v1799, %v1795
    %v2672 = vpack.c.b16 %v1804, %v1800
    %v2673 = vpack.c.b16 %v1805, %v1801
    %v2674 = vpack.c.b16 %v1806, %v1802
    %v2675 = vpack.c.b16 %v1807, %v1803
    %v2676 = vpack.c.b16 %v1812, %v1808
    %v2677 = vpack.c.b16 %v1813, %v1809
    %v2678 = vpack.c.b16 %v1814, %v1810
    %v2679 = vpack.c.b16 %v1815, %v1811
    %v2680 = vpack.c.b16 %v1820, %v1816
    %v2681 = vpack.c.b16 %v1821, %v1817
    %v2682 = vpack.c.b16 %v1822, %v1818
    %v2683 = vpack.c.b16 %v1823, %v1819
    %v2684 = vpack.c.b16 %v1828, %v1824
    %v2685 = vpack.c.b16 %v1829, %v1825
    %v2686 = vpack.c.b16 %v1830, %v1826
    %v2687 = vpack.c.b16 %v1831, %v1827
    %v2688 = vpack.c.b16 %v1836, %v1832
    %v2689 = vpack.c.b16 %v1837, %v1833
    %v2690 = vpack.c.b16 %v1838, %v1834
    %v2691 = vpack.c.b16 %v1839, %v1835
    %v2692 = vpack.c.b16 %v1844, %v1840
    %v2693 = vpack.c.b16 %v1845, %v1841
    %v2694 = vpack.c.b16 %v1846, %v1842
    %v2695 = vpack.c.b16 %v1847, %v1843
    %v2696 = vpack.c.b16 %v1852, %v1848
    %v2697 = vpack.c.b16 %v1853, %v1849
    %v2698 = vpack.c.b16 %v1854, %v1850
    %v2699 = vpack.c.b16 %v1855, %v1851
    %v2700 = vpack.c.b16 %v1860, %v1856
    %v2701 = vpack.c.b16 %v1861, %v1857
    %v2702 = vpack.c.b16 %v1862, %v1858
    %v2703 = vpack.c.b16 %v1863, %v1859
    %v2704 = vpack.c.b16 %v1868, %v1864
    %v2705 = vpack.c.b16 %v1869, %v1865
    %v2706 = vpack.c.b16 %v1870, %v1866
    %v2707 = vpack.c.b16 %v1871, %v1867
    %v2708 = vpack.c.b16 %v1876, %v1872
    %v2709 = vpack.c.b16 %v1877, %v1873
    %v2710 = vpack.c.b16 %v1878, %v1874
    %v2711 = vpack.c.b16 %v1879, %v1875
    %v2712 = vpack.c.b16 %v1884, %v1880
    %v2713 = vpack.c.b16 %v1885, %v1881
    %v2714 = vpack.c.b16 %v1886, %v1882
    %v2715 = vpack.c.b16 %v1887, %v1883
    %v2716 = vpack.c.b16 %v1892, %v1888
    %v2717 = vpack.c.b16 %v1893, %v1889
    %v2718 = vpack.c.b16 %v1894, %v1890
    %v2719 = vpack.c.b16 %v1895, %v1891
    %v2720 = vpack.c.b16 %v1900, %v1896
    %v2721 = vpack.c.b16 %v1901, %v1897
    %v2722 = vpack.c.b16 %v1902, %v1898
    %v2723 = vpack.c.b16 %v1903, %v1899
    %v2724 = vpack.c.b16 %v1908, %v1904
    %v2725 = vpack.c.b16 %v1909, %v1905
    %v2726 = vpack.c.b16 %v1910, %v1906
    %v2727 = vpack.c.b16 %v1911, %v1907
    %v2728 = vpack.c.b16 %v1916, %v1912
    %v2729 = vpack.c.b16 %v1917, %v1913
    %v2730 = vpack.c.b16 %v1918, %v1914
    %v2731 = vpack.c.b16 %v1919, %v1915
    %v2732 = vpack.c.b16 %v1924, %v1920
    %v2733 = vpack.c.b16 %v1925, %v1921
    %v2734 = vpack.c.b16 %v1926, %v1922
    %v2735 = vpack.c.b16 %v1927, %v1923
    %v2736 = vpack.c.b16 %v1932, %v1928
    %v2737 = vpack.c.b16 %v1933, %v1929
    %v2738 = vpack.c.b16 %v1934, %v1930
    %v2739 = vpack.c.b16 %v1935, %v1931
    %v2740 = vpack.c.b16 %v1940, %v1936
    %v2741 = vpack.c.b16 %v1941, %v1937
    %v2742 = vpack.c.b16 %v1942, %v1938
    %v2743 = vpack.c.b16 %v1943, %v1939
    %v2744 = vpack.c.b16 %v1948, %v1944
    %v2745 = vpack.c.b16 %v1949, %v1945
    %v2746 = vpack.c.b16 %v1950, %v1946
    %v2747 = vpack.c.b16 %v1951, %v1947
    %v2748 = vpack.c.b16 %v1956, %v1952
    %v2749 = vpack.c.b16 %v1957, %v1953
    %v2750 = vpack.c.b16 %v1958, %v1954
    %v2751 = vpack.c.b16 %v1959, %v1955
    %v2752 = vpack.c.b16 %v1964, %v1960
    %v2753 = vpack.c.b16 %v1965, %v1961
    %v2754 = vpack.c.b16 %v1966, %v1962
    %v2755 = vpack.c.b16 %v1967, %v1963
    %v2756 = vpack.c.b16 %v1972, %v1968
    %v2757 = vpack.c.b16 %v1973, %v1969
    %v2758 = vpack.c.b16 %v1974, %v1970
    %v2759 = vpack.c.b16 %v1975, %v1971
    %v2760 = vpack.c.b16 %v1980, %v1976
    %v2761 = vpack.c.b16 %v1981, %v1977
    %v2762 = vpack.c.b16 %v1982, %v1978
    %v2763 = vpack.c.b16 %v1983, %v1979
    %v2764 = vpack.c.b16 %v1988, %v1984
    %v2765 = vpack.c.b16 %v1989, %v1985
    %v2766 = vpack.c.b16 %v1990, %v1986
    %v2767 = vpack.c.b16 %v1991, %v1987
    %v2768 = vpack.c.b16 %v1996, %v1992
    %v2769 = vpack.c.b16 %v1997, %v1993
    %v2770 = vpack.c.b16 %v1998, %v1994
    %v2771 = vpack.c.b16 %v1999, %v1995
    %v2772 = vpack.c.b16 %v2004, %v2000
    %v2773 = vpack.c.b16 %v2005, %v2001
    %v2774 = vpack.c.b16 %v2006, %v2002
    %v2775 = vpack.c.b16 %v2007, %v2003
    %v2776 = vpack.c.b16 %v2012, %v2008
    %v2777 = vpack.c.b16 %v2013, %v2009
    %v2778 = vpack.c.b16 %v2014, %v2010
    %v2779 = vpack.c.b16 %v2015, %v2011
    %v2780 = vpack.c.b16 %v2020, %v2016
    %v2781 = vpack.c.b16 %v2021, %v2017
    %v2782 = vpack.c.b16 %v2022, %v2018
    %v2783 = vpack.c.b16 %v2023, %v2019
    %v2784 = vpack.c.b16 %v2028, %v2024
    %v2785 = vpack.c.b16 %v2029, %v2025
    %v2786 = vpack.c.b16 %v2030, %v2026
    %v2787 = vpack.c.b16 %v2031, %v2027
    %v2788 = vpack.c.b16 %v2036, %v2032
    %v2789 = vpack.c.b16 %v2037, %v2033
    %v2790 = vpack.c.b16 %v2038, %v2034
    %v2791 = vpack.c.b16 %v2039, %v2035
    %v2792 = vpack.c.b16 %v2044, %v2040
    %v2793 = vpack.c.b16 %v2045, %v2041
    %v2794 = vpack.c.b16 %v2046, %v2042
    %v2795 = vpack.c.b16 %v2047, %v2043
    %v2796 = vpack.c.b16 %v2052, %v2048
    %v2797 = vpack.c.b16 %v2053, %v2049
    %v2798 = vpack.c.b16 %v2054, %v2050
    %v2799 = vpack.c.b16 %v2055, %v2051
    %v2800 = vpack.c.b16 %v2060, %v2056
    %v2801 = vpack.c.b16 %v2061, %v2057
    %v2802 = vpack.c.b16 %v2062, %v2058
    %v2803 = vpack.c.b16 %v2063, %v2059
    %v2804 = vpack.c.b16 %v2068, %v2064
    %v2805 = vpack.c.b16 %v2069, %v2065
    %v2806 = vpack.c.b16 %v2070, %v2066
    %v2807 = vpack.c.b16 %v2071, %v2067
    %v2808 = vpack.c.b16 %v2076, %v2072
    %v2809 = vpack.c.b16 %v2077, %v2073
    %v2810 = vpack.c.b16 %v2078, %v2074
    %v2811 = vpack.c.b16 %v2079, %v2075
    %v2812 = vpack.c.b16 %v2084, %v2080
    %v2813 = vpack.c.b16 %v2085, %v2081
    %v2814 = vpack.c.b16 %v2086, %v2082
    %v2815 = vpack.c.b16 %v2087, %v2083
    %v2816 = vpack.c.b16 %v2092, %v2088
    %v2817 = vpack.c.b16 %v2093, %v2089
    %v2818 = vpack.c.b16 %v2094, %v2090
    %v2819 = vpack.c.b16 %v2095, %v2091
    %v2820 = vpack.c.b16 %v2100, %v2096
    %v2821 = vpack.c.b16 %v2101, %v2097
    %v2822 = vpack.c.b16 %v2102, %v2098
    %v2823 = vpack.c.b16 %v2103, %v2099
    %v2824 = vpack.c.b16 %v2108, %v2104
    %v2825 = vpack.c.b16 %v2109, %v2105
    %v2826 = vpack.c.b16 %v2110, %v2106
    %v2827 = vpack.c.b16 %v2111, %v2107
    %v2828 = vpack.c.b16 %v2116, %v2112
    %v2829 = vpack.c.b16 %v2117, %v2113
    %v2830 = vpack.c.b16 %v2118, %v2114
    %v2831 = vpack.c.b16 %v2119, %v2115
    %v2832 = vpack.c.b16 %v2124, %v2120
    %v2833 = vpack.c.b16 %v2125, %v2121
    %v2834 = vpack.c.b16 %v2126, %v2122
    %v2835 = vpack.c.b16 %v2127, %v2123
    %v2836 = vpack.c.b16 %v2132, %v2128
    %v2837 = vpack.c.b16 %v2133, %v2129
    %v2838 = vpack.c.b16 %v2134, %v2130
    %v2839 = vpack.c.b16 %v2135, %v2131
    %v2840 = vpack.c.b16 %v2140, %v2136
    %v2841 = vpack.c.b16 %v2141, %v2137
    %v2842 = vpack.c.b16 %v2142, %v2138
    %v2843 = vpack.c.b16 %v2143, %v2139
    %v2844 = vpack.c.b16 %v2148, %v2144
    %v2845 = vpack.c.b16 %v2149, %v2145
    %v2846 = vpack.c.b16 %v2150, %v2146
    %v2847 = vpack.c.b16 %v2151, %v2147
    %v2848 = vpack.c.b16 %v2156, %v2152
    %v2849 = vpack.c.b16 %v2157, %v2153
    %v2850 = vpack.c.b16 %v2158, %v2154
    %v2851 = vpack.c.b16 %v2159, %v2155
    %v2852 = vpack.c.b16 %v2164, %v2160
    %v2853 = vpack.c.b16 %v2165, %v2161
    %v2854 = vpack.c.b16 %v2166, %v2162
    %v2855 = vpack.c.b16 %v2167, %v2163
    %v2856 = vpack.c.b16 %v2172, %v2168
    %v2857 = vpack.c.b16 %v2173, %v2169
    %v2858 = vpack.c.b16 %v2174, %v2170
    %v2859 = vpack.c.b16 %v2175, %v2171
    %v2860 = vpack.c.b16 %v2180, %v2176
    %v2861 = vpack.c.b16 %v2181, %v2177
    %v2862 = vpack.c.b16 %v2182, %v2178
    %v2863 = vpack.c.b16 %v2183, %v2179
    %v2864 = vpack.c.b16 %v2188, %v2184
    %v2865 = vpack.c.b16 %v2189, %v2185
    %v2866 = vpack.c.b16 %v2190, %v2186
    %v2867 = vpack.c.b16 %v2191, %v2187
    %v2868 = vpack.c.b16 %v2196, %v2192
    %v2869 = vpack.c.b16 %v2197, %v2193
    %v2870 = vpack.c.b16 %v2198, %v2194
    %v2871 = vpack.c.b16 %v2199, %v2195
    %v2872 = vpack.c.b16 %v2204, %v2200
    %v2873 = vpack.c.b16 %v2205, %v2201
    %v2874 = vpack.c.b16 %v2206, %v2202
    %v2875 = vpack.c.b16 %v2207, %v2203
    %v2876 = vpack.c.b16 %v2212, %v2208
    %v2877 = vpack.c.b16 %v2213, %v2209
    %v2878 = vpack.c.b16 %v2214, %v2210
    %v2879 = vpack.c.b16 %v2215, %v2211
    %v2880 = vpack.c.b16 %v2220, %v2216
    %v2881 = vpack.c.b16 %v2221, %v2217
    %v2882 = vpack.c.b16 %v2222, %v2218
    %v2883 = vpack.c.b16 %v2223, %v2219
    %v2884 = vpack.c.b16 %v2228, %v2224
    %v2885 = vpack.c.b16 %v2229, %v2225
    %v2886 = vpack.c.b16 %v2230, %v2226
    %v2887 = vpack.c.b16 %v2231, %v2227
    %v2888 = vpack.c.b16 %v2236, %v2232
    %v2889 = vpack.c.b16 %v2237, %v2233
    %v2890 = vpack.c.b16 %v2238, %v2234
    %v2891 = vpack.c.b16 %v2239, %v2235
    %v2892 = vpack.c.b16 %v2244, %v2240
    %v2893 = vpack.c.b16 %v2245, %v2241
    %v2894 = vpack.c.b16 %v2246, %v2242
    %v2895 = vpack.c.b16 %v2247, %v2243
    %v2896 = vpack.c.b16 %v2252, %v2248
    %v2897 = vpack.c.b16 %v2253, %v2249
    %v2898 = vpack.c.b16 %v2254, %v2250
    %v2899 = vpack.c.b16 %v2255, %v2251
    %v2900 = vpack.c.b16 %v2260, %v2256
    %v2901 = vpack.c.b16 %v2261, %v2257
    %v2902 = vpack.c.b16 %v2262, %v2258
    %v2903 = vpack.c.b16 %v2263, %v2259
    %v2904 = vpack.c.b16 %v2268, %v2264
    %v2905 = vpack.c.b16 %v2269, %v2265
    %v2906 = vpack.c.b16 %v2270, %v2266
    %v2907 = vpack.c.b16 %v2271, %v2267
    %v2908 = vpack.c.b16 %v2276, %v2272
    %v2909 = vpack.c.b16 %v2277, %v2273
    %v2910 = vpack.c.b16 %v2278, %v2274
    %v2911 = vpack.c.b16 %v2279, %v2275
    %v2912 = vpack.c.b16 %v2284, %v2280
    %v2913 = vpack.c.b16 %v2285, %v2281
    %v2914 = vpack.c.b16 %v2286, %v2282
    %v2915 = vpack.c.b16 %v2287, %v2283
    %v2916 = vpack.c.b16 %v2292, %v2288
    %v2917 = vpack.c.b16 %v2293, %v2289
    %v2918 = vpack.c.b16 %v2294, %v2290
    %v2919 = vpack.c.b16 %v2295, %v2291
    %v2920 = vpack.c.b16 %v2300, %v2296
    %v2921 = vpack.c.b16 %v2301, %v2297
    %v2922 = vpack.c.b16 %v2302, %v2298
    %v2923 = vpack.c.b16 %v2303, %v2299
    %v2924 = vpack.c.b16 %v2308, %v2304
    %v2925 = vpack.c.b16 %v2309, %v2305
    %v2926 = vpack.c.b16 %v2310, %v2306
    %v2927 = vpack.c.b16 %v2311, %v2307
    %v2928 = vpack.c.b16 %v2316, %v2312
    %v2929 = vpack.c.b16 %v2317, %v2313
    %v2930 = vpack.c.b16 %v2318, %v2314
    %v2931 = vpack.c.b16 %v2319, %v2315
    %v2932 = vpack.c.b16 %v2324, %v2320
    %v2933 = vpack.c.b16 %v2325, %v2321
    %v2934 = vpack.c.b16 %v2326, %v2322
    %v2935 = vpack.c.b16 %v2327, %v2323
    %v2936 = vpack.c.b16 %v2332, %v2328
    %v2937 = vpack.c.b16 %v2333, %v2329
    %v2938 = vpack.c.b16 %v2334, %v2330
    %v2939 = vpack.c.b16 %v2335, %v2331
    %v2940 = vpack.c.b16 %v2340, %v2336
    %v2941 = vpack.c.b16 %v2341, %v2337
    %v2942 = vpack.c.b16 %v2342, %v2338
    %v2943 = vpack.c.b16 %v2343, %v2339
    %v2944 = vpack.c.b16 %v2348, %v2344
    %v2945 = vpack.c.b16 %v2349, %v2345
    %v2946 = vpack.c.b16 %v2350, %v2346
    %v2947 = vpack.c.b16 %v2351, %v2347
    %v2948 = vpack.c.b16 %v2356, %v2352
    %v2949 = vpack.c.b16 %v2357, %v2353
    %v2950 = vpack.c.b16 %v2358, %v2354
    %v2951 = vpack.c.b16 %v2359, %v2355
    %v2952 = vpack.c.b16 %v2364, %v2360
    %v2953 = vpack.c.b16 %v2365, %v2361
    %v2954 = vpack.c.b16 %v2366, %v2362
    %v2955 = vpack.c.b16 %v2367, %v2363
    %v2956 = vpack.c.b16 %v2372, %v2368
    %v2957 = vpack.c.b16 %v2373, %v2369
    %v2958 = vpack.c.b16 %v2374, %v2370
    %v2959 = vpack.c.b16 %v2375, %v2371
    %v2960 = vpack.c.b16 %v2380, %v2376
    %v2961 = vpack.c.b16 %v2381, %v2377
    %v2962 = vpack.c.b16 %v2382, %v2378
    %v2963 = vpack.c.b16 %v2383, %v2379
    %v2964 = vpack.c.b16 %v2388, %v2384
    %v2965 = vpack.c.b16 %v2389, %v2385
    %v2966 = vpack.c.b16 %v2390, %v2386
    %v2967 = vpack.c.b16 %v2391, %v2387
    %v2968 = vpack.c.b16 %v2396, %v2392
    %v2969 = vpack.c.b16 %v2397, %v2393
    %v2970 = vpack.c.b16 %v2398, %v2394
    %v2971 = vpack.c.b16 %v2399, %v2395
    %v2972 = vpack.c.b16 %v2404, %v2400
    %v2973 = vpack.c.b16 %v2405, %v2401
    %v2974 = vpack.c.b16 %v2406, %v2402
    %v2975 = vpack.c.b16 %v2407, %v2403
    %v2976 = vpack.c.b16 %v2412, %v2408
    %v2977 = vpack.c.b16 %v2413, %v2409
    %v2978 = vpack.c.b16 %v2414, %v2410
    %v2979 = vpack.c.b16 %v2415, %v2411
    %v2980 = vpack.c.b16 %v2420, %v2416
    %v2981 = vpack.c.b16 %v2421, %v2417
    %v2982 = vpack.c.b16 %v2422, %v2418
    %v2983 = vpack.c.b16 %v2423, %v2419
    %v2984 = vpack.c.b16 %v2428, %v2424
    %v2985 = vpack.c.b16 %v2429, %v2425
    %v2986 = vpack.c.b16 %v2430, %v2426
    %v2987 = vpack.c.b16 %v2431, %v2427
    %v2988 = vpack.c.b16 %v2436, %v2432
    %v2989 = vpack.c.b16 %v2437, %v2433
    %v2990 = vpack.c.b16 %v2438, %v2434
    %v2991 = vpack.c.b16 %v2439, %v2435
    %v2992 = vpack.c.b16 %v2444, %v2440
    %v2993 = vpack.c.b16 %v2445, %v2441
    %v2994 = vpack.c.b16 %v2446, %v2442
    %v2995 = vpack.c.b16 %v2447, %v2443
    %v2996 = vpack.c.b16 %v2452, %v2448
    %v2997 = vpack.c.b16 %v2453, %v2449
    %v2998 = vpack.c.b16 %v2454, %v2450
    %v2999 = vpack.c.b16 %v2455, %v2451
    %v3000 = vpack.c.b16 %v2460, %v2456
    %v3001 = vpack.c.b16 %v2461, %v2457
    %v3002 = vpack.c.b16 %v2462, %v2458
    %v3003 = vpack.c.b16 %v2463, %v2459
    %v3004 = vpack.c.b16 %v2468, %v2464
    %v3005 = vpack.c.b16 %v2469, %v2465
    %v3006 = vpack.c.b16 %v2470, %v2466
    %v3007 = vpack.c.b16 %v2471, %v2467
    %v3008 = vpack.c.b16 %v2476, %v2472
    %v3009 = vpack.c.b16 %v2477, %v2473
    %v3010 = vpack.c.b16 %v2478, %v2474
    %v3011 = vpack.c.b16 %v2479, %v2475
    %v3012 = vpack.c.b16 %v2484, %v2480
    %v3013 = vpack.c.b16 %v2485, %v2481
    %v3014 = vpack.c.b16 %v2486, %v2482
    %v3015 = vpack.c.b16 %v2487, %v2483
    %v3016 = vpack.c.b16 %v2492, %v2488
    %v3017 = vpack.c.b16 %v2493, %v2489
    %v3018 = vpack.c.b16 %v2494, %v2490
    %v3019 = vpack.c.b16 %v2495, %v2491
    %v3020 = vpack.c.b16 %v2500, %v2496
    %v3021 = vpack.c.b16 %v2501, %v2497
    %v3022 = vpack.c.b16 %v2502, %v2498
    %v3023 = vpack.c.b16 %v2503, %v2499
    %v3024 = vpack.c.b16 %v2508, %v2504
    %v3025 = vpack.c.b16 %v2509, %v2505
    %v3026 = vpack.c.b16 %v2510, %v2506
    %v3027 = vpack.c.b16 %v2511, %v2507
    %v3028 = vpack.c.b16 %v2516, %v2512
    %v3029 = vpack.c.b16 %v2517, %v2513
    %v3030 = vpack.c.b16 %v2518, %v2514
    %v3031 = vpack.c.b16 %v2519, %v2515
    %3544 = vmatprep.subr.bf16.mxu0 %v2521
    %3545 = vmatpush1.bf16.msra.mxu0 %v2520
    %3546 = vmatprep.subr.bf16.mxu0 %v2525
    %3547 = vmatpush1.bf16.msra.mxu0 %v2524
    %3548 = vmatprep.subr.bf16.mxu0 %v2529
    %3549 = vmatpush1.bf16.msra.mxu0 %v2528
    %3550 = vmatprep.subr.bf16.mxu0 %v2533
    %3551 = vmatpush1.bf16.msra.mxu0 %v2532
    %3552 = vmatprep.subr.bf16.mxu0 %v2537
    %3553 = vmatpush1.bf16.msra.mxu0 %v2536
    %3554 = vmatprep.subr.bf16.mxu0 %v2541
    %3555 = vmatpush1.bf16.msra.mxu0 %v2540
    %3556 = vmatprep.subr.bf16.mxu0 %v2545
    %3557 = vmatpush1.bf16.msra.mxu0 %v2544
    %3558 = vmatprep.subr.bf16.mxu0 %v2549
    %3559 = vmatpush1.bf16.msra.mxu0 %v2548
    %3560 = vmatprep.subr.bf16.mxu0 %v2553
    %3561 = vmatpush1.bf16.msra.mxu0 %v2552
    %3562 = vmatprep.subr.bf16.mxu0 %v2557
    %3563 = vmatpush1.bf16.msra.mxu0 %v2556
    %3564 = vmatprep.subr.bf16.mxu0 %v2561
    %3565 = vmatpush1.bf16.msra.mxu0 %v2560
    %3566 = vmatprep.subr.bf16.mxu0 %v2565
    %3567 = vmatpush1.bf16.msra.mxu0 %v2564
    %3568 = vmatprep.subr.bf16.mxu0 %v2569
    %3569 = vmatpush1.bf16.msra.mxu0 %v2568
    %3570 = vmatprep.subr.bf16.mxu0 %v2573
    %3571 = vmatpush1.bf16.msra.mxu0 %v2572
    %3572 = vmatprep.subr.bf16.mxu0 %v2577
    %3573 = vmatpush1.bf16.msra.mxu0 %v2576
    %3574 = vmatprep.subr.bf16.mxu0 %v2581
    %3575 = vmatpush1.bf16.msra.mxu0 %v2580
    %3576 = vmatprep.mubr.bf16.mxu0 %v419
    %3577 = vmatmul.mubr.bf16.gmra.mrb[0].mxu0 %v418
    %v3578 = vpop.f32.mrb[0].mxu0
    %v3579 = vadd.f32 %v967, %v3578
    %v3580 = vpop.f32.mrb[0].mxu0
    %v3581 = vadd.f32 %v971, %v3580
    %v3582 = vpop.f32.mrb[0].mxu0
    %v3583 = vadd.f32 %v967, %v3582
    %v3584 = vpop.f32.mrb[0].mxu0
    %v3585 = vadd.f32 %v971, %v3584
    %3586 = vdwg.mxu0
    %3587 = vmatprep.subr.bf16.mxu0 %v2585
    %3588 = vmatpush1.bf16.msra.mxu0 %v2584
    %3589 = vmatprep.subr.bf16.mxu0 %v2589
    %3590 = vmatpush1.bf16.msra.mxu0 %v2588
    %3591 = vmatprep.subr.bf16.mxu0 %v2593
    %3592 = vmatpush1.bf16.msra.mxu0 %v2592
    %3593 = vmatprep.subr.bf16.mxu0 %v2597
    %3594 = vmatpush1.bf16.msra.mxu0 %v2596
    %3595 = vmatprep.subr.bf16.mxu0 %v2601
    %3596 = vmatpush1.bf16.msra.mxu0 %v2600
    %3597 = vmatprep.subr.bf16.mxu0 %v2605
    %3598 = vmatpush1.bf16.msra.mxu0 %v2604
    %3599 = vmatprep.subr.bf16.mxu0 %v2609
    %3600 = vmatpush1.bf16.msra.mxu0 %v2608
    %3601 = vmatprep.subr.bf16.mxu0 %v2613
    %3602 = vmatpush1.bf16.msra.mxu0 %v2612
    %3603 = vmatprep.subr.bf16.mxu0 %v2617
    %3604 = vmatpush1.bf16.msra.mxu0 %v2616
    %3605 = vmatprep.subr.bf16.mxu0 %v2621
    %3606 = vmatpush1.bf16.msra.mxu0 %v2620
    %3607 = vmatprep.subr.bf16.mxu0 %v2625
    %3608 = vmatpush1.bf16.msra.mxu0 %v2624
    %3609 = vmatprep.subr.bf16.mxu0 %v2629
    %3610 = vmatpush1.bf16.msra.mxu0 %v2628
    %3611 = vmatprep.subr.bf16.mxu0 %v2633
    %3612 = vmatpush1.bf16.msra.mxu0 %v2632
    %3613 = vmatprep.subr.bf16.mxu0 %v2637
    %3614 = vmatpush1.bf16.msra.mxu0 %v2636
    %3615 = vmatprep.subr.bf16.mxu0 %v2641
    %3616 = vmatpush1.bf16.msra.mxu0 %v2640
    %3617 = vmatprep.subr.bf16.mxu0 %v2645
    %3618 = vmatpush1.bf16.msra.mxu0 %v2644
    %3619 = vmatprep.mubr.bf16.mxu0 %v421
    %3620 = vmatmul.mubr.bf16.gmra.mrb[0].mxu0 %v420
    %v3621 = vpop.f32.mrb[0].mxu0
    %v3622 = vadd.f32 %v3579, %v3621
    %v3623 = vpop.f32.mrb[0].mxu0
    %v3624 = vadd.f32 %v3581, %v3623
    %v3625 = vpop.f32.mrb[0].mxu0
    %v3626 = vadd.f32 %v3583, %v3625
    %v3627 = vpop.f32.mrb[0].mxu0
    %v3628 = vadd.f32 %v3585, %v3627
    %3629 = vdwg.mxu0
    %3630 = vmatprep.subr.bf16.mxu0 %v2649
    %3631 = vmatpush1.bf16.msra.mxu0 %v2648
    %3632 = vmatprep.subr.bf16.mxu0 %v2653
    %3633 = vmatpush1.bf16.msra.mxu0 %v2652
    %3634 = vmatprep.subr.bf16.mxu0 %v2657
    %3635 = vmatpush1.bf16.msra.mxu0 %v2656
    %3636 = vmatprep.subr.bf16.mxu0 %v2661
    %3637 = vmatpush1.bf16.msra.mxu0 %v2660
    %3638 = vmatprep.subr.bf16.mxu0 %v2665
    %3639 = vmatpush1.bf16.msra.mxu0 %v2664
    %3640 = vmatprep.subr.bf16.mxu0 %v2669
    %3641 = vmatpush1.bf16.msra.mxu0 %v2668
    %3642 = vmatprep.subr.bf16.mxu0 %v2673
    %3643 = vmatpush1.bf16.msra.mxu0 %v2672
    %3644 = vmatprep.subr.bf16.mxu0 %v2677
    %3645 = vmatpush1.bf16.msra.mxu0 %v2676
    %3646 = vmatprep.subr.bf16.mxu0 %v2681
    %3647 = vmatpush1.bf16.msra.mxu0 %v2680
    %3648 = vmatprep.subr.bf16.mxu0 %v2685
    %3649 = vmatpush1.bf16.msra.mxu0 %v2684
    %3650 = vmatprep.subr.bf16.mxu0 %v2689
    %3651 = vmatpush1.bf16.msra.mxu0 %v2688
    %3652 = vmatprep.subr.bf16.mxu0 %v2693
    %3653 = vmatpush1.bf16.msra.mxu0 %v2692
    %3654 = vmatprep.subr.bf16.mxu0 %v2697
    %3655 = vmatpush1.bf16.msra.mxu0 %v2696
    %3656 = vmatprep.subr.bf16.mxu0 %v2701
    %3657 = vmatpush1.bf16.msra.mxu0 %v2700
    %3658 = vmatprep.subr.bf16.mxu0 %v2705
    %3659 = vmatpush1.bf16.msra.mxu0 %v2704
    %3660 = vmatprep.subr.bf16.mxu0 %v2709
    %3661 = vmatpush1.bf16.msra.mxu0 %v2708
    %3662 = vmatprep.mubr.bf16.mxu0 %v423
    %3663 = vmatmul.mubr.bf16.gmra.mrb[0].mxu0 %v422
    %v3664 = vpop.f32.mrb[0].mxu0
    %v3665 = vadd.f32 %v3622, %v3664
    %v3666 = vpop.f32.mrb[0].mxu0
    %v3667 = vadd.f32 %v3624, %v3666
    %v3668 = vpop.f32.mrb[0].mxu0
    %v3669 = vadd.f32 %v3626, %v3668
    %v3670 = vpop.f32.mrb[0].mxu0
    %v3671 = vadd.f32 %v3628, %v3670
    %3672 = vdwg.mxu0
    %3673 = vmatprep.subr.bf16.mxu0 %v2713
    %3674 = vmatpush1.bf16.msra.mxu0 %v2712
    %3675 = vmatprep.subr.bf16.mxu0 %v2717
    %3676 = vmatpush1.bf16.msra.mxu0 %v2716
    %3677 = vmatprep.subr.bf16.mxu0 %v2721
    %3678 = vmatpush1.bf16.msra.mxu0 %v2720
    %3679 = vmatprep.subr.bf16.mxu0 %v2725
    %3680 = vmatpush1.bf16.msra.mxu0 %v2724
    %3681 = vmatprep.subr.bf16.mxu0 %v2729
    %3682 = vmatpush1.bf16.msra.mxu0 %v2728
    %3683 = vmatprep.subr.bf16.mxu0 %v2733
    %3684 = vmatpush1.bf16.msra.mxu0 %v2732
    %3685 = vmatprep.subr.bf16.mxu0 %v2737
    %3686 = vmatpush1.bf16.msra.mxu0 %v2736
    %3687 = vmatprep.subr.bf16.mxu0 %v2741
    %3688 = vmatpush1.bf16.msra.mxu0 %v2740
    %3689 = vmatprep.subr.bf16.mxu0 %v2745
    %3690 = vmatpush1.bf16.msra.mxu0 %v2744
    %3691 = vmatprep.subr.bf16.mxu0 %v2749
    %3692 = vmatpush1.bf16.msra.mxu0 %v2748
    %3693 = vmatprep.subr.bf16.mxu0 %v2753
    %3694 = vmatpush1.bf16.msra.mxu0 %v2752
    %3695 = vmatprep.subr.bf16.mxu0 %v2757
    %3696 = vmatpush1.bf16.msra.mxu0 %v2756
    %3697 = vmatprep.subr.bf16.mxu0 %v2761
    %3698 = vmatpush1.bf16.msra.mxu0 %v2760
    %3699 = vmatprep.subr.bf16.mxu0 %v2765
    %3700 = vmatpush1.bf16.msra.mxu0 %v2764
    %3701 = vmatprep.subr.bf16.mxu0 %v2769
    %3702 = vmatpush1.bf16.msra.mxu0 %v2768
    %3703 = vmatprep.subr.bf16.mxu0 %v2773
    %3704 = vmatpush1.bf16.msra.mxu0 %v2772
    %3705 = vmatprep.mubr.bf16.mxu0 %v425
    %3706 = vmatmul.mubr.bf16.gmra.mrb[0].mxu0 %v424
    %v3707 = vpop.f32.mrb[0].mxu0
    %v3708 = vadd.f32 %v3665, %v3707
    %v3709 = vpop.f32.mrb[0].mxu0
    %v3710 = vadd.f32 %v3667, %v3709
    %v3711 = vpop.f32.mrb[0].mxu0
    %v3712 = vadd.f32 %v3669, %v3711
    %v3713 = vpop.f32.mrb[0].mxu0
    %v3714 = vadd.f32 %v3671, %v3713
    %3715 = vdwg.mxu0
    %3716 = vmatprep.subr.bf16.mxu0 %v2777
    %3717 = vmatpush1.bf16.msra.mxu0 %v2776
    %3718 = vmatprep.subr.bf16.mxu0 %v2781
    %3719 = vmatpush1.bf16.msra.mxu0 %v2780
    %3720 = vmatprep.subr.bf16.mxu0 %v2785
    %3721 = vmatpush1.bf16.msra.mxu0 %v2784
    %3722 = vmatprep.subr.bf16.mxu0 %v2789
    %3723 = vmatpush1.bf16.msra.mxu0 %v2788
    %3724 = vmatprep.subr.bf16.mxu0 %v2793
    %3725 = vmatpush1.bf16.msra.mxu0 %v2792
    %3726 = vmatprep.subr.bf16.mxu0 %v2797
    %3727 = vmatpush1.bf16.msra.mxu0 %v2796
    %3728 = vmatprep.subr.bf16.mxu0 %v2801
    %3729 = vmatpush1.bf16.msra.mxu0 %v2800
    %3730 = vmatprep.subr.bf16.mxu0 %v2805
    %3731 = vmatpush1.bf16.msra.mxu0 %v2804
    %3732 = vmatprep.subr.bf16.mxu0 %v2809
    %3733 = vmatpush1.bf16.msra.mxu0 %v2808
    %3734 = vmatprep.subr.bf16.mxu0 %v2813
    %3735 = vmatpush1.bf16.msra.mxu0 %v2812
    %3736 = vmatprep.subr.bf16.mxu0 %v2817
    %3737 = vmatpush1.bf16.msra.mxu0 %v2816
    %3738 = vmatprep.subr.bf16.mxu0 %v2821
    %3739 = vmatpush1.bf16.msra.mxu0 %v2820
    %3740 = vmatprep.subr.bf16.mxu0 %v2825
    %3741 = vmatpush1.bf16.msra.mxu0 %v2824
    %3742 = vmatprep.subr.bf16.mxu0 %v2829
    %3743 = vmatpush1.bf16.msra.mxu0 %v2828
    %3744 = vmatprep.subr.bf16.mxu0 %v2833
    %3745 = vmatpush1.bf16.msra.mxu0 %v2832
    %3746 = vmatprep.subr.bf16.mxu0 %v2837
    %3747 = vmatpush1.bf16.msra.mxu0 %v2836
    %3748 = vmatprep.mubr.bf16.mxu0 %v431
    %3749 = vmatmul.mubr.bf16.gmra.mrb[0].mxu0 %v430
    %v3750 = vpop.f32.mrb[0].mxu0
    %v3751 = vadd.f32 %v3708, %v3750
    %v3752 = vpop.f32.mrb[0].mxu0
    %v3753 = vadd.f32 %v3710, %v3752
    %v3754 = vpop.f32.mrb[0].mxu0
    %v3755 = vadd.f32 %v3712, %v3754
    %v3756 = vpop.f32.mrb[0].mxu0
    %v3757 = vadd.f32 %v3714, %v3756
    %3758 = vdwg.mxu0
    %3759 = vmatprep.subr.bf16.mxu0 %v2841
    %3760 = vmatpush1.bf16.msra.mxu0 %v2840
    %3761 = vmatprep.subr.bf16.mxu0 %v2845
    %3762 = vmatpush1.bf16.msra.mxu0 %v2844
    %3763 = vmatprep.subr.bf16.mxu0 %v2849
    %3764 = vmatpush1.bf16.msra.mxu0 %v2848
    %3765 = vmatprep.subr.bf16.mxu0 %v2853
    %3766 = vmatpush1.bf16.msra.mxu0 %v2852
    %3767 = vmatprep.subr.bf16.mxu0 %v2857
    %3768 = vmatpush1.bf16.msra.mxu0 %v2856
    %3769 = vmatprep.subr.bf16.mxu0 %v2861
    %3770 = vmatpush1.bf16.msra.mxu0 %v2860
    %3771 = vmatprep.subr.bf16.mxu0 %v2865
    %3772 = vmatpush1.bf16.msra.mxu0 %v2864
    %3773 = vmatprep.subr.bf16.mxu0 %v2869
    %3774 = vmatpush1.bf16.msra.mxu0 %v2868
    %3775 = vmatprep.subr.bf16.mxu0 %v2873
    %3776 = vmatpush1.bf16.msra.mxu0 %v2872
    %3777 = vmatprep.subr.bf16.mxu0 %v2877
    %3778 = vmatpush1.bf16.msra.mxu0 %v2876
    %3779 = vmatprep.subr.bf16.mxu0 %v2881
    %3780 = vmatpush1.bf16.msra.mxu0 %v2880
    %3781 = vmatprep.subr.bf16.mxu0 %v2885
    %3782 = vmatpush1.bf16.msra.mxu0 %v2884
    %3783 = vmatprep.subr.bf16.mxu0 %v2889
    %3784 = vmatpush1.bf16.msra.mxu0 %v2888
    %3785 = vmatprep.subr.bf16.mxu0 %v2893
    %3786 = vmatpush1.bf16.msra.mxu0 %v2892
    %3787 = vmatprep.subr.bf16.mxu0 %v2897
    %3788 = vmatpush1.bf16.msra.mxu0 %v2896
    %3789 = vmatprep.subr.bf16.mxu0 %v2901
    %3790 = vmatpush1.bf16.msra.mxu0 %v2900
    %3791 = vmatprep.mubr.bf16.mxu0 %v433
    %3792 = vmatmul.mubr.bf16.gmra.mrb[0].mxu0 %v432
    %v3793 = vpop.f32.mrb[0].mxu0
    %v3794 = vadd.f32 %v3751, %v3793
    %v3795 = vpop.f32.mrb[0].mxu0
    %v3796 = vadd.f32 %v3753, %v3795
    %v3797 = vpop.f32.mrb[0].mxu0
    %v3798 = vadd.f32 %v3755, %v3797
    %v3799 = vpop.f32.mrb[0].mxu0
    %v3800 = vadd.f32 %v3757, %v3799
    %3801 = vdwg.mxu0
    %3802 = vmatprep.subr.bf16.mxu0 %v2905
    %3803 = vmatpush1.bf16.msra.mxu0 %v2904
    %3804 = vmatprep.subr.bf16.mxu0 %v2909
    %3805 = vmatpush1.bf16.msra.mxu0 %v2908
    %3806 = vmatprep.subr.bf16.mxu0 %v2913
    %3807 = vmatpush1.bf16.msra.mxu0 %v2912
    %3808 = vmatprep.subr.bf16.mxu0 %v2917
    %3809 = vmatpush1.bf16.msra.mxu0 %v2916
    %3810 = vmatprep.subr.bf16.mxu0 %v2921
    %3811 = vmatpush1.bf16.msra.mxu0 %v2920
    %3812 = vmatprep.subr.bf16.mxu0 %v2925
    %3813 = vmatpush1.bf16.msra.mxu0 %v2924
    %3814 = vmatprep.subr.bf16.mxu0 %v2929
    %3815 = vmatpush1.bf16.msra.mxu0 %v2928
    %3816 = vmatprep.subr.bf16.mxu0 %v2933
    %3817 = vmatpush1.bf16.msra.mxu0 %v2932
    %3818 = vmatprep.subr.bf16.mxu0 %v2937
    %3819 = vmatpush1.bf16.msra.mxu0 %v2936
    %3820 = vmatprep.subr.bf16.mxu0 %v2941
    %3821 = vmatpush1.bf16.msra.mxu0 %v2940
    %3822 = vmatprep.subr.bf16.mxu0 %v2945
    %3823 = vmatpush1.bf16.msra.mxu0 %v2944
    %3824 = vmatprep.subr.bf16.mxu0 %v2949
    %3825 = vmatpush1.bf16.msra.mxu0 %v2948
    %3826 = vmatprep.subr.bf16.mxu0 %v2953
    %3827 = vmatpush1.bf16.msra.mxu0 %v2952
    %3828 = vmatprep.subr.bf16.mxu0 %v2957
    %3829 = vmatpush1.bf16.msra.mxu0 %v2956
    %3830 = vmatprep.subr.bf16.mxu0 %v2961
    %3831 = vmatpush1.bf16.msra.mxu0 %v2960
    %3832 = vmatprep.subr.bf16.mxu0 %v2965
    %3833 = vmatpush1.bf16.msra.mxu0 %v2964
    %3834 = vmatprep.mubr.bf16.mxu0 %v443
    %3835 = vmatmul.mubr.bf16.gmra.mrb[0].mxu0 %v442
    %v3836 = vpop.f32.mrb[0].mxu0
    %v3837 = vadd.f32 %v3794, %v3836
    %v3838 = vpop.f32.mrb[0].mxu0
    %v3839 = vadd.f32 %v3796, %v3838
    %v3840 = vpop.f32.mrb[0].mxu0
    %v3841 = vadd.f32 %v3798, %v3840
    %v3842 = vpop.f32.mrb[0].mxu0
    %v3843 = vadd.f32 %v3800, %v3842
    %3844 = vdwg.mxu0
    %3845 = vmatprep.subr.bf16.mxu0 %v2969
    %3846 = vmatpush1.bf16.msra.mxu0 %v2968
    %3847 = vmatprep.subr.bf16.mxu0 %v2973
    %3848 = vmatpush1.bf16.msra.mxu0 %v2972
    %3849 = vmatprep.subr.bf16.mxu0 %v2977
    %3850 = vmatpush1.bf16.msra.mxu0 %v2976
    %3851 = vmatprep.subr.bf16.mxu0 %v2981
    %3852 = vmatpush1.bf16.msra.mxu0 %v2980
    %3853 = vmatprep.subr.bf16.mxu0 %v2985
    %3854 = vmatpush1.bf16.msra.mxu0 %v2984
    %3855 = vmatprep.subr.bf16.mxu0 %v2989
    %3856 = vmatpush1.bf16.msra.mxu0 %v2988
    %3857 = vmatprep.subr.bf16.mxu0 %v2993
    %3858 = vmatpush1.bf16.msra.mxu0 %v2992
    %3859 = vmatprep.subr.bf16.mxu0 %v2997
    %3860 = vmatpush1.bf16.msra.mxu0 %v2996
    %3861 = vmatprep.subr.bf16.mxu0 %v3001
    %3862 = vmatpush1.bf16.msra.mxu0 %v3000
    %3863 = vmatprep.subr.bf16.mxu0 %v3005
    %3864 = vmatpush1.bf16.msra.mxu0 %v3004
    %3865 = vmatprep.subr.bf16.mxu0 %v3009
    %3866 = vmatpush1.bf16.msra.mxu0 %v3008
    %3867 = vmatprep.subr.bf16.mxu0 %v3013
    %3868 = vmatpush1.bf16.msra.mxu0 %v3012
    %3869 = vmatprep.subr.bf16.mxu0 %v3017
    %3870 = vmatpush1.bf16.msra.mxu0 %v3016
    %3871 = vmatprep.subr.bf16.mxu0 %v3021
    %3872 = vmatpush1.bf16.msra.mxu0 %v3020
    %3873 = vmatprep.subr.bf16.mxu0 %v3025
    %3874 = vmatpush1.bf16.msra.mxu0 %v3024
    %3875 = vmatprep.subr.bf16.mxu0 %v3029
    %3876 = vmatpush1.bf16.msra.mxu0 %v3028
    %3877 = vmatprep.mubr.bf16.mxu0 %v445
    %3878 = vmatmul.mubr.bf16.gmra.mrb[0].mxu0 %v444
    %v3879 = vpop.f32.mrb[0].mxu0
    %v3880 = vadd.f32 %v3837, %v3879
    %v3881 = vpop.f32.mrb[0].mxu0
    %v3882 = vadd.f32 %v3839, %v3881
    %v3883 = vpop.f32.mrb[0].mxu0
    %v3884 = vadd.f32 %v3841, %v3883
    %v3885 = vpop.f32.mrb[0].mxu0
    %v3886 = vadd.f32 %v3843, %v3885
    %3887 = vdwg.mxu0
    %3888 = vmatprep.subr.bf16.mxu0 %v2523
    %3889 = vmatpush1.bf16.msra.mxu0 %v2522
    %3890 = vmatprep.subr.bf16.mxu0 %v2527
    %3891 = vmatpush1.bf16.msra.mxu0 %v2526
    %3892 = vmatprep.subr.bf16.mxu0 %v2531
    %3893 = vmatpush1.bf16.msra.mxu0 %v2530
    %3894 = vmatprep.subr.bf16.mxu0 %v2535
    %3895 = vmatpush1.bf16.msra.mxu0 %v2534
    %3896 = vmatprep.subr.bf16.mxu0 %v2539
    %3897 = vmatpush1.bf16.msra.mxu0 %v2538
    %3898 = vmatprep.subr.bf16.mxu0 %v2543
    %3899 = vmatpush1.bf16.msra.mxu0 %v2542
    %3900 = vmatprep.subr.bf16.mxu0 %v2547
    %3901 = vmatpush1.bf16.msra.mxu0 %v2546
    %3902 = vmatprep.subr.bf16.mxu0 %v2551
    %3903 = vmatpush1.bf16.msra.mxu0 %v2550
    %3904 = vmatprep.subr.bf16.mxu0 %v2555
    %3905 = vmatpush1.bf16.msra.mxu0 %v2554
    %3906 = vmatprep.subr.bf16.mxu0 %v2559
    %3907 = vmatpush1.bf16.msra.mxu0 %v2558
    %3908 = vmatprep.subr.bf16.mxu0 %v2563
    %3909 = vmatpush1.bf16.msra.mxu0 %v2562
    %3910 = vmatprep.subr.bf16.mxu0 %v2567
    %3911 = vmatpush1.bf16.msra.mxu0 %v2566
    %3912 = vmatprep.subr.bf16.mxu0 %v2571
    %3913 = vmatpush1.bf16.msra.mxu0 %v2570
    %3914 = vmatprep.subr.bf16.mxu0 %v2575
    %3915 = vmatpush1.bf16.msra.mxu0 %v2574
    %3916 = vmatprep.subr.bf16.mxu0 %v2579
    %3917 = vmatpush1.bf16.msra.mxu0 %v2578
    %3918 = vmatprep.subr.bf16.mxu0 %v2583
    %3919 = vmatpush1.bf16.msra.mxu0 %v2582
    %3920 = vmatprep.mubr.bf16.mxu0 %v419
    %3921 = vmatmul.mubr.bf16.gmra.mrb[0].mxu0 %v418
    %v3922 = vpop.f32.mrb[0].mxu0
    %v3923 = vadd.f32 %v975, %v3922
    %v3924 = vpop.f32.mrb[0].mxu0
    %v3925 = vadd.f32 %v979, %v3924
    %v3926 = vpop.f32.mrb[0].mxu0
    %v3927 = vadd.f32 %v975, %v3926
    %v3928 = vpop.f32.mrb[0].mxu0
    %v3929 = vadd.f32 %v979, %v3928
    %3930 = vdwg.mxu0
    %3931 = vmatprep.subr.bf16.mxu0 %v2587
    %3932 = vmatpush1.bf16.msra.mxu0 %v2586
    %3933 = vmatprep.subr.bf16.mxu0 %v2591
    %3934 = vmatpush1.bf16.msra.mxu0 %v2590
    %3935 = vmatprep.subr.bf16.mxu0 %v2595
    %3936 = vmatpush1.bf16.msra.mxu0 %v2594
    %3937 = vmatprep.subr.bf16.mxu0 %v2599
    %3938 = vmatpush1.bf16.msra.mxu0 %v2598
    %3939 = vmatprep.subr.bf16.mxu0 %v2603
    %3940 = vmatpush1.bf16.msra.mxu0 %v2602
    %3941 = vmatprep.subr.bf16.mxu0 %v2607
    %3942 = vmatpush1.bf16.msra.mxu0 %v2606
    %3943 = vmatprep.subr.bf16.mxu0 %v2611
    %3944 = vmatpush1.bf16.msra.mxu0 %v2610
    %3945 = vmatprep.subr.bf16.mxu0 %v2615
    %3946 = vmatpush1.bf16.msra.mxu0 %v2614
    %3947 = vmatprep.subr.bf16.mxu0 %v2619
    %3948 = vmatpush1.bf16.msra.mxu0 %v2618
    %3949 = vmatprep.subr.bf16.mxu0 %v2623
    %3950 = vmatpush1.bf16.msra.mxu0 %v2622
    %3951 = vmatprep.subr.bf16.mxu0 %v2627
    %3952 = vmatpush1.bf16.msra.mxu0 %v2626
    %3953 = vmatprep.subr.bf16.mxu0 %v2631
    %3954 = vmatpush1.bf16.msra.mxu0 %v2630
    %3955 = vmatprep.subr.bf16.mxu0 %v2635
    %3956 = vmatpush1.bf16.msra.mxu0 %v2634
    %3957 = vmatprep.subr.bf16.mxu0 %v2639
    %3958 = vmatpush1.bf16.msra.mxu0 %v2638
    %3959 = vmatprep.subr.bf16.mxu0 %v2643
    %3960 = vmatpush1.bf16.msra.mxu0 %v2642
    %3961 = vmatprep.subr.bf16.mxu0 %v2647
    %3962 = vmatpush1.bf16.msra.mxu0 %v2646
    %3963 = vmatprep.mubr.bf16.mxu0 %v421
    %3964 = vmatmul.mubr.bf16.gmra.mrb[0].mxu0 %v420
    %v3965 = vpop.f32.mrb[0].mxu0
    %v3966 = vadd.f32 %v3923, %v3965
    %v3967 = vpop.f32.mrb[0].mxu0
    %v3968 = vadd.f32 %v3925, %v3967
    %v3969 = vpop.f32.mrb[0].mxu0
    %v3970 = vadd.f32 %v3927, %v3969
    %v3971 = vpop.f32.mrb[0].mxu0
    %v3972 = vadd.f32 %v3929, %v3971
    %3973 = vdwg.mxu0
    %3974 = vmatprep.subr.bf16.mxu0 %v2651
    %3975 = vmatpush1.bf16.msra.mxu0 %v2650
    %3976 = vmatprep.subr.bf16.mxu0 %v2655
    %3977 = vmatpush1.bf16.msra.mxu0 %v2654
    %3978 = vmatprep.subr.bf16.mxu0 %v2659
    %3979 = vmatpush1.bf16.msra.mxu0 %v2658
    %3980 = vmatprep.subr.bf16.mxu0 %v2663
    %3981 = vmatpush1.bf16.msra.mxu0 %v2662
    %3982 = vmatprep.subr.bf16.mxu0 %v2667
    %3983 = vmatpush1.bf16.msra.mxu0 %v2666
    %3984 = vmatprep.subr.bf16.mxu0 %v2671
    %3985 = vmatpush1.bf16.msra.mxu0 %v2670
    %3986 = vmatprep.subr.bf16.mxu0 %v2675
    %3987 = vmatpush1.bf16.msra.mxu0 %v2674
    %3988 = vmatprep.subr.bf16.mxu0 %v2679
    %3989 = vmatpush1.bf16.msra.mxu0 %v2678
    %3990 = vmatprep.subr.bf16.mxu0 %v2683
    %3991 = vmatpush1.bf16.msra.mxu0 %v2682
    %3992 = vmatprep.subr.bf16.mxu0 %v2687
    %3993 = vmatpush1.bf16.msra.mxu0 %v2686
    %3994 = vmatprep.subr.bf16.mxu0 %v2691
    %3995 = vmatpush1.bf16.msra.mxu0 %v2690
    %3996 = vmatprep.subr.bf16.mxu0 %v2695
    %3997 = vmatpush1.bf16.msra.mxu0 %v2694
    %3998 = vmatprep.subr.bf16.mxu0 %v2699
    %3999 = vmatpush1.bf16.msra.mxu0 %v2698
    %4000 = vmatprep.subr.bf16.mxu0 %v2703
    %4001 = vmatpush1.bf16.msra.mxu0 %v2702
    %4002 = vmatprep.subr.bf16.mxu0 %v2707
    %4003 = vmatpush1.bf16.msra.mxu0 %v2706
    %4004 = vmatprep.subr.bf16.mxu0 %v2711
    %4005 = vmatpush1.bf16.msra.mxu0 %v2710
    %4006 = vmatprep.mubr.bf16.mxu0 %v423
    %4007 = vmatmul.mubr.bf16.gmra.mrb[0].mxu0 %v422
    %v4008 = vpop.f32.mrb[0].mxu0
    %v4009 = vadd.f32 %v3966, %v4008
    %v4010 = vpop.f32.mrb[0].mxu0
    %v4011 = vadd.f32 %v3968, %v4010
    %v4012 = vpop.f32.mrb[0].mxu0
    %v4013 = vadd.f32 %v3970, %v4012
    %v4014 = vpop.f32.mrb[0].mxu0
    %v4015 = vadd.f32 %v3972, %v4014
    %4016 = vdwg.mxu0
    %4017 = vmatprep.subr.bf16.mxu0 %v2715
    %4018 = vmatpush1.bf16.msra.mxu0 %v2714
    %4019 = vmatprep.subr.bf16.mxu0 %v2719
    %4020 = vmatpush1.bf16.msra.mxu0 %v2718
    %4021 = vmatprep.subr.bf16.mxu0 %v2723
    %4022 = vmatpush1.bf16.msra.mxu0 %v2722
    %4023 = vmatprep.subr.bf16.mxu0 %v2727
    %4024 = vmatpush1.bf16.msra.mxu0 %v2726
    %4025 = vmatprep.subr.bf16.mxu0 %v2731
    %4026 = vmatpush1.bf16.msra.mxu0 %v2730
    %4027 = vmatprep.subr.bf16.mxu0 %v2735
    %4028 = vmatpush1.bf16.msra.mxu0 %v2734
    %4029 = vmatprep.subr.bf16.mxu0 %v2739
    %4030 = vmatpush1.bf16.msra.mxu0 %v2738
    %4031 = vmatprep.subr.bf16.mxu0 %v2743
    %4032 = vmatpush1.bf16.msra.mxu0 %v2742
    %4033 = vmatprep.subr.bf16.mxu0 %v2747
    %4034 = vmatpush1.bf16.msra.mxu0 %v2746
    %4035 = vmatprep.subr.bf16.mxu0 %v2751
    %4036 = vmatpush1.bf16.msra.mxu0 %v2750
    %4037 = vmatprep.subr.bf16.mxu0 %v2755
    %4038 = vmatpush1.bf16.msra.mxu0 %v2754
    %4039 = vmatprep.subr.bf16.mxu0 %v2759
    %4040 = vmatpush1.bf16.msra.mxu0 %v2758
    %4041 = vmatprep.subr.bf16.mxu0 %v2763
    %4042 = vmatpush1.bf16.msra.mxu0 %v2762
    %4043 = vmatprep.subr.bf16.mxu0 %v2767
    %4044 = vmatpush1.bf16.msra.mxu0 %v2766
    %4045 = vmatprep.subr.bf16.mxu0 %v2771
    %4046 = vmatpush1.bf16.msra.mxu0 %v2770
    %4047 = vmatprep.subr.bf16.mxu0 %v2775
    %4048 = vmatpush1.bf16.msra.mxu0 %v2774
    %4049 = vmatprep.mubr.bf16.mxu0 %v425
    %4050 = vmatmul.mubr.bf16.gmra.mrb[0].mxu0 %v424
    %v4051 = vpop.f32.mrb[0].mxu0
    %v4052 = vadd.f32 %v4009, %v4051
    %v4053 = vpop.f32.mrb[0].mxu0
    %v4054 = vadd.f32 %v4011, %v4053
    %v4055 = vpop.f32.mrb[0].mxu0
    %v4056 = vadd.f32 %v4013, %v4055
    %v4057 = vpop.f32.mrb[0].mxu0
    %v4058 = vadd.f32 %v4015, %v4057
    %4059 = vdwg.mxu0
    %4060 = vmatprep.subr.bf16.mxu0 %v2779
    %4061 = vmatpush1.bf16.msra.mxu0 %v2778
    %4062 = vmatprep.subr.bf16.mxu0 %v2783
    %4063 = vmatpush1.bf16.msra.mxu0 %v2782
    %4064 = vmatprep.subr.bf16.mxu0 %v2787
    %4065 = vmatpush1.bf16.msra.mxu0 %v2786
    %4066 = vmatprep.subr.bf16.mxu0 %v2791
    %4067 = vmatpush1.bf16.msra.mxu0 %v2790
    %4068 = vmatprep.subr.bf16.mxu0 %v2795
    %4069 = vmatpush1.bf16.msra.mxu0 %v2794
    %4070 = vmatprep.subr.bf16.mxu0 %v2799
    %4071 = vmatpush1.bf16.msra.mxu0 %v2798
    %4072 = vmatprep.subr.bf16.mxu0 %v2803
    %4073 = vmatpush1.bf16.msra.mxu0 %v2802
    %4074 = vmatprep.subr.bf16.mxu0 %v2807
    %4075 = vmatpush1.bf16.msra.mxu0 %v2806
    %4076 = vmatprep.subr.bf16.mxu0 %v2811
    %4077 = vmatpush1.bf16.msra.mxu0 %v2810
    %4078 = vmatprep.subr.bf16.mxu0 %v2815
    %4079 = vmatpush1.bf16.msra.mxu0 %v2814
    %4080 = vmatprep.subr.bf16.mxu0 %v2819
    %4081 = vmatpush1.bf16.msra.mxu0 %v2818
    %4082 = vmatprep.subr.bf16.mxu0 %v2823
    %4083 = vmatpush1.bf16.msra.mxu0 %v2822
    %4084 = vmatprep.subr.bf16.mxu0 %v2827
    %4085 = vmatpush1.bf16.msra.mxu0 %v2826
    %4086 = vmatprep.subr.bf16.mxu0 %v2831
    %4087 = vmatpush1.bf16.msra.mxu0 %v2830
    %4088 = vmatprep.subr.bf16.mxu0 %v2835
    %4089 = vmatpush1.bf16.msra.mxu0 %v2834
    %4090 = vmatprep.subr.bf16.mxu0 %v2839
    %4091 = vmatpush1.bf16.msra.mxu0 %v2838
    %4092 = vmatprep.mubr.bf16.mxu0 %v431
    %4093 = vmatmul.mubr.bf16.gmra.mrb[0].mxu0 %v430
    %v4094 = vpop.f32.mrb[0].mxu0
    %v4095 = vadd.f32 %v4052, %v4094
    %v4096 = vpop.f32.mrb[0].mxu0
    %v4097 = vadd.f32 %v4054, %v4096
    %v4098 = vpop.f32.mrb[0].mxu0
    %v4099 = vadd.f32 %v4056, %v4098
    %v4100 = vpop.f32.mrb[0].mxu0
    %v4101 = vadd.f32 %v4058, %v4100
    %4102 = vdwg.mxu0
    %4103 = vmatprep.subr.bf16.mxu0 %v2843
    %4104 = vmatpush1.bf16.msra.mxu0 %v2842
    %4105 = vmatprep.subr.bf16.mxu0 %v2847
    %4106 = vmatpush1.bf16.msra.mxu0 %v2846
    %4107 = vmatprep.subr.bf16.mxu0 %v2851
    %4108 = vmatpush1.bf16.msra.mxu0 %v2850
    %4109 = vmatprep.subr.bf16.mxu0 %v2855
    %4110 = vmatpush1.bf16.msra.mxu0 %v2854
    %4111 = vmatprep.subr.bf16.mxu0 %v2859
    %4112 = vmatpush1.bf16.msra.mxu0 %v2858
    %4113 = vmatprep.subr.bf16.mxu0 %v2863
    %4114 = vmatpush1.bf16.msra.mxu0 %v2862
    %4115 = vmatprep.subr.bf16.mxu0 %v2867
    %4116 = vmatpush1.bf16.msra.mxu0 %v2866
    %4117 = vmatprep.subr.bf16.mxu0 %v2871
    %4118 = vmatpush1.bf16.msra.mxu0 %v2870
    %4119 = vmatprep.subr.bf16.mxu0 %v2875
    %4120 = vmatpush1.bf16.msra.mxu0 %v2874
    %4121 = vmatprep.subr.bf16.mxu0 %v2879
    %4122 = vmatpush1.bf16.msra.mxu0 %v2878
    %4123 = vmatprep.subr.bf16.mxu0 %v2883
    %4124 = vmatpush1.bf16.msra.mxu0 %v2882
    %4125 = vmatprep.subr.bf16.mxu0 %v2887
    %4126 = vmatpush1.bf16.msra.mxu0 %v2886
    %4127 = vmatprep.subr.bf16.mxu0 %v2891
    %4128 = vmatpush1.bf16.msra.mxu0 %v2890
    %4129 = vmatprep.subr.bf16.mxu0 %v2895
    %4130 = vmatpush1.bf16.msra.mxu0 %v2894
    %4131 = vmatprep.subr.bf16.mxu0 %v2899
    %4132 = vmatpush1.bf16.msra.mxu0 %v2898
    %4133 = vmatprep.subr.bf16.mxu0 %v2903
    %4134 = vmatpush1.bf16.msra.mxu0 %v2902
    %4135 = vmatprep.mubr.bf16.mxu0 %v433
    %4136 = vmatmul.mubr.bf16.gmra.mrb[0].mxu0 %v432
    %v4137 = vpop.f32.mrb[0].mxu0
    %v4138 = vadd.f32 %v4095, %v4137
    %v4139 = vpop.f32.mrb[0].mxu0
    %v4140 = vadd.f32 %v4097, %v4139
    %v4141 = vpop.f32.mrb[0].mxu0
    %v4142 = vadd.f32 %v4099, %v4141
    %v4143 = vpop.f32.mrb[0].mxu0
    %v4144 = vadd.f32 %v4101, %v4143
    %4145 = vdwg.mxu0
    %4146 = vmatprep.subr.bf16.mxu0 %v2907
    %4147 = vmatpush1.bf16.msra.mxu0 %v2906
    %4148 = vmatprep.subr.bf16.mxu0 %v2911
    %4149 = vmatpush1.bf16.msra.mxu0 %v2910
    %4150 = vmatprep.subr.bf16.mxu0 %v2915
    %4151 = vmatpush1.bf16.msra.mxu0 %v2914
    %4152 = vmatprep.subr.bf16.mxu0 %v2919
    %4153 = vmatpush1.bf16.msra.mxu0 %v2918
    %4154 = vmatprep.subr.bf16.mxu0 %v2923
    %4155 = vmatpush1.bf16.msra.mxu0 %v2922
    %4156 = vmatprep.subr.bf16.mxu0 %v2927
    %4157 = vmatpush1.bf16.msra.mxu0 %v2926
    %4158 = vmatprep.subr.bf16.mxu0 %v2931
    %4159 = vmatpush1.bf16.msra.mxu0 %v2930
    %4160 = vmatprep.subr.bf16.mxu0 %v2935
    %4161 = vmatpush1.bf16.msra.mxu0 %v2934
    %4162 = vmatprep.subr.bf16.mxu0 %v2939
    %4163 = vmatpush1.bf16.msra.mxu0 %v2938
    %4164 = vmatprep.subr.bf16.mxu0 %v2943
    %4165 = vmatpush1.bf16.msra.mxu0 %v2942
    %4166 = vmatprep.subr.bf16.mxu0 %v2947
    %4167 = vmatpush1.bf16.msra.mxu0 %v2946
    %4168 = vmatprep.subr.bf16.mxu0 %v2951
    %4169 = vmatpush1.bf16.msra.mxu0 %v2950
    %4170 = vmatprep.subr.bf16.mxu0 %v2955
    %4171 = vmatpush1.bf16.msra.mxu0 %v2954
    %4172 = vmatprep.subr.bf16.mxu0 %v2959
    %4173 = vmatpush1.bf16.msra.mxu0 %v2958
    %4174 = vmatprep.subr.bf16.mxu0 %v2963
    %4175 = vmatpush1.bf16.msra.mxu0 %v2962
    %4176 = vmatprep.subr.bf16.mxu0 %v2967
    %4177 = vmatpush1.bf16.msra.mxu0 %v2966
    %4178 = vmatprep.mubr.bf16.mxu0 %v443
    %4179 = vmatmul.mubr.bf16.gmra.mrb[0].mxu0 %v442
    %v4180 = vpop.f32.mrb[0].mxu0
    %v4181 = vadd.f32 %v4138, %v4180
    %v4182 = vpop.f32.mrb[0].mxu0
    %v4183 = vadd.f32 %v4140, %v4182
    %v4184 = vpop.f32.mrb[0].mxu0
    %v4185 = vadd.f32 %v4142, %v4184
    %v4186 = vpop.f32.mrb[0].mxu0
    %v4187 = vadd.f32 %v4144, %v4186
    %4188 = vdwg.mxu0
    %4189 = vmatprep.subr.bf16.mxu0 %v2971
    %4190 = vmatpush1.bf16.msra.mxu0 %v2970
    %4191 = vmatprep.subr.bf16.mxu0 %v2975
    %4192 = vmatpush1.bf16.msra.mxu0 %v2974
    %4193 = vmatprep.subr.bf16.mxu0 %v2979
    %4194 = vmatpush1.bf16.msra.mxu0 %v2978
    %4195 = vmatprep.subr.bf16.mxu0 %v2983
    %4196 = vmatpush1.bf16.msra.mxu0 %v2982
    %4197 = vmatprep.subr.bf16.mxu0 %v2987
    %4198 = vmatpush1.bf16.msra.mxu0 %v2986
    %4199 = vmatprep.subr.bf16.mxu0 %v2991
    %4200 = vmatpush1.bf16.msra.mxu0 %v2990
    %4201 = vmatprep.subr.bf16.mxu0 %v2995
    %4202 = vmatpush1.bf16.msra.mxu0 %v2994
    %4203 = vmatprep.subr.bf16.mxu0 %v2999
    %4204 = vmatpush1.bf16.msra.mxu0 %v2998
    %4205 = vmatprep.subr.bf16.mxu0 %v3003
    %4206 = vmatpush1.bf16.msra.mxu0 %v3002
    %4207 = vmatprep.subr.bf16.mxu0 %v3007
    %4208 = vmatpush1.bf16.msra.mxu0 %v3006
    %4209 = vmatprep.subr.bf16.mxu0 %v3011
    %4210 = vmatpush1.bf16.msra.mxu0 %v3010
    %4211 = vmatprep.subr.bf16.mxu0 %v3015
    %4212 = vmatpush1.bf16.msra.mxu0 %v3014
    %4213 = vmatprep.subr.bf16.mxu0 %v3019
    %4214 = vmatpush1.bf16.msra.mxu0 %v3018
    %4215 = vmatprep.subr.bf16.mxu0 %v3023
    %4216 = vmatpush1.bf16.msra.mxu0 %v3022
    %4217 = vmatprep.subr.bf16.mxu0 %v3027
    %4218 = vmatpush1.bf16.msra.mxu0 %v3026
    %4219 = vmatprep.subr.bf16.mxu0 %v3031
    %4220 = vmatpush1.bf16.msra.mxu0 %v3030
    %4221 = vmatprep.mubr.bf16.mxu0 %v445
    %4222 = vmatmul.mubr.bf16.gmra.mrb[0].mxu0 %v444
    %v4223 = vpop.f32.mrb[0].mxu0
    %v4224 = vadd.f32 %v4181, %v4223
    %v4225 = vpop.f32.mrb[0].mxu0
    %v4226 = vadd.f32 %v4183, %v4225
    %v4227 = vpop.f32.mrb[0].mxu0
    %v4228 = vadd.f32 %v4185, %v4227
    %v4229 = vpop.f32.mrb[0].mxu0
    %v4230 = vadd.f32 %v4187, %v4229
    %4231 = vdwg.mxu0
    %v4232 = vmax.f32 %v3880, 0.0
    %v4233 = vmax.f32 %v3882, 0.0
    %v4234 = vmax.f32 %v4224, 0.0
    %v4235 = vmax.f32 %v4226, 0.0
    %v4236 = vmax.f32 %v3884, 0.0
    %v4237 = vmax.f32 %v3886, 0.0
    %v4238 = vmax.f32 %v4228, 0.0
    %v4239 = vmax.f32 %v4230, 0.0
    %v4240 = vpack.c.bf16 %v4236, %v4232
    %v4241 = vpack.c.bf16 %v4237, %v4233
    %v4242 = vpack.c.bf16 %v4238, %v4234
    %v4243 = vpack.c.bf16 %v4239, %v4235
    %v4248 = vrot.slane %v4240, 1
    %v4249 = vrot.slane %v4241, 1
    %v4250 = vrot.slane %v4242, 1
    %v4251 = vrot.slane %v4243, 1
    %v4256 = vrot.slane %v4240, 2
    %v4257 = vrot.slane %v4241, 2
    %v4258 = vrot.slane %v4242, 2
    %v4259 = vrot.slane %v4243, 2
    %v4264 = vrot.slane %v4240, 3
    %v4265 = vrot.slane %v4241, 3
    %v4266 = vrot.slane %v4242, 3
    %v4267 = vrot.slane %v4243, 3
    %v4272 = vrot.slane %v4240, 4
    %v4273 = vrot.slane %v4241, 4
    %v4274 = vrot.slane %v4242, 4
    %v4275 = vrot.slane %v4243, 4
    %v4280 = vrot.slane %v4240, 5
    %v4281 = vrot.slane %v4241, 5
    %v4282 = vrot.slane %v4242, 5
    %v4283 = vrot.slane %v4243, 5
    %v4288 = vrot.slane %v4240, 6
    %v4289 = vrot.slane %v4241, 6
    %v4290 = vrot.slane %v4242, 6
    %v4291 = vrot.slane %v4243, 6
    %v4296 = vld [vmem:[#allocation6] sm:$0xf]
    %v4297 = vld [vmem:[#allocation6 + $0x4] sm:$0xf]
    %v4298 = vld [vmem:[#allocation6 + $0x8] sm:$0xf]
    %v4299 = vld [vmem:[#allocation6 + $0xc] sm:$0xf]
    %v4300 = vld [vmem:[#allocation6 + $0x10] sm:$0xf]
    %v4301 = vld [vmem:[#allocation6 + $0x14] sm:$0xf]
    %v4302 = vld [vmem:[#allocation6 + $0x18] sm:$0xf]
    %v4303 = vld [vmem:[#allocation6 + $0x1c] sm:$0xf]
    %v4304 = vld [vmem:[#allocation6 + $0x20] sm:$0xf]
    %v4305 = vld [vmem:[#allocation6 + $0x24] sm:$0xf]
    %v4306 = vld [vmem:[#allocation6 + $0x28] sm:$0xf]
    %v4307 = vld [vmem:[#allocation6 + $0x2c] sm:$0xf]
    %v4308 = vld [vmem:[#allocation6 + $0x30] sm:$0xf]
    %v4309 = vld [vmem:[#allocation6 + $0x34] sm:$0xf]
    %v4310 = vld [vmem:[#allocation6 + $0x38] sm:$0xf]
    %v4311 = vld [vmem:[#allocation6 + $0x3c] sm:$0xf]
    %v4312 = vld [vmem:[#allocation6 + $0x40] sm:$0xf]
    %v4313 = vld [vmem:[#allocation6 + $0x44] sm:$0xf]
    %v4314 = vld [vmem:[#allocation6 + $0x48] sm:$0xf]
    %v4315 = vld [vmem:[#allocation6 + $0x4c] sm:$0xf]
    %v4316 = vld [vmem:[#allocation6 + $0x50] sm:$0xf]
    %v4317 = vld [vmem:[#allocation6 + $0x54] sm:$0xf]
    %v4318 = vld [vmem:[#allocation6 + $0x58] sm:$0xf]
    %v4319 = vld [vmem:[#allocation6 + $0x5c] sm:$0xf]
    %v4320 = vld [vmem:[#allocation6 + $0x60] sm:$0xf]
    %v4321 = vld [vmem:[#allocation6 + $0x64] sm:$0xf]
    %v4322 = vld [vmem:[#allocation6 + $0x68] sm:$0xf]
    %v4323 = vld [vmem:[#allocation6 + $0x6c] sm:$0xf]
    %v4324 = vld [vmem:[#allocation6 + $0x70] sm:$0xf]
    %v4325 = vld [vmem:[#allocation6 + $0x74] sm:$0xf]
    %v4326 = vld [vmem:[#allocation6 + $0x78] sm:$0xf]
    %v4327 = vld [vmem:[#allocation6 + $0x7c] sm:$0xf]
    %v4328 = vld [vmem:[#allocation6 + $0x80] sm:$0xf]
    %v4329 = vld [vmem:[#allocation6 + $0x84] sm:$0xf]
    %v4330 = vld [vmem:[#allocation6 + $0x88] sm:$0xf]
    %v4331 = vld [vmem:[#allocation6 + $0x8c] sm:$0xf]
    %v4332 = vld [vmem:[#allocation6 + $0x90] sm:$0xf]
    %v4333 = vld [vmem:[#allocation6 + $0x94] sm:$0xf]
    %v4334 = vld [vmem:[#allocation6 + $0x98] sm:$0xf]
    %v4335 = vld [vmem:[#allocation6 + $0x9c] sm:$0xf]
    %v4336 = vld [vmem:[#allocation6 + $0xa0] sm:$0xf]
    %v4337 = vld [vmem:[#allocation6 + $0xa4] sm:$0xf]
    %v4338 = vld [vmem:[#allocation6 + $0xa8] sm:$0xf]
    %v4339 = vld [vmem:[#allocation6 + $0xac] sm:$0xf]
    %v4340 = vld [vmem:[#allocation6 + $0xb0] sm:$0xf]
    %v4341 = vld [vmem:[#allocation6 + $0xb4] sm:$0xf]
    %v4342 = vld [vmem:[#allocation6 + $0xb8] sm:$0xf]
    %v4343 = vld [vmem:[#allocation6 + $0xbc] sm:$0xf]
    %v4344 = vld [vmem:[#allocation6 + $0xc0] sm:$0xf]
    %v4345 = vld [vmem:[#allocation6 + $0xc4] sm:$0xf]
    %v4346 = vld [vmem:[#allocation6 + $0xc8] sm:$0xf]
    %v4347 = vld [vmem:[#allocation6 + $0xcc] sm:$0xf]
    %v4348 = vld [vmem:[#allocation6 + $0xd0] sm:$0xf]
    %v4349 = vld [vmem:[#allocation6 + $0xd4] sm:$0xf]
    %v4350 = vld [vmem:[#allocation6 + $0xd8] sm:$0xf]
    %v4351 = vld [vmem:[#allocation6 + $0xdc] sm:$0xf]
    %v4352 = vld [vmem:[#allocation6 + $0xe0] sm:$0xf]
    %v4353 = vld [vmem:[#allocation6 + $0xe4] sm:$0xf]
    %v4354 = vld [vmem:[#allocation6 + $0xe8] sm:$0xf]
    %v4355 = vld [vmem:[#allocation6 + $0xec] sm:$0xf]
    %v4356 = vld [vmem:[#allocation6 + $0xf0] sm:$0xf]
    %v4357 = vld [vmem:[#allocation6 + $0xf4] sm:$0xf]
    %v4358 = vld [vmem:[#allocation6 + $0xf8] sm:$0xf]
    %v4359 = vld [vmem:[#allocation6 + $0xfc] sm:$0xf]
    %v4360 = vld [vmem:[#allocation6 + $0x100] sm:$0xf]
    %v4361 = vld [vmem:[#allocation6 + $0x104] sm:$0xf]
    %v4362 = vld [vmem:[#allocation6 + $0x108] sm:$0xf]
    %v4363 = vld [vmem:[#allocation6 + $0x10c] sm:$0xf]
    %v4364 = vld [vmem:[#allocation6 + $0x110] sm:$0xf]
    %v4365 = vld [vmem:[#allocation6 + $0x114] sm:$0xf]
    %v4366 = vld [vmem:[#allocation6 + $0x118] sm:$0xf]
    %v4367 = vld [vmem:[#allocation6 + $0x11c] sm:$0xf]
    %v4368 = vld [vmem:[#allocation6 + $0x120] sm:$0xf]
    %v4369 = vld [vmem:[#allocation6 + $0x124] sm:$0xf]
    %v4370 = vld [vmem:[#allocation6 + $0x128] sm:$0xf]
    %v4371 = vld [vmem:[#allocation6 + $0x12c] sm:$0xf]
    %v4372 = vld [vmem:[#allocation6 + $0x130] sm:$0xf]
    %v4373 = vld [vmem:[#allocation6 + $0x134] sm:$0xf]
    %v4374 = vld [vmem:[#allocation6 + $0x138] sm:$0xf]
    %v4375 = vld [vmem:[#allocation6 + $0x13c] sm:$0xf]
    %v4376 = vld [vmem:[#allocation6 + $0x140] sm:$0xf]
    %v4377 = vld [vmem:[#allocation6 + $0x144] sm:$0xf]
    %v4378 = vld [vmem:[#allocation6 + $0x148] sm:$0xf]
    %v4379 = vld [vmem:[#allocation6 + $0x14c] sm:$0xf]
    %v4380 = vld [vmem:[#allocation6 + $0x150] sm:$0xf]
    %v4381 = vld [vmem:[#allocation6 + $0x154] sm:$0xf]
    %v4382 = vld [vmem:[#allocation6 + $0x158] sm:$0xf]
    %v4383 = vld [vmem:[#allocation6 + $0x15c] sm:$0xf]
    %v4384 = vld [vmem:[#allocation6 + $0x160] sm:$0xf]
    %v4385 = vld [vmem:[#allocation6 + $0x164] sm:$0xf]
    %v4386 = vld [vmem:[#allocation6 + $0x168] sm:$0xf]
    %v4387 = vld [vmem:[#allocation6 + $0x16c] sm:$0xf]
    %v4388 = vld [vmem:[#allocation6 + $0x170] sm:$0xf]
    %v4389 = vld [vmem:[#allocation6 + $0x174] sm:$0xf]
    %v4390 = vld [vmem:[#allocation6 + $0x178] sm:$0xf]
    %v4391 = vld [vmem:[#allocation6 + $0x17c] sm:$0xf]
    %v4392 = vld [vmem:[#allocation6 + $0x180] sm:$0xf]
    %v4393 = vld [vmem:[#allocation6 + $0x184] sm:$0xf]
    %v4394 = vld [vmem:[#allocation6 + $0x188] sm:$0xf]
    %v4395 = vld [vmem:[#allocation6 + $0x18c] sm:$0xf]
    %v4396 = vld [vmem:[#allocation6 + $0x190] sm:$0xf]
    %v4397 = vld [vmem:[#allocation6 + $0x194] sm:$0xf]
    %v4398 = vld [vmem:[#allocation6 + $0x198] sm:$0xf]
    %v4399 = vld [vmem:[#allocation6 + $0x19c] sm:$0xf]
    %v4400 = vld [vmem:[#allocation6 + $0x1a0] sm:$0xf]
    %v4401 = vld [vmem:[#allocation6 + $0x1a4] sm:$0xf]
    %v4402 = vld [vmem:[#allocation6 + $0x1a8] sm:$0xf]
    %v4403 = vld [vmem:[#allocation6 + $0x1ac] sm:$0xf]
    %v4404 = vld [vmem:[#allocation6 + $0x1b0] sm:$0xf]
    %v4405 = vld [vmem:[#allocation6 + $0x1b4] sm:$0xf]
    %v4406 = vld [vmem:[#allocation6 + $0x1b8] sm:$0xf]
    %v4407 = vld [vmem:[#allocation6 + $0x1bc] sm:$0xf]
    %v4408 = vld [vmem:[#allocation6 + $0x1c0] sm:$0xf]
    %v4409 = vld [vmem:[#allocation6 + $0x1c4] sm:$0xf]
    %v4410 = vld [vmem:[#allocation6 + $0x1c8] sm:$0xf]
    %v4411 = vld [vmem:[#allocation6 + $0x1cc] sm:$0xf]
    %v4412 = vld [vmem:[#allocation6 + $0x1d0] sm:$0xf]
    %v4413 = vld [vmem:[#allocation6 + $0x1d4] sm:$0xf]
    %v4414 = vld [vmem:[#allocation6 + $0x1d8] sm:$0xf]
    %v4415 = vld [vmem:[#allocation6 + $0x1dc] sm:$0xf]
    %v4416 = vld [vmem:[#allocation6 + $0x1e0] sm:$0xf]
    %v4417 = vld [vmem:[#allocation6 + $0x1e4] sm:$0xf]
    %v4418 = vld [vmem:[#allocation6 + $0x1e8] sm:$0xf]
    %v4419 = vld [vmem:[#allocation6 + $0x1ec] sm:$0xf]
    %v4420 = vld [vmem:[#allocation6 + $0x1f0] sm:$0xf]
    %v4421 = vld [vmem:[#allocation6 + $0x1f4] sm:$0xf]
    %v4422 = vld [vmem:[#allocation6 + $0x1f8] sm:$0xf]
    %v4423 = vld [vmem:[#allocation6 + $0x1fc] sm:$0xf]
    %v4424 = vld [vmem:[#allocation6 + $0x200] sm:$0xf]
    %v4425 = vld [vmem:[#allocation6 + $0x204] sm:$0xf]
    %v4426 = vld [vmem:[#allocation6 + $0x208] sm:$0xf]
    %v4427 = vld [vmem:[#allocation6 + $0x20c] sm:$0xf]
    %v4428 = vld [vmem:[#allocation6 + $0x210] sm:$0xf]
    %v4429 = vld [vmem:[#allocation6 + $0x214] sm:$0xf]
    %v4430 = vld [vmem:[#allocation6 + $0x218] sm:$0xf]
    %v4431 = vld [vmem:[#allocation6 + $0x21c] sm:$0xf]
    %v4432 = vld [vmem:[#allocation6 + $0x220] sm:$0xf]
    %v4433 = vld [vmem:[#allocation6 + $0x224] sm:$0xf]
    %v4434 = vld [vmem:[#allocation6 + $0x228] sm:$0xf]
    %v4435 = vld [vmem:[#allocation6 + $0x22c] sm:$0xf]
    %v4436 = vld [vmem:[#allocation6 + $0x230] sm:$0xf]
    %v4437 = vld [vmem:[#allocation6 + $0x234] sm:$0xf]
    %v4438 = vld [vmem:[#allocation6 + $0x238] sm:$0xf]
    %v4439 = vld [vmem:[#allocation6 + $0x23c] sm:$0xf]
    %v4440 = vld [vmem:[#allocation6 + $0x240] sm:$0xf]
    %v4441 = vld [vmem:[#allocation6 + $0x244] sm:$0xf]
    %v4442 = vld [vmem:[#allocation6 + $0x248] sm:$0xf]
    %v4443 = vld [vmem:[#allocation6 + $0x24c] sm:$0xf]
    %v4444 = vld [vmem:[#allocation6 + $0x250] sm:$0xf]
    %v4445 = vld [vmem:[#allocation6 + $0x254] sm:$0xf]
    %v4446 = vld [vmem:[#allocation6 + $0x258] sm:$0xf]
    %v4447 = vld [vmem:[#allocation6 + $0x25c] sm:$0xf]
    %v4448 = vld [vmem:[#allocation6 + $0x260] sm:$0xf]
    %v4449 = vld [vmem:[#allocation6 + $0x264] sm:$0xf]
    %v4450 = vld [vmem:[#allocation6 + $0x268] sm:$0xf]
    %v4451 = vld [vmem:[#allocation6 + $0x26c] sm:$0xf]
    %v4452 = vld [vmem:[#allocation6 + $0x270] sm:$0xf]
    %v4453 = vld [vmem:[#allocation6 + $0x274] sm:$0xf]
    %v4454 = vld [vmem:[#allocation6 + $0x278] sm:$0xf]
    %v4455 = vld [vmem:[#allocation6 + $0x27c] sm:$0xf]
    %v4456 = vld [vmem:[#allocation6 + $0x280] sm:$0xf]
    %v4457 = vld [vmem:[#allocation6 + $0x284] sm:$0xf]
    %v4458 = vld [vmem:[#allocation6 + $0x288] sm:$0xf]
    %v4459 = vld [vmem:[#allocation6 + $0x28c] sm:$0xf]
    %v4460 = vld [vmem:[#allocation6 + $0x290] sm:$0xf]
    %v4461 = vld [vmem:[#allocation6 + $0x294] sm:$0xf]
    %v4462 = vld [vmem:[#allocation6 + $0x298] sm:$0xf]
    %v4463 = vld [vmem:[#allocation6 + $0x29c] sm:$0xf]
    %v4464 = vld [vmem:[#allocation6 + $0x2a0] sm:$0xf]
    %v4465 = vld [vmem:[#allocation6 + $0x2a4] sm:$0xf]
    %v4466 = vld [vmem:[#allocation6 + $0x2a8] sm:$0xf]
    %v4467 = vld [vmem:[#allocation6 + $0x2ac] sm:$0xf]
    %v4468 = vld [vmem:[#allocation6 + $0x2b0] sm:$0xf]
    %v4469 = vld [vmem:[#allocation6 + $0x2b4] sm:$0xf]
    %v4470 = vld [vmem:[#allocation6 + $0x2b8] sm:$0xf]
    %v4471 = vld [vmem:[#allocation6 + $0x2bc] sm:$0xf]
    %v4472 = vld [vmem:[#allocation6 + $0x2c0] sm:$0xf]
    %v4473 = vld [vmem:[#allocation6 + $0x2c4] sm:$0xf]
    %v4474 = vld [vmem:[#allocation6 + $0x2c8] sm:$0xf]
    %v4475 = vld [vmem:[#allocation6 + $0x2cc] sm:$0xf]
    %v4476 = vld [vmem:[#allocation6 + $0x2d0] sm:$0xf]
    %v4477 = vld [vmem:[#allocation6 + $0x2d4] sm:$0xf]
    %v4478 = vld [vmem:[#allocation6 + $0x2d8] sm:$0xf]
    %v4479 = vld [vmem:[#allocation6 + $0x2dc] sm:$0xf]
    %v4480 = vld [vmem:[#allocation6 + $0x2e0] sm:$0xf]
    %v4481 = vld [vmem:[#allocation6 + $0x2e4] sm:$0xf]
    %v4482 = vld [vmem:[#allocation6 + $0x2e8] sm:$0xf]
    %v4483 = vld [vmem:[#allocation6 + $0x2ec] sm:$0xf]
    %v4484 = vld [vmem:[#allocation6 + $0x2f0] sm:$0xf]
    %v4485 = vld [vmem:[#allocation6 + $0x2f4] sm:$0xf]
    %v4486 = vld [vmem:[#allocation6 + $0x2f8] sm:$0xf]
    %v4487 = vld [vmem:[#allocation6 + $0x2fc] sm:$0xf]
    %v4488 = vld [vmem:[#allocation6 + $0x300] sm:$0xf]
    %v4489 = vld [vmem:[#allocation6 + $0x304] sm:$0xf]
    %v4490 = vld [vmem:[#allocation6 + $0x308] sm:$0xf]
    %v4491 = vld [vmem:[#allocation6 + $0x30c] sm:$0xf]
    %v4492 = vld [vmem:[#allocation6 + $0x310] sm:$0xf]
    %v4493 = vld [vmem:[#allocation6 + $0x314] sm:$0xf]
    %v4494 = vld [vmem:[#allocation6 + $0x318] sm:$0xf]
    %v4495 = vld [vmem:[#allocation6 + $0x31c] sm:$0xf]
    %v4496 = vld [vmem:[#allocation6 + $0x320] sm:$0xf]
    %v4497 = vld [vmem:[#allocation6 + $0x324] sm:$0xf]
    %v4498 = vld [vmem:[#allocation6 + $0x328] sm:$0xf]
    %v4499 = vld [vmem:[#allocation6 + $0x32c] sm:$0xf]
    %v4500 = vld [vmem:[#allocation6 + $0x330] sm:$0xf]
    %v4501 = vld [vmem:[#allocation6 + $0x334] sm:$0xf]
    %v4502 = vld [vmem:[#allocation6 + $0x338] sm:$0xf]
    %v4503 = vld [vmem:[#allocation6 + $0x33c] sm:$0xf]
    %v4504 = vld [vmem:[#allocation6 + $0x340] sm:$0xf]
    %v4505 = vld [vmem:[#allocation6 + $0x344] sm:$0xf]
    %v4506 = vld [vmem:[#allocation6 + $0x348] sm:$0xf]
    %v4507 = vld [vmem:[#allocation6 + $0x34c] sm:$0xf]
    %v4508 = vld [vmem:[#allocation6 + $0x350] sm:$0xf]
    %v4509 = vld [vmem:[#allocation6 + $0x354] sm:$0xf]
    %v4510 = vld [vmem:[#allocation6 + $0x358] sm:$0xf]
    %v4511 = vld [vmem:[#allocation6 + $0x35c] sm:$0xf]
    %v4512 = vld [vmem:[#allocation6 + $0x360] sm:$0xf]
    %v4513 = vld [vmem:[#allocation6 + $0x364] sm:$0xf]
    %v4514 = vld [vmem:[#allocation6 + $0x368] sm:$0xf]
    %v4515 = vld [vmem:[#allocation6 + $0x36c] sm:$0xf]
    %v4516 = vld [vmem:[#allocation6 + $0x370] sm:$0xf]
    %v4517 = vld [vmem:[#allocation6 + $0x374] sm:$0xf]
    %v4518 = vld [vmem:[#allocation6 + $0x378] sm:$0xf]
    %v4519 = vld [vmem:[#allocation6 + $0x37c] sm:$0xf]
    %v4520 = vld [vmem:[#allocation6 + $0x380] sm:$0xf]
    %v4521 = vld [vmem:[#allocation6 + $0x384] sm:$0xf]
    %v4522 = vld [vmem:[#allocation6 + $0x388] sm:$0xf]
    %v4523 = vld [vmem:[#allocation6 + $0x38c] sm:$0xf]
    %v4524 = vld [vmem:[#allocation6 + $0x390] sm:$0xf]
    %v4525 = vld [vmem:[#allocation6 + $0x394] sm:$0xf]
    %v4526 = vld [vmem:[#allocation6 + $0x398] sm:$0xf]
    %v4527 = vld [vmem:[#allocation6 + $0x39c] sm:$0xf]
    %v4528 = vld [vmem:[#allocation6 + $0x3a0] sm:$0xf]
    %v4529 = vld [vmem:[#allocation6 + $0x3a4] sm:$0xf]
    %v4530 = vld [vmem:[#allocation6 + $0x3a8] sm:$0xf]
    %v4531 = vld [vmem:[#allocation6 + $0x3ac] sm:$0xf]
    %v4532 = vld [vmem:[#allocation6 + $0x3b0] sm:$0xf]
    %v4533 = vld [vmem:[#allocation6 + $0x3b4] sm:$0xf]
    %v4534 = vld [vmem:[#allocation6 + $0x3b8] sm:$0xf]
    %v4535 = vld [vmem:[#allocation6 + $0x3bc] sm:$0xf]
    %v4536 = vld [vmem:[#allocation6 + $0x3c0] sm:$0xf]
    %v4537 = vld [vmem:[#allocation6 + $0x3c4] sm:$0xf]
    %v4538 = vld [vmem:[#allocation6 + $0x3c8] sm:$0xf]
    %v4539 = vld [vmem:[#allocation6 + $0x3cc] sm:$0xf]
    %v4540 = vld [vmem:[#allocation6 + $0x3d0] sm:$0xf]
    %v4541 = vld [vmem:[#allocation6 + $0x3d4] sm:$0xf]
    %v4542 = vld [vmem:[#allocation6 + $0x3d8] sm:$0xf]
    %v4543 = vld [vmem:[#allocation6 + $0x3dc] sm:$0xf]
    %v4544 = vld [vmem:[#allocation6 + $0x3e0] sm:$0xf]
    %v4545 = vld [vmem:[#allocation6 + $0x3e4] sm:$0xf]
    %v4546 = vld [vmem:[#allocation6 + $0x3e8] sm:$0xf]
    %v4547 = vld [vmem:[#allocation6 + $0x3ec] sm:$0xf]
    %v4548 = vld [vmem:[#allocation6 + $0x3f0] sm:$0xf]
    %v4549 = vld [vmem:[#allocation6 + $0x3f4] sm:$0xf]
    %v4550 = vld [vmem:[#allocation6 + $0x3f8] sm:$0xf]
    %v4551 = vld [vmem:[#allocation6 + $0x3fc] sm:$0xf]
    %v4552 = vld [vmem:[#allocation6 + $0x400] sm:$0xf]
    %v4553 = vld [vmem:[#allocation6 + $0x404] sm:$0xf]
    %v4554 = vld [vmem:[#allocation6 + $0x408] sm:$0xf]
    %v4555 = vld [vmem:[#allocation6 + $0x40c] sm:$0xf]
    %v4556 = vld [vmem:[#allocation6 + $0x410] sm:$0xf]
    %v4557 = vld [vmem:[#allocation6 + $0x414] sm:$0xf]
    %v4558 = vld [vmem:[#allocation6 + $0x418] sm:$0xf]
    %v4559 = vld [vmem:[#allocation6 + $0x41c] sm:$0xf]
    %v4560 = vld [vmem:[#allocation6 + $0x420] sm:$0xf]
    %v4561 = vld [vmem:[#allocation6 + $0x424] sm:$0xf]
    %v4562 = vld [vmem:[#allocation6 + $0x428] sm:$0xf]
    %v4563 = vld [vmem:[#allocation6 + $0x42c] sm:$0xf]
    %v4564 = vld [vmem:[#allocation6 + $0x430] sm:$0xf]
    %v4565 = vld [vmem:[#allocation6 + $0x434] sm:$0xf]
    %v4566 = vld [vmem:[#allocation6 + $0x438] sm:$0xf]
    %v4567 = vld [vmem:[#allocation6 + $0x43c] sm:$0xf]
    %v4568 = vld [vmem:[#allocation6 + $0x440] sm:$0xf]
    %v4569 = vld [vmem:[#allocation6 + $0x444] sm:$0xf]
    %v4570 = vld [vmem:[#allocation6 + $0x448] sm:$0xf]
    %v4571 = vld [vmem:[#allocation6 + $0x44c] sm:$0xf]
    %v4572 = vld [vmem:[#allocation6 + $0x450] sm:$0xf]
    %v4573 = vld [vmem:[#allocation6 + $0x454] sm:$0xf]
    %v4574 = vld [vmem:[#allocation6 + $0x458] sm:$0xf]
    %v4575 = vld [vmem:[#allocation6 + $0x45c] sm:$0xf]
    %v4576 = vld [vmem:[#allocation6 + $0x460] sm:$0xf]
    %v4577 = vld [vmem:[#allocation6 + $0x464] sm:$0xf]
    %v4578 = vld [vmem:[#allocation6 + $0x468] sm:$0xf]
    %v4579 = vld [vmem:[#allocation6 + $0x46c] sm:$0xf]
    %v4580 = vld [vmem:[#allocation6 + $0x470] sm:$0xf]
    %v4581 = vld [vmem:[#allocation6 + $0x474] sm:$0xf]
    %v4582 = vld [vmem:[#allocation6 + $0x478] sm:$0xf]
    %v4583 = vld [vmem:[#allocation6 + $0x47c] sm:$0xf]
    %v4584 = vld [vmem:[#allocation6 + $0x480] sm:$0xf]
    %v4585 = vld [vmem:[#allocation6 + $0x484] sm:$0xf]
    %v4586 = vld [vmem:[#allocation6 + $0x488] sm:$0xf]
    %v4587 = vld [vmem:[#allocation6 + $0x48c] sm:$0xf]
    %v4588 = vld [vmem:[#allocation6 + $0x490] sm:$0xf]
    %v4589 = vld [vmem:[#allocation6 + $0x494] sm:$0xf]
    %v4590 = vld [vmem:[#allocation6 + $0x498] sm:$0xf]
    %v4591 = vld [vmem:[#allocation6 + $0x49c] sm:$0xf]
    %v4592 = vld [vmem:[#allocation6 + $0x4a0] sm:$0xf]
    %v4593 = vld [vmem:[#allocation6 + $0x4a4] sm:$0xf]
    %v4594 = vld [vmem:[#allocation6 + $0x4a8] sm:$0xf]
    %v4595 = vld [vmem:[#allocation6 + $0x4ac] sm:$0xf]
    %v4596 = vld [vmem:[#allocation6 + $0x4b0] sm:$0xf]
    %v4597 = vld [vmem:[#allocation6 + $0x4b4] sm:$0xf]
    %v4598 = vld [vmem:[#allocation6 + $0x4b8] sm:$0xf]
    %v4599 = vld [vmem:[#allocation6 + $0x4bc] sm:$0xf]
    %v4600 = vld [vmem:[#allocation6 + $0x4c0] sm:$0xf]
    %v4601 = vld [vmem:[#allocation6 + $0x4c4] sm:$0xf]
    %v4602 = vld [vmem:[#allocation6 + $0x4c8] sm:$0xf]
    %v4603 = vld [vmem:[#allocation6 + $0x4cc] sm:$0xf]
    %v4604 = vld [vmem:[#allocation6 + $0x4d0] sm:$0xf]
    %v4605 = vld [vmem:[#allocation6 + $0x4d4] sm:$0xf]
    %v4606 = vld [vmem:[#allocation6 + $0x4d8] sm:$0xf]
    %v4607 = vld [vmem:[#allocation6 + $0x4dc] sm:$0xf]
    %v4608 = vld [vmem:[#allocation6 + $0x4e0] sm:$0xf]
    %v4609 = vld [vmem:[#allocation6 + $0x4e4] sm:$0xf]
    %v4610 = vld [vmem:[#allocation6 + $0x4e8] sm:$0xf]
    %v4611 = vld [vmem:[#allocation6 + $0x4ec] sm:$0xf]
    %v4612 = vld [vmem:[#allocation6 + $0x4f0] sm:$0xf]
    %v4613 = vld [vmem:[#allocation6 + $0x4f4] sm:$0xf]
    %v4614 = vld [vmem:[#allocation6 + $0x4f8] sm:$0xf]
    %v4615 = vld [vmem:[#allocation6 + $0x4fc] sm:$0xf]
    %v4616 = vld [vmem:[#allocation6 + $0x500] sm:$0xf]
    %v4617 = vld [vmem:[#allocation6 + $0x504] sm:$0xf]
    %v4618 = vld [vmem:[#allocation6 + $0x508] sm:$0xf]
    %v4619 = vld [vmem:[#allocation6 + $0x50c] sm:$0xf]
    %v4620 = vld [vmem:[#allocation6 + $0x510] sm:$0xf]
    %v4621 = vld [vmem:[#allocation6 + $0x514] sm:$0xf]
    %v4622 = vld [vmem:[#allocation6 + $0x518] sm:$0xf]
    %v4623 = vld [vmem:[#allocation6 + $0x51c] sm:$0xf]
    %v4624 = vld [vmem:[#allocation6 + $0x520] sm:$0xf]
    %v4625 = vld [vmem:[#allocation6 + $0x524] sm:$0xf]
    %v4626 = vld [vmem:[#allocation6 + $0x528] sm:$0xf]
    %v4627 = vld [vmem:[#allocation6 + $0x52c] sm:$0xf]
    %v4628 = vld [vmem:[#allocation6 + $0x530] sm:$0xf]
    %v4629 = vld [vmem:[#allocation6 + $0x534] sm:$0xf]
    %v4630 = vld [vmem:[#allocation6 + $0x538] sm:$0xf]
    %v4631 = vld [vmem:[#allocation6 + $0x53c] sm:$0xf]
    %v4632 = vld [vmem:[#allocation6 + $0x540] sm:$0xf]
    %v4633 = vld [vmem:[#allocation6 + $0x544] sm:$0xf]
    %v4634 = vld [vmem:[#allocation6 + $0x548] sm:$0xf]
    %v4635 = vld [vmem:[#allocation6 + $0x54c] sm:$0xf]
    %v4636 = vld [vmem:[#allocation6 + $0x550] sm:$0xf]
    %v4637 = vld [vmem:[#allocation6 + $0x554] sm:$0xf]
    %v4638 = vld [vmem:[#allocation6 + $0x558] sm:$0xf]
    %v4639 = vld [vmem:[#allocation6 + $0x55c] sm:$0xf]
    %v4640 = vld [vmem:[#allocation6 + $0x560] sm:$0xf]
    %v4641 = vld [vmem:[#allocation6 + $0x564] sm:$0xf]
    %v4642 = vld [vmem:[#allocation6 + $0x568] sm:$0xf]
    %v4643 = vld [vmem:[#allocation6 + $0x56c] sm:$0xf]
    %v4644 = vld [vmem:[#allocation6 + $0x570] sm:$0xf]
    %v4645 = vld [vmem:[#allocation6 + $0x574] sm:$0xf]
    %v4646 = vld [vmem:[#allocation6 + $0x578] sm:$0xf]
    %v4647 = vld [vmem:[#allocation6 + $0x57c] sm:$0xf]
    %v4648 = vld [vmem:[#allocation6 + $0x580] sm:$0xf]
    %v4649 = vld [vmem:[#allocation6 + $0x584] sm:$0xf]
    %v4650 = vld [vmem:[#allocation6 + $0x588] sm:$0xf]
    %v4651 = vld [vmem:[#allocation6 + $0x58c] sm:$0xf]
    %v4652 = vld [vmem:[#allocation6 + $0x590] sm:$0xf]
    %v4653 = vld [vmem:[#allocation6 + $0x594] sm:$0xf]
    %v4654 = vld [vmem:[#allocation6 + $0x598] sm:$0xf]
    %v4655 = vld [vmem:[#allocation6 + $0x59c] sm:$0xf]
    %v4656 = vld [vmem:[#allocation6 + $0x5a0] sm:$0xf]
    %v4657 = vld [vmem:[#allocation6 + $0x5a4] sm:$0xf]
    %v4658 = vld [vmem:[#allocation6 + $0x5a8] sm:$0xf]
    %v4659 = vld [vmem:[#allocation6 + $0x5ac] sm:$0xf]
    %v4660 = vld [vmem:[#allocation6 + $0x5b0] sm:$0xf]
    %v4661 = vld [vmem:[#allocation6 + $0x5b4] sm:$0xf]
    %v4662 = vld [vmem:[#allocation6 + $0x5b8] sm:$0xf]
    %v4663 = vld [vmem:[#allocation6 + $0x5bc] sm:$0xf]
    %v4664 = vld [vmem:[#allocation6 + $0x5c0] sm:$0xf]
    %v4665 = vld [vmem:[#allocation6 + $0x5c4] sm:$0xf]
    %v4666 = vld [vmem:[#allocation6 + $0x5c8] sm:$0xf]
    %v4667 = vld [vmem:[#allocation6 + $0x5cc] sm:$0xf]
    %v4668 = vld [vmem:[#allocation6 + $0x5d0] sm:$0xf]
    %v4669 = vld [vmem:[#allocation6 + $0x5d4] sm:$0xf]
    %v4670 = vld [vmem:[#allocation6 + $0x5d8] sm:$0xf]
    %v4671 = vld [vmem:[#allocation6 + $0x5dc] sm:$0xf]
    %v4672 = vld [vmem:[#allocation6 + $0x5e0] sm:$0xf]
    %v4673 = vld [vmem:[#allocation6 + $0x5e4] sm:$0xf]
    %v4674 = vld [vmem:[#allocation6 + $0x5e8] sm:$0xf]
    %v4675 = vld [vmem:[#allocation6 + $0x5ec] sm:$0xf]
    %v4676 = vld [vmem:[#allocation6 + $0x5f0] sm:$0xf]
    %v4677 = vld [vmem:[#allocation6 + $0x5f4] sm:$0xf]
    %v4678 = vld [vmem:[#allocation6 + $0x5f8] sm:$0xf]
    %v4679 = vld [vmem:[#allocation6 + $0x5fc] sm:$0xf]
    %v4680 = vld [vmem:[#allocation6 + $0x600] sm:$0xf]
    %v4681 = vld [vmem:[#allocation6 + $0x604] sm:$0xf]
    %v4682 = vld [vmem:[#allocation6 + $0x608] sm:$0xf]
    %v4683 = vld [vmem:[#allocation6 + $0x60c] sm:$0xf]
    %v4684 = vld [vmem:[#allocation6 + $0x610] sm:$0xf]
    %v4685 = vld [vmem:[#allocation6 + $0x614] sm:$0xf]
    %v4686 = vld [vmem:[#allocation6 + $0x618] sm:$0xf]
    %v4687 = vld [vmem:[#allocation6 + $0x61c] sm:$0xf]
    %v4688 = vld [vmem:[#allocation6 + $0x620] sm:$0xf]
    %v4689 = vld [vmem:[#allocation6 + $0x624] sm:$0xf]
    %v4690 = vld [vmem:[#allocation6 + $0x628] sm:$0xf]
    %v4691 = vld [vmem:[#allocation6 + $0x62c] sm:$0xf]
    %v4692 = vld [vmem:[#allocation6 + $0x630] sm:$0xf]
    %v4693 = vld [vmem:[#allocation6 + $0x634] sm:$0xf]
    %v4694 = vld [vmem:[#allocation6 + $0x638] sm:$0xf]
    %v4695 = vld [vmem:[#allocation6 + $0x63c] sm:$0xf]
    %v4696 = vld [vmem:[#allocation6 + $0x640] sm:$0xf]
    %v4697 = vld [vmem:[#allocation6 + $0x644] sm:$0xf]
    %v4698 = vld [vmem:[#allocation6 + $0x648] sm:$0xf]
    %v4699 = vld [vmem:[#allocation6 + $0x64c] sm:$0xf]
    %v4700 = vld [vmem:[#allocation6 + $0x650] sm:$0xf]
    %v4701 = vld [vmem:[#allocation6 + $0x654] sm:$0xf]
    %v4702 = vld [vmem:[#allocation6 + $0x658] sm:$0xf]
    %v4703 = vld [vmem:[#allocation6 + $0x65c] sm:$0xf]
    %v4704 = vld [vmem:[#allocation6 + $0x660] sm:$0xf]
    %v4705 = vld [vmem:[#allocation6 + $0x664] sm:$0xf]
    %v4706 = vld [vmem:[#allocation6 + $0x668] sm:$0xf]
    %v4707 = vld [vmem:[#allocation6 + $0x66c] sm:$0xf]
    %v4708 = vld [vmem:[#allocation6 + $0x670] sm:$0xf]
    %v4709 = vld [vmem:[#allocation6 + $0x674] sm:$0xf]
    %v4710 = vld [vmem:[#allocation6 + $0x678] sm:$0xf]
    %v4711 = vld [vmem:[#allocation6 + $0x67c] sm:$0xf]
    %v4712 = vld [vmem:[#allocation6 + $0x680] sm:$0xf]
    %v4713 = vld [vmem:[#allocation6 + $0x684] sm:$0xf]
    %v4714 = vld [vmem:[#allocation6 + $0x688] sm:$0xf]
    %v4715 = vld [vmem:[#allocation6 + $0x68c] sm:$0xf]
    %v4716 = vld [vmem:[#allocation6 + $0x690] sm:$0xf]
    %v4717 = vld [vmem:[#allocation6 + $0x694] sm:$0xf]
    %v4718 = vld [vmem:[#allocation6 + $0x698] sm:$0xf]
    %v4719 = vld [vmem:[#allocation6 + $0x69c] sm:$0xf]
    %v4720 = vld [vmem:[#allocation6 + $0x6a0] sm:$0xf]
    %v4721 = vld [vmem:[#allocation6 + $0x6a4] sm:$0xf]
    %v4722 = vld [vmem:[#allocation6 + $0x6a8] sm:$0xf]
    %v4723 = vld [vmem:[#allocation6 + $0x6ac] sm:$0xf]
    %v4724 = vld [vmem:[#allocation6 + $0x6b0] sm:$0xf]
    %v4725 = vld [vmem:[#allocation6 + $0x6b4] sm:$0xf]
    %v4726 = vld [vmem:[#allocation6 + $0x6b8] sm:$0xf]
    %v4727 = vld [vmem:[#allocation6 + $0x6bc] sm:$0xf]
    %v4728 = vld [vmem:[#allocation6 + $0x6c0] sm:$0xf]
    %v4729 = vld [vmem:[#allocation6 + $0x6c4] sm:$0xf]
    %v4730 = vld [vmem:[#allocation6 + $0x6c8] sm:$0xf]
    %v4731 = vld [vmem:[#allocation6 + $0x6cc] sm:$0xf]
    %v4732 = vld [vmem:[#allocation6 + $0x6d0] sm:$0xf]
    %v4733 = vld [vmem:[#allocation6 + $0x6d4] sm:$0xf]
    %v4734 = vld [vmem:[#allocation6 + $0x6d8] sm:$0xf]
    %v4735 = vld [vmem:[#allocation6 + $0x6dc] sm:$0xf]
    %v4736 = vld [vmem:[#allocation6 + $0x6e0] sm:$0xf]
    %v4737 = vld [vmem:[#allocation6 + $0x6e4] sm:$0xf]
    %v4738 = vld [vmem:[#allocation6 + $0x6e8] sm:$0xf]
    %v4739 = vld [vmem:[#allocation6 + $0x6ec] sm:$0xf]
    %v4740 = vld [vmem:[#allocation6 + $0x6f0] sm:$0xf]
    %v4741 = vld [vmem:[#allocation6 + $0x6f4] sm:$0xf]
    %v4742 = vld [vmem:[#allocation6 + $0x6f8] sm:$0xf]
    %v4743 = vld [vmem:[#allocation6 + $0x6fc] sm:$0xf]
    %v4744 = vld [vmem:[#allocation9] sm:$0x1]
    %v4746 = vlaneseq
    %v4747 = vshrl.u32 %v4746, 7
    %v4748 = vsub.s32 0, %v4747
    %v4749 = vrot.slane %v4744, %v4748
    %v5199 = vunpack.c.l.b16 %v4296
    %v5200 = vunpack.c.l.b16 %v4297
    %v5201 = vunpack.c.l.b16 %v4298
    %v5202 = vunpack.c.l.b16 %v4299
    %v5203 = vunpack.c.l.b16 %v4300
    %v5204 = vunpack.c.l.b16 %v4301
    %v5205 = vunpack.c.l.b16 %v4302
    %v5206 = vunpack.c.l.b16 %v4303
    %v5207 = vunpack.c.l.b16 %v4304
    %v5208 = vunpack.c.l.b16 %v4305
    %v5209 = vunpack.c.l.b16 %v4306
    %v5210 = vunpack.c.l.b16 %v4307
    %v5211 = vunpack.c.l.b16 %v4308
    %v5212 = vunpack.c.l.b16 %v4309
    %v5213 = vunpack.c.l.b16 %v4310
    %v5214 = vunpack.c.l.b16 %v4311
    %v5215 = vunpack.c.l.b16 %v4312
    %v5216 = vunpack.c.l.b16 %v4313
    %v5217 = vunpack.c.l.b16 %v4314
    %v5218 = vunpack.c.l.b16 %v4315
    %v5219 = vunpack.c.l.b16 %v4316
    %v5220 = vunpack.c.l.b16 %v4317
    %v5221 = vunpack.c.l.b16 %v4318
    %v5222 = vunpack.c.l.b16 %v4319
    %v5223 = vunpack.c.l.b16 %v4320
    %v5224 = vunpack.c.l.b16 %v4321
    %v5225 = vunpack.c.l.b16 %v4322
    %v5226 = vunpack.c.l.b16 %v4323
    %v5227 = vunpack.c.l.b16 %v4324
    %v5228 = vunpack.c.l.b16 %v4325
    %v5229 = vunpack.c.l.b16 %v4326
    %v5230 = vunpack.c.l.b16 %v4327
    %v5231 = vunpack.c.l.b16 %v4328
    %v5232 = vunpack.c.l.b16 %v4329
    %v5233 = vunpack.c.l.b16 %v4330
    %v5234 = vunpack.c.l.b16 %v4331
    %v5235 = vunpack.c.l.b16 %v4332
    %v5236 = vunpack.c.l.b16 %v4333
    %v5237 = vunpack.c.l.b16 %v4334
    %v5238 = vunpack.c.l.b16 %v4335
    %v5239 = vunpack.c.l.b16 %v4336
    %v5240 = vunpack.c.l.b16 %v4337
    %v5241 = vunpack.c.l.b16 %v4338
    %v5242 = vunpack.c.l.b16 %v4339
    %v5243 = vunpack.c.l.b16 %v4340
    %v5244 = vunpack.c.l.b16 %v4341
    %v5245 = vunpack.c.l.b16 %v4342
    %v5246 = vunpack.c.l.b16 %v4343
    %v5247 = vunpack.c.l.b16 %v4344
    %v5248 = vunpack.c.l.b16 %v4345
    %v5249 = vunpack.c.l.b16 %v4346
    %v5250 = vunpack.c.l.b16 %v4347
    %v5251 = vunpack.c.l.b16 %v4348
    %v5252 = vunpack.c.l.b16 %v4349
    %v5253 = vunpack.c.l.b16 %v4350
    %v5254 = vunpack.c.l.b16 %v4351
    %v5255 = vunpack.c.l.b16 %v4352
    %v5256 = vunpack.c.l.b16 %v4353
    %v5257 = vunpack.c.l.b16 %v4354
    %v5258 = vunpack.c.l.b16 %v4355
    %v5259 = vunpack.c.l.b16 %v4356
    %v5260 = vunpack.c.l.b16 %v4357
    %v5261 = vunpack.c.l.b16 %v4358
    %v5262 = vunpack.c.l.b16 %v4359
    %v5263 = vunpack.c.l.b16 %v4360
    %v5264 = vunpack.c.l.b16 %v4361
    %v5265 = vunpack.c.l.b16 %v4362
    %v5266 = vunpack.c.l.b16 %v4363
    %v5267 = vunpack.c.l.b16 %v4364
    %v5268 = vunpack.c.l.b16 %v4365
    %v5269 = vunpack.c.l.b16 %v4366
    %v5270 = vunpack.c.l.b16 %v4367
    %v5271 = vunpack.c.l.b16 %v4368
    %v5272 = vunpack.c.l.b16 %v4369
    %v5273 = vunpack.c.l.b16 %v4370
    %v5274 = vunpack.c.l.b16 %v4371
    %v5275 = vunpack.c.l.b16 %v4372
    %v5276 = vunpack.c.l.b16 %v4373
    %v5277 = vunpack.c.l.b16 %v4374
    %v5278 = vunpack.c.l.b16 %v4375
    %v5279 = vunpack.c.l.b16 %v4376
    %v5280 = vunpack.c.l.b16 %v4377
    %v5281 = vunpack.c.l.b16 %v4378
    %v5282 = vunpack.c.l.b16 %v4379
    %v5283 = vunpack.c.l.b16 %v4380
    %v5284 = vunpack.c.l.b16 %v4381
    %v5285 = vunpack.c.l.b16 %v4382
    %v5286 = vunpack.c.l.b16 %v4383
    %v5287 = vunpack.c.l.b16 %v4384
    %v5288 = vunpack.c.l.b16 %v4385
    %v5289 = vunpack.c.l.b16 %v4386
    %v5290 = vunpack.c.l.b16 %v4387
    %v5291 = vunpack.c.l.b16 %v4388
    %v5292 = vunpack.c.l.b16 %v4389
    %v5293 = vunpack.c.l.b16 %v4390
    %v5294 = vunpack.c.l.b16 %v4391
    %v5295 = vunpack.c.l.b16 %v4392
    %v5296 = vunpack.c.l.b16 %v4393
    %v5297 = vunpack.c.l.b16 %v4394
    %v5298 = vunpack.c.l.b16 %v4395
    %v5299 = vunpack.c.l.b16 %v4396
    %v5300 = vunpack.c.l.b16 %v4397
    %v5301 = vunpack.c.l.b16 %v4398
    %v5302 = vunpack.c.l.b16 %v4399
    %v5303 = vunpack.c.l.b16 %v4400
    %v5304 = vunpack.c.l.b16 %v4401
    %v5305 = vunpack.c.l.b16 %v4402
    %v5306 = vunpack.c.l.b16 %v4403
    %v5307 = vunpack.c.l.b16 %v4404
    %v5308 = vunpack.c.l.b16 %v4405
    %v5309 = vunpack.c.l.b16 %v4406
    %v5310 = vunpack.c.l.b16 %v4407
    %v5311 = vunpack.c.l.b16 %v4408
    %v5312 = vunpack.c.l.b16 %v4409
    %v5313 = vunpack.c.l.b16 %v4410
    %v5314 = vunpack.c.l.b16 %v4411
    %v5315 = vunpack.c.l.b16 %v4412
    %v5316 = vunpack.c.l.b16 %v4413
    %v5317 = vunpack.c.l.b16 %v4414
    %v5318 = vunpack.c.l.b16 %v4415
    %v5319 = vunpack.c.l.b16 %v4416
    %v5320 = vunpack.c.l.b16 %v4417
    %v5321 = vunpack.c.l.b16 %v4418
    %v5322 = vunpack.c.l.b16 %v4419
    %v5323 = vunpack.c.l.b16 %v4420
    %v5324 = vunpack.c.l.b16 %v4421
    %v5325 = vunpack.c.l.b16 %v4422
    %v5326 = vunpack.c.l.b16 %v4423
    %v5327 = vunpack.c.l.b16 %v4424
    %v5328 = vunpack.c.l.b16 %v4425
    %v5329 = vunpack.c.l.b16 %v4426
    %v5330 = vunpack.c.l.b16 %v4427
    %v5331 = vunpack.c.l.b16 %v4428
    %v5332 = vunpack.c.l.b16 %v4429
    %v5333 = vunpack.c.l.b16 %v4430
    %v5334 = vunpack.c.l.b16 %v4431
    %v5335 = vunpack.c.l.b16 %v4432
    %v5336 = vunpack.c.l.b16 %v4433
    %v5337 = vunpack.c.l.b16 %v4434
    %v5338 = vunpack.c.l.b16 %v4435
    %v5339 = vunpack.c.l.b16 %v4436
    %v5340 = vunpack.c.l.b16 %v4437
    %v5341 = vunpack.c.l.b16 %v4438
    %v5342 = vunpack.c.l.b16 %v4439
    %v5343 = vunpack.c.l.b16 %v4440
    %v5344 = vunpack.c.l.b16 %v4441
    %v5345 = vunpack.c.l.b16 %v4442
    %v5346 = vunpack.c.l.b16 %v4443
    %v5347 = vunpack.c.l.b16 %v4444
    %v5348 = vunpack.c.l.b16 %v4445
    %v5349 = vunpack.c.l.b16 %v4446
    %v5350 = vunpack.c.l.b16 %v4447
    %v5351 = vunpack.c.l.b16 %v4448
    %v5352 = vunpack.c.l.b16 %v4449
    %v5353 = vunpack.c.l.b16 %v4450
    %v5354 = vunpack.c.l.b16 %v4451
    %v5355 = vunpack.c.l.b16 %v4452
    %v5356 = vunpack.c.l.b16 %v4453
    %v5357 = vunpack.c.l.b16 %v4454
    %v5358 = vunpack.c.l.b16 %v4455
    %v5359 = vunpack.c.l.b16 %v4456
    %v5360 = vunpack.c.l.b16 %v4457
    %v5361 = vunpack.c.l.b16 %v4458
    %v5362 = vunpack.c.l.b16 %v4459
    %v5363 = vunpack.c.l.b16 %v4460
    %v5364 = vunpack.c.l.b16 %v4461
    %v5365 = vunpack.c.l.b16 %v4462
    %v5366 = vunpack.c.l.b16 %v4463
    %v5367 = vunpack.c.l.b16 %v4464
    %v5368 = vunpack.c.l.b16 %v4465
    %v5369 = vunpack.c.l.b16 %v4466
    %v5370 = vunpack.c.l.b16 %v4467
    %v5371 = vunpack.c.l.b16 %v4468
    %v5372 = vunpack.c.l.b16 %v4469
    %v5373 = vunpack.c.l.b16 %v4470
    %v5374 = vunpack.c.l.b16 %v4471
    %v5375 = vunpack.c.l.b16 %v4472
    %v5376 = vunpack.c.l.b16 %v4473
    %v5377 = vunpack.c.l.b16 %v4474
    %v5378 = vunpack.c.l.b16 %v4475
    %v5379 = vunpack.c.l.b16 %v4476
    %v5380 = vunpack.c.l.b16 %v4477
    %v5381 = vunpack.c.l.b16 %v4478
    %v5382 = vunpack.c.l.b16 %v4479
    %v5383 = vunpack.c.l.b16 %v4480
    %v5384 = vunpack.c.l.b16 %v4481
    %v5385 = vunpack.c.l.b16 %v4482
    %v5386 = vunpack.c.l.b16 %v4483
    %v5387 = vunpack.c.l.b16 %v4484
    %v5388 = vunpack.c.l.b16 %v4485
    %v5389 = vunpack.c.l.b16 %v4486
    %v5390 = vunpack.c.l.b16 %v4487
    %v5391 = vunpack.c.l.b16 %v4488
    %v5392 = vunpack.c.l.b16 %v4489
    %v5393 = vunpack.c.l.b16 %v4490
    %v5394 = vunpack.c.l.b16 %v4491
    %v5395 = vunpack.c.l.b16 %v4492
    %v5396 = vunpack.c.l.b16 %v4493
    %v5397 = vunpack.c.l.b16 %v4494
    %v5398 = vunpack.c.l.b16 %v4495
    %v5399 = vunpack.c.l.b16 %v4496
    %v5400 = vunpack.c.l.b16 %v4497
    %v5401 = vunpack.c.l.b16 %v4498
    %v5402 = vunpack.c.l.b16 %v4499
    %v5403 = vunpack.c.l.b16 %v4500
    %v5404 = vunpack.c.l.b16 %v4501
    %v5405 = vunpack.c.l.b16 %v4502
    %v5406 = vunpack.c.l.b16 %v4503
    %v5407 = vunpack.c.l.b16 %v4504
    %v5408 = vunpack.c.l.b16 %v4505
    %v5409 = vunpack.c.l.b16 %v4506
    %v5410 = vunpack.c.l.b16 %v4507
    %v5411 = vunpack.c.l.b16 %v4508
    %v5412 = vunpack.c.l.b16 %v4509
    %v5413 = vunpack.c.l.b16 %v4510
    %v5414 = vunpack.c.l.b16 %v4511
    %v5415 = vunpack.c.l.b16 %v4512
    %v5416 = vunpack.c.l.b16 %v4513
    %v5417 = vunpack.c.l.b16 %v4514
    %v5418 = vunpack.c.l.b16 %v4515
    %v5419 = vunpack.c.l.b16 %v4516
    %v5420 = vunpack.c.l.b16 %v4517
    %v5421 = vunpack.c.l.b16 %v4518
    %v5422 = vunpack.c.l.b16 %v4519
    %v5423 = vunpack.c.l.b16 %v4520
    %v5424 = vunpack.c.l.b16 %v4521
    %v5425 = vunpack.c.l.b16 %v4522
    %v5426 = vunpack.c.l.b16 %v4523
    %v5427 = vunpack.c.l.b16 %v4524
    %v5428 = vunpack.c.l.b16 %v4525
    %v5429 = vunpack.c.l.b16 %v4526
    %v5430 = vunpack.c.l.b16 %v4527
    %v5431 = vunpack.c.l.b16 %v4528
    %v5432 = vunpack.c.l.b16 %v4529
    %v5433 = vunpack.c.l.b16 %v4530
    %v5434 = vunpack.c.l.b16 %v4531
    %v5435 = vunpack.c.l.b16 %v4532
    %v5436 = vunpack.c.l.b16 %v4533
    %v5437 = vunpack.c.l.b16 %v4534
    %v5438 = vunpack.c.l.b16 %v4535
    %v5439 = vunpack.c.l.b16 %v4536
    %v5440 = vunpack.c.l.b16 %v4537
    %v5441 = vunpack.c.l.b16 %v4538
    %v5442 = vunpack.c.l.b16 %v4539
    %v5443 = vunpack.c.l.b16 %v4540
    %v5444 = vunpack.c.l.b16 %v4541
    %v5445 = vunpack.c.l.b16 %v4542
    %v5446 = vunpack.c.l.b16 %v4543
    %v5447 = vunpack.c.l.b16 %v4544
    %v5448 = vunpack.c.l.b16 %v4545
    %v5449 = vunpack.c.l.b16 %v4546
    %v5450 = vunpack.c.l.b16 %v4547
    %v5451 = vunpack.c.l.b16 %v4548
    %v5452 = vunpack.c.l.b16 %v4549
    %v5453 = vunpack.c.l.b16 %v4550
    %v5454 = vunpack.c.l.b16 %v4551
    %v5455 = vunpack.c.l.b16 %v4552
    %v5456 = vunpack.c.l.b16 %v4553
    %v5457 = vunpack.c.l.b16 %v4554
    %v5458 = vunpack.c.l.b16 %v4555
    %v5459 = vunpack.c.l.b16 %v4556
    %v5460 = vunpack.c.l.b16 %v4557
    %v5461 = vunpack.c.l.b16 %v4558
    %v5462 = vunpack.c.l.b16 %v4559
    %v5463 = vunpack.c.l.b16 %v4560
    %v5464 = vunpack.c.l.b16 %v4561
    %v5465 = vunpack.c.l.b16 %v4562
    %v5466 = vunpack.c.l.b16 %v4563
    %v5467 = vunpack.c.l.b16 %v4564
    %v5468 = vunpack.c.l.b16 %v4565
    %v5469 = vunpack.c.l.b16 %v4566
    %v5470 = vunpack.c.l.b16 %v4567
    %v5471 = vunpack.c.l.b16 %v4568
    %v5472 = vunpack.c.l.b16 %v4569
    %v5473 = vunpack.c.l.b16 %v4570
    %v5474 = vunpack.c.l.b16 %v4571
    %v5475 = vunpack.c.l.b16 %v4572
    %v5476 = vunpack.c.l.b16 %v4573
    %v5477 = vunpack.c.l.b16 %v4574
    %v5478 = vunpack.c.l.b16 %v4575
    %v5479 = vunpack.c.l.b16 %v4576
    %v5480 = vunpack.c.l.b16 %v4577
    %v5481 = vunpack.c.l.b16 %v4578
    %v5482 = vunpack.c.l.b16 %v4579
    %v5483 = vunpack.c.l.b16 %v4580
    %v5484 = vunpack.c.l.b16 %v4581
    %v5485 = vunpack.c.l.b16 %v4582
    %v5486 = vunpack.c.l.b16 %v4583
    %v5487 = vunpack.c.l.b16 %v4584
    %v5488 = vunpack.c.l.b16 %v4585
    %v5489 = vunpack.c.l.b16 %v4586
    %v5490 = vunpack.c.l.b16 %v4587
    %v5491 = vunpack.c.l.b16 %v4588
    %v5492 = vunpack.c.l.b16 %v4589
    %v5493 = vunpack.c.l.b16 %v4590
    %v5494 = vunpack.c.l.b16 %v4591
    %v5495 = vunpack.c.l.b16 %v4592
    %v5496 = vunpack.c.l.b16 %v4593
    %v5497 = vunpack.c.l.b16 %v4594
    %v5498 = vunpack.c.l.b16 %v4595
    %v5499 = vunpack.c.l.b16 %v4596
    %v5500 = vunpack.c.l.b16 %v4597
    %v5501 = vunpack.c.l.b16 %v4598
    %v5502 = vunpack.c.l.b16 %v4599
    %v5503 = vunpack.c.l.b16 %v4600
    %v5504 = vunpack.c.l.b16 %v4601
    %v5505 = vunpack.c.l.b16 %v4602
    %v5506 = vunpack.c.l.b16 %v4603
    %v5507 = vunpack.c.l.b16 %v4604
    %v5508 = vunpack.c.l.b16 %v4605
    %v5509 = vunpack.c.l.b16 %v4606
    %v5510 = vunpack.c.l.b16 %v4607
    %v5511 = vunpack.c.l.b16 %v4608
    %v5512 = vunpack.c.l.b16 %v4609
    %v5513 = vunpack.c.l.b16 %v4610
    %v5514 = vunpack.c.l.b16 %v4611
    %v5515 = vunpack.c.l.b16 %v4612
    %v5516 = vunpack.c.l.b16 %v4613
    %v5517 = vunpack.c.l.b16 %v4614
    %v5518 = vunpack.c.l.b16 %v4615
    %v5519 = vunpack.c.l.b16 %v4616
    %v5520 = vunpack.c.l.b16 %v4617
    %v5521 = vunpack.c.l.b16 %v4618
    %v5522 = vunpack.c.l.b16 %v4619
    %v5523 = vunpack.c.l.b16 %v4620
    %v5524 = vunpack.c.l.b16 %v4621
    %v5525 = vunpack.c.l.b16 %v4622
    %v5526 = vunpack.c.l.b16 %v4623
    %v5527 = vunpack.c.l.b16 %v4624
    %v5528 = vunpack.c.l.b16 %v4625
    %v5529 = vunpack.c.l.b16 %v4626
    %v5530 = vunpack.c.l.b16 %v4627
    %v5531 = vunpack.c.l.b16 %v4628
    %v5532 = vunpack.c.l.b16 %v4629
    %v5533 = vunpack.c.l.b16 %v4630
    %v5534 = vunpack.c.l.b16 %v4631
    %v5535 = vunpack.c.l.b16 %v4632
    %v5536 = vunpack.c.l.b16 %v4633
    %v5537 = vunpack.c.l.b16 %v4634
    %v5538 = vunpack.c.l.b16 %v4635
    %v5539 = vunpack.c.l.b16 %v4636
    %v5540 = vunpack.c.l.b16 %v4637
    %v5541 = vunpack.c.l.b16 %v4638
    %v5542 = vunpack.c.l.b16 %v4639
    %v5543 = vunpack.c.l.b16 %v4640
    %v5544 = vunpack.c.l.b16 %v4641
    %v5545 = vunpack.c.l.b16 %v4642
    %v5546 = vunpack.c.l.b16 %v4643
    %v5547 = vunpack.c.l.b16 %v4644
    %v5548 = vunpack.c.l.b16 %v4645
    %v5549 = vunpack.c.l.b16 %v4646
    %v5550 = vunpack.c.l.b16 %v4647
    %v5551 = vunpack.c.l.b16 %v4648
    %v5552 = vunpack.c.l.b16 %v4649
    %v5553 = vunpack.c.l.b16 %v4650
    %v5554 = vunpack.c.l.b16 %v4651
    %v5555 = vunpack.c.l.b16 %v4652
    %v5556 = vunpack.c.l.b16 %v4653
    %v5557 = vunpack.c.l.b16 %v4654
    %v5558 = vunpack.c.l.b16 %v4655
    %v5559 = vunpack.c.l.b16 %v4656
    %v5560 = vunpack.c.l.b16 %v4657
    %v5561 = vunpack.c.l.b16 %v4658
    %v5562 = vunpack.c.l.b16 %v4659
    %v5563 = vunpack.c.l.b16 %v4660
    %v5564 = vunpack.c.l.b16 %v4661
    %v5565 = vunpack.c.l.b16 %v4662
    %v5566 = vunpack.c.l.b16 %v4663
    %v5567 = vunpack.c.l.b16 %v4664
    %v5568 = vunpack.c.l.b16 %v4665
    %v5569 = vunpack.c.l.b16 %v4666
    %v5570 = vunpack.c.l.b16 %v4667
    %v5571 = vunpack.c.l.b16 %v4668
    %v5572 = vunpack.c.l.b16 %v4669
    %v5573 = vunpack.c.l.b16 %v4670
    %v5574 = vunpack.c.l.b16 %v4671
    %v5575 = vunpack.c.l.b16 %v4672
    %v5576 = vunpack.c.l.b16 %v4673
    %v5577 = vunpack.c.l.b16 %v4674
    %v5578 = vunpack.c.l.b16 %v4675
    %v5579 = vunpack.c.l.b16 %v4676
    %v5580 = vunpack.c.l.b16 %v4677
    %v5581 = vunpack.c.l.b16 %v4678
    %v5582 = vunpack.c.l.b16 %v4679
    %v5583 = vunpack.c.l.b16 %v4680
    %v5584 = vunpack.c.l.b16 %v4681
    %v5585 = vunpack.c.l.b16 %v4682
    %v5586 = vunpack.c.l.b16 %v4683
    %v5587 = vunpack.c.l.b16 %v4684
    %v5588 = vunpack.c.l.b16 %v4685
    %v5589 = vunpack.c.l.b16 %v4686
    %v5590 = vunpack.c.l.b16 %v4687
    %v5591 = vunpack.c.l.b16 %v4688
    %v5592 = vunpack.c.l.b16 %v4689
    %v5593 = vunpack.c.l.b16 %v4690
    %v5594 = vunpack.c.l.b16 %v4691
    %v5595 = vunpack.c.l.b16 %v4692
    %v5596 = vunpack.c.l.b16 %v4693
    %v5597 = vunpack.c.l.b16 %v4694
    %v5598 = vunpack.c.l.b16 %v4695
    %v5599 = vunpack.c.l.b16 %v4696
    %v5600 = vunpack.c.l.b16 %v4697
    %v5601 = vunpack.c.l.b16 %v4698
    %v5602 = vunpack.c.l.b16 %v4699
    %v5603 = vunpack.c.l.b16 %v4700
    %v5604 = vunpack.c.l.b16 %v4701
    %v5605 = vunpack.c.l.b16 %v4702
    %v5606 = vunpack.c.l.b16 %v4703
    %v5607 = vunpack.c.l.b16 %v4704
    %v5608 = vunpack.c.l.b16 %v4705
    %v5609 = vunpack.c.l.b16 %v4706
    %v5610 = vunpack.c.l.b16 %v4707
    %v5611 = vunpack.c.l.b16 %v4708
    %v5612 = vunpack.c.l.b16 %v4709
    %v5613 = vunpack.c.l.b16 %v4710
    %v5614 = vunpack.c.l.b16 %v4711
    %v5615 = vunpack.c.l.b16 %v4712
    %v5616 = vunpack.c.l.b16 %v4713
    %v5617 = vunpack.c.l.b16 %v4714
    %v5618 = vunpack.c.l.b16 %v4715
    %v5619 = vunpack.c.l.b16 %v4716
    %v5620 = vunpack.c.l.b16 %v4717
    %v5621 = vunpack.c.l.b16 %v4718
    %v5622 = vunpack.c.l.b16 %v4719
    %v5623 = vunpack.c.l.b16 %v4720
    %v5624 = vunpack.c.l.b16 %v4721
    %v5625 = vunpack.c.l.b16 %v4722
    %v5626 = vunpack.c.l.b16 %v4723
    %v5627 = vunpack.c.l.b16 %v4724
    %v5628 = vunpack.c.l.b16 %v4725
    %v5629 = vunpack.c.l.b16 %v4726
    %v5630 = vunpack.c.l.b16 %v4727
    %v5631 = vunpack.c.l.b16 %v4728
    %v5632 = vunpack.c.l.b16 %v4729
    %v5633 = vunpack.c.l.b16 %v4730
    %v5634 = vunpack.c.l.b16 %v4731
    %v5635 = vunpack.c.l.b16 %v4732
    %v5636 = vunpack.c.l.b16 %v4733
    %v5637 = vunpack.c.l.b16 %v4734
    %v5638 = vunpack.c.l.b16 %v4735
    %v5639 = vunpack.c.l.b16 %v4736
    %v5640 = vunpack.c.l.b16 %v4737
    %v5641 = vunpack.c.l.b16 %v4738
    %v5642 = vunpack.c.l.b16 %v4739
    %v5643 = vunpack.c.l.b16 %v4740
    %v5644 = vunpack.c.l.b16 %v4741
    %v5645 = vunpack.c.l.b16 %v4742
    %v5646 = vunpack.c.l.b16 %v4743
    %v5647 = vpack.c.b16 %v5200, %v5199
    %v5648 = vpack.c.b16 %v5202, %v5201
    %v5649 = vpack.c.b16 %v5204, %v5203
    %v5650 = vpack.c.b16 %v5206, %v5205
    %v5651 = vpack.c.b16 %v5208, %v5207
    %v5652 = vpack.c.b16 %v5210, %v5209
    %v5653 = vpack.c.b16 %v5212, %v5211
    %v5654 = vpack.c.b16 %v5214, %v5213
    %v5655 = vpack.c.b16 %v5216, %v5215
    %v5656 = vpack.c.b16 %v5218, %v5217
    %v5657 = vpack.c.b16 %v5220, %v5219
    %v5658 = vpack.c.b16 %v5222, %v5221
    %v5659 = vpack.c.b16 %v5224, %v5223
    %v5660 = vpack.c.b16 %v5226, %v5225
    %v5661 = vpack.c.b16 %v5228, %v5227
    %v5662 = vpack.c.b16 %v5230, %v5229
    %v5663 = vpack.c.b16 %v5232, %v5231
    %v5664 = vpack.c.b16 %v5234, %v5233
    %v5665 = vpack.c.b16 %v5236, %v5235
    %v5666 = vpack.c.b16 %v5238, %v5237
    %v5667 = vpack.c.b16 %v5240, %v5239
    %v5668 = vpack.c.b16 %v5242, %v5241
    %v5669 = vpack.c.b16 %v5244, %v5243
    %v5670 = vpack.c.b16 %v5246, %v5245
    %v5671 = vpack.c.b16 %v5248, %v5247
    %v5672 = vpack.c.b16 %v5250, %v5249
    %v5673 = vpack.c.b16 %v5252, %v5251
    %v5674 = vpack.c.b16 %v5254, %v5253
    %v5675 = vpack.c.b16 %v5256, %v5255
    %v5676 = vpack.c.b16 %v5258, %v5257
    %v5677 = vpack.c.b16 %v5260, %v5259
    %v5678 = vpack.c.b16 %v5262, %v5261
    %v5679 = vpack.c.b16 %v5264, %v5263
    %v5680 = vpack.c.b16 %v5266, %v5265
    %v5681 = vpack.c.b16 %v5268, %v5267
    %v5682 = vpack.c.b16 %v5270, %v5269
    %v5683 = vpack.c.b16 %v5272, %v5271
    %v5684 = vpack.c.b16 %v5274, %v5273
    %v5685 = vpack.c.b16 %v5276, %v5275
    %v5686 = vpack.c.b16 %v5278, %v5277
    %v5687 = vpack.c.b16 %v5280, %v5279
    %v5688 = vpack.c.b16 %v5282, %v5281
    %v5689 = vpack.c.b16 %v5284, %v5283
    %v5690 = vpack.c.b16 %v5286, %v5285
    %v5691 = vpack.c.b16 %v5288, %v5287
    %v5692 = vpack.c.b16 %v5290, %v5289
    %v5693 = vpack.c.b16 %v5292, %v5291
    %v5694 = vpack.c.b16 %v5294, %v5293
    %v5695 = vpack.c.b16 %v5296, %v5295
    %v5696 = vpack.c.b16 %v5298, %v5297
    %v5697 = vpack.c.b16 %v5300, %v5299
    %v5698 = vpack.c.b16 %v5302, %v5301
    %v5699 = vpack.c.b16 %v5304, %v5303
    %v5700 = vpack.c.b16 %v5306, %v5305
    %v5701 = vpack.c.b16 %v5308, %v5307
    %v5702 = vpack.c.b16 %v5310, %v5309
    %v5703 = vpack.c.b16 %v5312, %v5311
    %v5704 = vpack.c.b16 %v5314, %v5313
    %v5705 = vpack.c.b16 %v5316, %v5315
    %v5706 = vpack.c.b16 %v5318, %v5317
    %v5707 = vpack.c.b16 %v5320, %v5319
    %v5708 = vpack.c.b16 %v5322, %v5321
    %v5709 = vpack.c.b16 %v5324, %v5323
    %v5710 = vpack.c.b16 %v5326, %v5325
    %v5711 = vpack.c.b16 %v5328, %v5327
    %v5712 = vpack.c.b16 %v5330, %v5329
    %v5713 = vpack.c.b16 %v5332, %v5331
    %v5714 = vpack.c.b16 %v5334, %v5333
    %v5715 = vpack.c.b16 %v5336, %v5335
    %v5716 = vpack.c.b16 %v5338, %v5337
    %v5717 = vpack.c.b16 %v5340, %v5339
    %v5718 = vpack.c.b16 %v5342, %v5341
    %v5719 = vpack.c.b16 %v5344, %v5343
    %v5720 = vpack.c.b16 %v5346, %v5345
    %v5721 = vpack.c.b16 %v5348, %v5347
    %v5722 = vpack.c.b16 %v5350, %v5349
    %v5723 = vpack.c.b16 %v5352, %v5351
    %v5724 = vpack.c.b16 %v5354, %v5353
    %v5725 = vpack.c.b16 %v5356, %v5355
    %v5726 = vpack.c.b16 %v5358, %v5357
    %v5727 = vpack.c.b16 %v5360, %v5359
    %v5728 = vpack.c.b16 %v5362, %v5361
    %v5729 = vpack.c.b16 %v5364, %v5363
    %v5730 = vpack.c.b16 %v5366, %v5365
    %v5731 = vpack.c.b16 %v5368, %v5367
    %v5732 = vpack.c.b16 %v5370, %v5369
    %v5733 = vpack.c.b16 %v5372, %v5371
    %v5734 = vpack.c.b16 %v5374, %v5373
    %v5735 = vpack.c.b16 %v5376, %v5375
    %v5736 = vpack.c.b16 %v5378, %v5377
    %v5737 = vpack.c.b16 %v5380, %v5379
    %v5738 = vpack.c.b16 %v5382, %v5381
    %v5739 = vpack.c.b16 %v5384, %v5383
    %v5740 = vpack.c.b16 %v5386, %v5385
    %v5741 = vpack.c.b16 %v5388, %v5387
    %v5742 = vpack.c.b16 %v5390, %v5389
    %v5743 = vpack.c.b16 %v5392, %v5391
    %v5744 = vpack.c.b16 %v5394, %v5393
    %v5745 = vpack.c.b16 %v5396, %v5395
    %v5746 = vpack.c.b16 %v5398, %v5397
    %v5747 = vpack.c.b16 %v5400, %v5399
    %v5748 = vpack.c.b16 %v5402, %v5401
    %v5749 = vpack.c.b16 %v5404, %v5403
    %v5750 = vpack.c.b16 %v5406, %v5405
    %v5751 = vpack.c.b16 %v5408, %v5407
    %v5752 = vpack.c.b16 %v5410, %v5409
    %v5753 = vpack.c.b16 %v5412, %v5411
    %v5754 = vpack.c.b16 %v5414, %v5413
    %v5755 = vpack.c.b16 %v5416, %v5415
    %v5756 = vpack.c.b16 %v5418, %v5417
    %v5757 = vpack.c.b16 %v5420, %v5419
    %v5758 = vpack.c.b16 %v5422, %v5421
    %v5759 = vpack.c.b16 %v5424, %v5423
    %v5760 = vpack.c.b16 %v5426, %v5425
    %v5761 = vpack.c.b16 %v5428, %v5427
    %v5762 = vpack.c.b16 %v5430, %v5429
    %v5763 = vpack.c.b16 %v5432, %v5431
    %v5764 = vpack.c.b16 %v5434, %v5433
    %v5765 = vpack.c.b16 %v5436, %v5435
    %v5766 = vpack.c.b16 %v5438, %v5437
    %v5767 = vpack.c.b16 %v5440, %v5439
    %v5768 = vpack.c.b16 %v5442, %v5441
    %v5769 = vpack.c.b16 %v5444, %v5443
    %v5770 = vpack.c.b16 %v5446, %v5445
    %v5771 = vpack.c.b16 %v5448, %v5447
    %v5772 = vpack.c.b16 %v5450, %v5449
    %v5773 = vpack.c.b16 %v5452, %v5451
    %v5774 = vpack.c.b16 %v5454, %v5453
    %v5775 = vpack.c.b16 %v5456, %v5455
    %v5776 = vpack.c.b16 %v5458, %v5457
    %v5777 = vpack.c.b16 %v5460, %v5459
    %v5778 = vpack.c.b16 %v5462, %v5461
    %v5779 = vpack.c.b16 %v5464, %v5463
    %v5780 = vpack.c.b16 %v5466, %v5465
    %v5781 = vpack.c.b16 %v5468, %v5467
    %v5782 = vpack.c.b16 %v5470, %v5469
    %v5783 = vpack.c.b16 %v5472, %v5471
    %v5784 = vpack.c.b16 %v5474, %v5473
    %v5785 = vpack.c.b16 %v5476, %v5475
    %v5786 = vpack.c.b16 %v5478, %v5477
    %v5787 = vpack.c.b16 %v5480, %v5479
    %v5788 = vpack.c.b16 %v5482, %v5481
    %v5789 = vpack.c.b16 %v5484, %v5483
    %v5790 = vpack.c.b16 %v5486, %v5485
    %v5791 = vpack.c.b16 %v5488, %v5487
    %v5792 = vpack.c.b16 %v5490, %v5489
    %v5793 = vpack.c.b16 %v5492, %v5491
    %v5794 = vpack.c.b16 %v5494, %v5493
    %v5795 = vpack.c.b16 %v5496, %v5495
    %v5796 = vpack.c.b16 %v5498, %v5497
    %v5797 = vpack.c.b16 %v5500, %v5499
    %v5798 = vpack.c.b16 %v5502, %v5501
    %v5799 = vpack.c.b16 %v5504, %v5503
    %v5800 = vpack.c.b16 %v5506, %v5505
    %v5801 = vpack.c.b16 %v5508, %v5507
    %v5802 = vpack.c.b16 %v5510, %v5509
    %v5803 = vpack.c.b16 %v5512, %v5511
    %v5804 = vpack.c.b16 %v5514, %v5513
    %v5805 = vpack.c.b16 %v5516, %v5515
    %v5806 = vpack.c.b16 %v5518, %v5517
    %v5807 = vpack.c.b16 %v5520, %v5519
    %v5808 = vpack.c.b16 %v5522, %v5521
    %v5809 = vpack.c.b16 %v5524, %v5523
    %v5810 = vpack.c.b16 %v5526, %v5525
    %v5811 = vpack.c.b16 %v5528, %v5527
    %v5812 = vpack.c.b16 %v5530, %v5529
    %v5813 = vpack.c.b16 %v5532, %v5531
    %v5814 = vpack.c.b16 %v5534, %v5533
    %v5815 = vpack.c.b16 %v5536, %v5535
    %v5816 = vpack.c.b16 %v5538, %v5537
    %v5817 = vpack.c.b16 %v5540, %v5539
    %v5818 = vpack.c.b16 %v5542, %v5541
    %v5819 = vpack.c.b16 %v5544, %v5543
    %v5820 = vpack.c.b16 %v5546, %v5545
    %v5821 = vpack.c.b16 %v5548, %v5547
    %v5822 = vpack.c.b16 %v5550, %v5549
    %v5823 = vpack.c.b16 %v5552, %v5551
    %v5824 = vpack.c.b16 %v5554, %v5553
    %v5825 = vpack.c.b16 %v5556, %v5555
    %v5826 = vpack.c.b16 %v5558, %v5557
    %v5827 = vpack.c.b16 %v5560, %v5559
    %v5828 = vpack.c.b16 %v5562, %v5561
    %v5829 = vpack.c.b16 %v5564, %v5563
    %v5830 = vpack.c.b16 %v5566, %v5565
    %v5831 = vpack.c.b16 %v5568, %v5567
    %v5832 = vpack.c.b16 %v5570, %v5569
    %v5833 = vpack.c.b16 %v5572, %v5571
    %v5834 = vpack.c.b16 %v5574, %v5573
    %v5835 = vpack.c.b16 %v5576, %v5575
    %v5836 = vpack.c.b16 %v5578, %v5577
    %v5837 = vpack.c.b16 %v5580, %v5579
    %v5838 = vpack.c.b16 %v5582, %v5581
    %v5839 = vpack.c.b16 %v5584, %v5583
    %v5840 = vpack.c.b16 %v5586, %v5585
    %v5841 = vpack.c.b16 %v5588, %v5587
    %v5842 = vpack.c.b16 %v5590, %v5589
    %v5843 = vpack.c.b16 %v5592, %v5591
    %v5844 = vpack.c.b16 %v5594, %v5593
    %v5845 = vpack.c.b16 %v5596, %v5595
    %v5846 = vpack.c.b16 %v5598, %v5597
    %v5847 = vpack.c.b16 %v5600, %v5599
    %v5848 = vpack.c.b16 %v5602, %v5601
    %v5849 = vpack.c.b16 %v5604, %v5603
    %v5850 = vpack.c.b16 %v5606, %v5605
    %v5851 = vpack.c.b16 %v5608, %v5607
    %v5852 = vpack.c.b16 %v5610, %v5609
    %v5853 = vpack.c.b16 %v5612, %v5611
    %v5854 = vpack.c.b16 %v5614, %v5613
    %v5855 = vpack.c.b16 %v5616, %v5615
    %v5856 = vpack.c.b16 %v5618, %v5617
    %v5857 = vpack.c.b16 %v5620, %v5619
    %v5858 = vpack.c.b16 %v5622, %v5621
    %v5859 = vpack.c.b16 %v5624, %v5623
    %v5860 = vpack.c.b16 %v5626, %v5625
    %v5861 = vpack.c.b16 %v5628, %v5627
    %v5862 = vpack.c.b16 %v5630, %v5629
    %v5863 = vpack.c.b16 %v5632, %v5631
    %v5864 = vpack.c.b16 %v5634, %v5633
    %v5865 = vpack.c.b16 %v5636, %v5635
    %v5866 = vpack.c.b16 %v5638, %v5637
    %v5867 = vpack.c.b16 %v5640, %v5639
    %v5868 = vpack.c.b16 %v5642, %v5641
    %v5869 = vpack.c.b16 %v5644, %v5643
    %v5870 = vpack.c.b16 %v5646, %v5645
    %6095 = vmatprep.subr.bf16.mxu0 0
    %6096 = vmatpush1.bf16.msra.mxu0 %v5647
    %6097 = vmatprep.subr.bf16.mxu0 0
    %6098 = vmatpush1.bf16.msra.mxu0 %v5648
    %6099 = vmatprep.subr.bf16.mxu0 0
    %6100 = vmatpush1.bf16.msra.mxu0 %v5649
    %6101 = vmatprep.subr.bf16.mxu0 0
    %6102 = vmatpush1.bf16.msra.mxu0 %v5650
    %6103 = vmatprep.subr.bf16.mxu0 0
    %6104 = vmatpush1.bf16.msra.mxu0 %v5651
    %6105 = vmatprep.subr.bf16.mxu0 0
    %6106 = vmatpush1.bf16.msra.mxu0 %v5652
    %6107 = vmatprep.subr.bf16.mxu0 0
    %6108 = vmatpush1.bf16.msra.mxu0 %v5653
    %6109 = vmatprep.subr.bf16.mxu0 0
    %6110 = vmatpush1.bf16.msra.mxu0 %v5654
    %6111 = vmatprep.subr.bf16.mxu0 0
    %6112 = vmatpush1.bf16.msra.mxu0 %v5655
    %6113 = vmatprep.subr.bf16.mxu0 0
    %6114 = vmatpush1.bf16.msra.mxu0 %v5656
    %6115 = vmatprep.subr.bf16.mxu0 0
    %6116 = vmatpush1.bf16.msra.mxu0 %v5657
    %6117 = vmatprep.subr.bf16.mxu0 0
    %6118 = vmatpush1.bf16.msra.mxu0 %v5658
    %6119 = vmatprep.subr.bf16.mxu0 0
    %6120 = vmatpush1.bf16.msra.mxu0 %v5659
    %6121 = vmatprep.subr.bf16.mxu0 0
    %6122 = vmatpush1.bf16.msra.mxu0 %v5660
    %6123 = vmatprep.subr.bf16.mxu0 0
    %6124 = vmatpush1.bf16.msra.mxu0 %v5661
    %6125 = vmatprep.subr.bf16.mxu0 0
    %6126 = vmatpush1.bf16.msra.mxu0 %v5662
    %6127 = vmatprep.mubr.bf16.mxu0 %v4241
    %6128 = vmatmul.mubr.bf16.gmra.mrb[0].mxu0 %v4240
    %v6129 = vpop.f32.mrb[0].mxu0
    %v6130 = vadd.f32 %v4749, %v6129
    %v6131 = vpop.f32.mrb[0].mxu0
    %v6132 = vpop.f32.mrb[0].mxu0
    %v6133 = vpop.f32.mrb[0].mxu0
    %6134 = vdwg.mxu0
    %6135 = vmatprep.subr.bf16.mxu0 0
    %6136 = vmatpush1.bf16.msra.mxu0 %v5663
    %6137 = vmatprep.subr.bf16.mxu0 0
    %6138 = vmatpush1.bf16.msra.mxu0 %v5664
    %6139 = vmatprep.subr.bf16.mxu0 0
    %6140 = vmatpush1.bf16.msra.mxu0 %v5665
    %6141 = vmatprep.subr.bf16.mxu0 0
    %6142 = vmatpush1.bf16.msra.mxu0 %v5666
    %6143 = vmatprep.subr.bf16.mxu0 0
    %6144 = vmatpush1.bf16.msra.mxu0 %v5667
    %6145 = vmatprep.subr.bf16.mxu0 0
    %6146 = vmatpush1.bf16.msra.mxu0 %v5668
    %6147 = vmatprep.subr.bf16.mxu0 0
    %6148 = vmatpush1.bf16.msra.mxu0 %v5669
    %6149 = vmatprep.subr.bf16.mxu0 0
    %6150 = vmatpush1.bf16.msra.mxu0 %v5670
    %6151 = vmatprep.subr.bf16.mxu0 0
    %6152 = vmatpush1.bf16.msra.mxu0 %v5671
    %6153 = vmatprep.subr.bf16.mxu0 0
    %6154 = vmatpush1.bf16.msra.mxu0 %v5672
    %6155 = vmatprep.subr.bf16.mxu0 0
    %6156 = vmatpush1.bf16.msra.mxu0 %v5673
    %6157 = vmatprep.subr.bf16.mxu0 0
    %6158 = vmatpush1.bf16.msra.mxu0 %v5674
    %6159 = vmatprep.subr.bf16.mxu0 0
    %6160 = vmatpush1.bf16.msra.mxu0 %v5675
    %6161 = vmatprep.subr.bf16.mxu0 0
    %6162 = vmatpush1.bf16.msra.mxu0 %v5676
    %6163 = vmatprep.subr.bf16.mxu0 0
    %6164 = vmatpush1.bf16.msra.mxu0 %v5677
    %6165 = vmatprep.subr.bf16.mxu0 0
    %6166 = vmatpush1.bf16.msra.mxu0 %v5678
    %6167 = vmatprep.mubr.bf16.mxu0 %v4243
    %6168 = vmatmul.mubr.bf16.gmra.mrb[0].mxu0 %v4242
    %v6169 = vpop.f32.mrb[0].mxu0
    %v6170 = vadd.f32 %v6130, %v6169
    %v6171 = vpop.f32.mrb[0].mxu0
    %v6172 = vpop.f32.mrb[0].mxu0
    %v6173 = vpop.f32.mrb[0].mxu0
    %6174 = vdwg.mxu0
    %6175 = vmatprep.subr.bf16.mxu0 0
    %6176 = vmatpush1.bf16.msra.mxu0 %v5679
    %6177 = vmatprep.subr.bf16.mxu0 0
    %6178 = vmatpush1.bf16.msra.mxu0 %v5680
    %6179 = vmatprep.subr.bf16.mxu0 0
    %6180 = vmatpush1.bf16.msra.mxu0 %v5681
    %6181 = vmatprep.subr.bf16.mxu0 0
    %6182 = vmatpush1.bf16.msra.mxu0 %v5682
    %6183 = vmatprep.subr.bf16.mxu0 0
    %6184 = vmatpush1.bf16.msra.mxu0 %v5683
    %6185 = vmatprep.subr.bf16.mxu0 0
    %6186 = vmatpush1.bf16.msra.mxu0 %v5684
    %6187 = vmatprep.subr.bf16.mxu0 0
    %6188 = vmatpush1.bf16.msra.mxu0 %v5685
    %6189 = vmatprep.subr.bf16.mxu0 0
    %6190 = vmatpush1.bf16.msra.mxu0 %v5686
    %6191 = vmatprep.subr.bf16.mxu0 0
    %6192 = vmatpush1.bf16.msra.mxu0 %v5687
    %6193 = vmatprep.subr.bf16.mxu0 0
    %6194 = vmatpush1.bf16.msra.mxu0 %v5688
    %6195 = vmatprep.subr.bf16.mxu0 0
    %6196 = vmatpush1.bf16.msra.mxu0 %v5689
    %6197 = vmatprep.subr.bf16.mxu0 0
    %6198 = vmatpush1.bf16.msra.mxu0 %v5690
    %6199 = vmatprep.subr.bf16.mxu0 0
    %6200 = vmatpush1.bf16.msra.mxu0 %v5691
    %6201 = vmatprep.subr.bf16.mxu0 0
    %6202 = vmatpush1.bf16.msra.mxu0 %v5692
    %6203 = vmatprep.subr.bf16.mxu0 0
    %6204 = vmatpush1.bf16.msra.mxu0 %v5693
    %6205 = vmatprep.subr.bf16.mxu0 0
    %6206 = vmatpush1.bf16.msra.mxu0 %v5694
    %6207 = vmatprep.mubr.bf16.mxu0 %v4249
    %6208 = vmatmul.mubr.bf16.gmra.mrb[0].mxu0 %v4248
    %v6209 = vpop.f32.mrb[0].mxu0
    %v6210 = vadd.f32 %v6170, %v6209
    %v6211 = vpop.f32.mrb[0].mxu0
    %v6212 = vpop.f32.mrb[0].mxu0
    %v6213 = vpop.f32.mrb[0].mxu0
    %6214 = vdwg.mxu0
    %6215 = vmatprep.subr.bf16.mxu0 0
    %6216 = vmatpush1.bf16.msra.mxu0 %v5695
    %6217 = vmatprep.subr.bf16.mxu0 0
    %6218 = vmatpush1.bf16.msra.mxu0 %v5696
    %6219 = vmatprep.subr.bf16.mxu0 0
    %6220 = vmatpush1.bf16.msra.mxu0 %v5697
    %6221 = vmatprep.subr.bf16.mxu0 0
    %6222 = vmatpush1.bf16.msra.mxu0 %v5698
    %6223 = vmatprep.subr.bf16.mxu0 0
    %6224 = vmatpush1.bf16.msra.mxu0 %v5699
    %6225 = vmatprep.subr.bf16.mxu0 0
    %6226 = vmatpush1.bf16.msra.mxu0 %v5700
    %6227 = vmatprep.subr.bf16.mxu0 0
    %6228 = vmatpush1.bf16.msra.mxu0 %v5701
    %6229 = vmatprep.subr.bf16.mxu0 0
    %6230 = vmatpush1.bf16.msra.mxu0 %v5702
    %6231 = vmatprep.subr.bf16.mxu0 0
    %6232 = vmatpush1.bf16.msra.mxu0 %v5703
    %6233 = vmatprep.subr.bf16.mxu0 0
    %6234 = vmatpush1.bf16.msra.mxu0 %v5704
    %6235 = vmatprep.subr.bf16.mxu0 0
    %6236 = vmatpush1.bf16.msra.mxu0 %v5705
    %6237 = vmatprep.subr.bf16.mxu0 0
    %6238 = vmatpush1.bf16.msra.mxu0 %v5706
    %6239 = vmatprep.subr.bf16.mxu0 0
    %6240 = vmatpush1.bf16.msra.mxu0 %v5707
    %6241 = vmatprep.subr.bf16.mxu0 0
    %6242 = vmatpush1.bf16.msra.mxu0 %v5708
    %6243 = vmatprep.subr.bf16.mxu0 0
    %6244 = vmatpush1.bf16.msra.mxu0 %v5709
    %6245 = vmatprep.subr.bf16.mxu0 0
    %6246 = vmatpush1.bf16.msra.mxu0 %v5710
    %6247 = vmatprep.mubr.bf16.mxu0 %v4251
    %6248 = vmatmul.mubr.bf16.gmra.mrb[0].mxu0 %v4250
    %v6249 = vpop.f32.mrb[0].mxu0
    %v6250 = vadd.f32 %v6210, %v6249
    %v6251 = vpop.f32.mrb[0].mxu0
    %v6252 = vpop.f32.mrb[0].mxu0
    %v6253 = vpop.f32.mrb[0].mxu0
    %6254 = vdwg.mxu0
    %6255 = vmatprep.subr.bf16.mxu0 0
    %6256 = vmatpush1.bf16.msra.mxu0 %v5711
    %6257 = vmatprep.subr.bf16.mxu0 0
    %6258 = vmatpush1.bf16.msra.mxu0 %v5712
    %6259 = vmatprep.subr.bf16.mxu0 0
    %6260 = vmatpush1.bf16.msra.mxu0 %v5713
    %6261 = vmatprep.subr.bf16.mxu0 0
    %6262 = vmatpush1.bf16.msra.mxu0 %v5714
    %6263 = vmatprep.subr.bf16.mxu0 0
    %6264 = vmatpush1.bf16.msra.mxu0 %v5715
    %6265 = vmatprep.subr.bf16.mxu0 0
    %6266 = vmatpush1.bf16.msra.mxu0 %v5716
    %6267 = vmatprep.subr.bf16.mxu0 0
    %6268 = vmatpush1.bf16.msra.mxu0 %v5717
    %6269 = vmatprep.subr.bf16.mxu0 0
    %6270 = vmatpush1.bf16.msra.mxu0 %v5718
    %6271 = vmatprep.subr.bf16.mxu0 0
    %6272 = vmatpush1.bf16.msra.mxu0 %v5719
    %6273 = vmatprep.subr.bf16.mxu0 0
    %6274 = vmatpush1.bf16.msra.mxu0 %v5720
    %6275 = vmatprep.subr.bf16.mxu0 0
    %6276 = vmatpush1.bf16.msra.mxu0 %v5721
    %6277 = vmatprep.subr.bf16.mxu0 0
    %6278 = vmatpush1.bf16.msra.mxu0 %v5722
    %6279 = vmatprep.subr.bf16.mxu0 0
    %6280 = vmatpush1.bf16.msra.mxu0 %v5723
    %6281 = vmatprep.subr.bf16.mxu0 0
    %6282 = vmatpush1.bf16.msra.mxu0 %v5724
    %6283 = vmatprep.subr.bf16.mxu0 0
    %6284 = vmatpush1.bf16.msra.mxu0 %v5725
    %6285 = vmatprep.subr.bf16.mxu0 0
    %6286 = vmatpush1.bf16.msra.mxu0 %v5726
    %6287 = vmatprep.mubr.bf16.mxu0 %v4257
    %6288 = vmatmul.mubr.bf16.gmra.mrb[0].mxu0 %v4256
    %v6289 = vpop.f32.mrb[0].mxu0
    %v6290 = vadd.f32 %v6250, %v6289
    %v6291 = vpop.f32.mrb[0].mxu0
    %v6292 = vpop.f32.mrb[0].mxu0
    %v6293 = vpop.f32.mrb[0].mxu0
    %6294 = vdwg.mxu0
    %6295 = vmatprep.subr.bf16.mxu0 0
    %6296 = vmatpush1.bf16.msra.mxu0 %v5727
    %6297 = vmatprep.subr.bf16.mxu0 0
    %6298 = vmatpush1.bf16.msra.mxu0 %v5728
    %6299 = vmatprep.subr.bf16.mxu0 0
    %6300 = vmatpush1.bf16.msra.mxu0 %v5729
    %6301 = vmatprep.subr.bf16.mxu0 0
    %6302 = vmatpush1.bf16.msra.mxu0 %v5730
    %6303 = vmatprep.subr.bf16.mxu0 0
    %6304 = vmatpush1.bf16.msra.mxu0 %v5731
    %6305 = vmatprep.subr.bf16.mxu0 0
    %6306 = vmatpush1.bf16.msra.mxu0 %v5732
    %6307 = vmatprep.subr.bf16.mxu0 0
    %6308 = vmatpush1.bf16.msra.mxu0 %v5733
    %6309 = vmatprep.subr.bf16.mxu0 0
    %6310 = vmatpush1.bf16.msra.mxu0 %v5734
    %6311 = vmatprep.subr.bf16.mxu0 0
    %6312 = vmatpush1.bf16.msra.mxu0 %v5735
    %6313 = vmatprep.subr.bf16.mxu0 0
    %6314 = vmatpush1.bf16.msra.mxu0 %v5736
    %6315 = vmatprep.subr.bf16.mxu0 0
    %6316 = vmatpush1.bf16.msra.mxu0 %v5737
    %6317 = vmatprep.subr.bf16.mxu0 0
    %6318 = vmatpush1.bf16.msra.mxu0 %v5738
    %6319 = vmatprep.subr.bf16.mxu0 0
    %6320 = vmatpush1.bf16.msra.mxu0 %v5739
    %6321 = vmatprep.subr.bf16.mxu0 0
    %6322 = vmatpush1.bf16.msra.mxu0 %v5740
    %6323 = vmatprep.subr.bf16.mxu0 0
    %6324 = vmatpush1.bf16.msra.mxu0 %v5741
    %6325 = vmatprep.subr.bf16.mxu0 0
    %6326 = vmatpush1.bf16.msra.mxu0 %v5742
    %6327 = vmatprep.mubr.bf16.mxu0 %v4259
    %6328 = vmatmul.mubr.bf16.gmra.mrb[0].mxu0 %v4258
    %v6329 = vpop.f32.mrb[0].mxu0
    %v6330 = vadd.f32 %v6290, %v6329
    %v6331 = vpop.f32.mrb[0].mxu0
    %v6332 = vpop.f32.mrb[0].mxu0
    %v6333 = vpop.f32.mrb[0].mxu0
    %6334 = vdwg.mxu0
    %6335 = vmatprep.subr.bf16.mxu0 0
    %6336 = vmatpush1.bf16.msra.mxu0 %v5743
    %6337 = vmatprep.subr.bf16.mxu0 0
    %6338 = vmatpush1.bf16.msra.mxu0 %v5744
    %6339 = vmatprep.subr.bf16.mxu0 0
    %6340 = vmatpush1.bf16.msra.mxu0 %v5745
    %6341 = vmatprep.subr.bf16.mxu0 0
    %6342 = vmatpush1.bf16.msra.mxu0 %v5746
    %6343 = vmatprep.subr.bf16.mxu0 0
    %6344 = vmatpush1.bf16.msra.mxu0 %v5747
    %6345 = vmatprep.subr.bf16.mxu0 0
    %6346 = vmatpush1.bf16.msra.mxu0 %v5748
    %6347 = vmatprep.subr.bf16.mxu0 0
    %6348 = vmatpush1.bf16.msra.mxu0 %v5749
    %6349 = vmatprep.subr.bf16.mxu0 0
    %6350 = vmatpush1.bf16.msra.mxu0 %v5750
    %6351 = vmatprep.subr.bf16.mxu0 0
    %6352 = vmatpush1.bf16.msra.mxu0 %v5751
    %6353 = vmatprep.subr.bf16.mxu0 0
    %6354 = vmatpush1.bf16.msra.mxu0 %v5752
    %6355 = vmatprep.subr.bf16.mxu0 0
    %6356 = vmatpush1.bf16.msra.mxu0 %v5753
    %6357 = vmatprep.subr.bf16.mxu0 0
    %6358 = vmatpush1.bf16.msra.mxu0 %v5754
    %6359 = vmatprep.subr.bf16.mxu0 0
    %6360 = vmatpush1.bf16.msra.mxu0 %v5755
    %6361 = vmatprep.subr.bf16.mxu0 0
    %6362 = vmatpush1.bf16.msra.mxu0 %v5756
    %6363 = vmatprep.subr.bf16.mxu0 0
    %6364 = vmatpush1.bf16.msra.mxu0 %v5757
    %6365 = vmatprep.subr.bf16.mxu0 0
    %6366 = vmatpush1.bf16.msra.mxu0 %v5758
    %6367 = vmatprep.mubr.bf16.mxu0 %v4265
    %6368 = vmatmul.mubr.bf16.gmra.mrb[0].mxu0 %v4264
    %v6369 = vpop.f32.mrb[0].mxu0
    %v6370 = vadd.f32 %v6330, %v6369
    %v6371 = vpop.f32.mrb[0].mxu0
    %v6372 = vpop.f32.mrb[0].mxu0
    %v6373 = vpop.f32.mrb[0].mxu0
    %6374 = vdwg.mxu0
    %6375 = vmatprep.subr.bf16.mxu0 0
    %6376 = vmatpush1.bf16.msra.mxu0 %v5759
    %6377 = vmatprep.subr.bf16.mxu0 0
    %6378 = vmatpush1.bf16.msra.mxu0 %v5760
    %6379 = vmatprep.subr.bf16.mxu0 0
    %6380 = vmatpush1.bf16.msra.mxu0 %v5761
    %6381 = vmatprep.subr.bf16.mxu0 0
    %6382 = vmatpush1.bf16.msra.mxu0 %v5762
    %6383 = vmatprep.subr.bf16.mxu0 0
    %6384 = vmatpush1.bf16.msra.mxu0 %v5763
    %6385 = vmatprep.subr.bf16.mxu0 0
    %6386 = vmatpush1.bf16.msra.mxu0 %v5764
    %6387 = vmatprep.subr.bf16.mxu0 0
    %6388 = vmatpush1.bf16.msra.mxu0 %v5765
    %6389 = vmatprep.subr.bf16.mxu0 0
    %6390 = vmatpush1.bf16.msra.mxu0 %v5766
    %6391 = vmatprep.subr.bf16.mxu0 0
    %6392 = vmatpush1.bf16.msra.mxu0 %v5767
    %6393 = vmatprep.subr.bf16.mxu0 0
    %6394 = vmatpush1.bf16.msra.mxu0 %v5768
    %6395 = vmatprep.subr.bf16.mxu0 0
    %6396 = vmatpush1.bf16.msra.mxu0 %v5769
    %6397 = vmatprep.subr.bf16.mxu0 0
    %6398 = vmatpush1.bf16.msra.mxu0 %v5770
    %6399 = vmatprep.subr.bf16.mxu0 0
    %6400 = vmatpush1.bf16.msra.mxu0 %v5771
    %6401 = vmatprep.subr.bf16.mxu0 0
    %6402 = vmatpush1.bf16.msra.mxu0 %v5772
    %6403 = vmatprep.subr.bf16.mxu0 0
    %6404 = vmatpush1.bf16.msra.mxu0 %v5773
    %6405 = vmatprep.subr.bf16.mxu0 0
    %6406 = vmatpush1.bf16.msra.mxu0 %v5774
    %6407 = vmatprep.mubr.bf16.mxu0 %v4267
    %6408 = vmatmul.mubr.bf16.gmra.mrb[0].mxu0 %v4266
    %v6409 = vpop.f32.mrb[0].mxu0
    %v6410 = vadd.f32 %v6370, %v6409
    %v6411 = vpop.f32.mrb[0].mxu0
    %v6412 = vpop.f32.mrb[0].mxu0
    %v6413 = vpop.f32.mrb[0].mxu0
    %6414 = vdwg.mxu0
    %6415 = vmatprep.subr.bf16.mxu0 0
    %6416 = vmatpush1.bf16.msra.mxu0 %v5775
    %6417 = vmatprep.subr.bf16.mxu0 0
    %6418 = vmatpush1.bf16.msra.mxu0 %v5776
    %6419 = vmatprep.subr.bf16.mxu0 0
    %6420 = vmatpush1.bf16.msra.mxu0 %v5777
    %6421 = vmatprep.subr.bf16.mxu0 0
    %6422 = vmatpush1.bf16.msra.mxu0 %v5778
    %6423 = vmatprep.subr.bf16.mxu0 0
    %6424 = vmatpush1.bf16.msra.mxu0 %v5779
    %6425 = vmatprep.subr.bf16.mxu0 0
    %6426 = vmatpush1.bf16.msra.mxu0 %v5780
    %6427 = vmatprep.subr.bf16.mxu0 0
    %6428 = vmatpush1.bf16.msra.mxu0 %v5781
    %6429 = vmatprep.subr.bf16.mxu0 0
    %6430 = vmatpush1.bf16.msra.mxu0 %v5782
    %6431 = vmatprep.subr.bf16.mxu0 0
    %6432 = vmatpush1.bf16.msra.mxu0 %v5783
    %6433 = vmatprep.subr.bf16.mxu0 0
    %6434 = vmatpush1.bf16.msra.mxu0 %v5784
    %6435 = vmatprep.subr.bf16.mxu0 0
    %6436 = vmatpush1.bf16.msra.mxu0 %v5785
    %6437 = vmatprep.subr.bf16.mxu0 0
    %6438 = vmatpush1.bf16.msra.mxu0 %v5786
    %6439 = vmatprep.subr.bf16.mxu0 0
    %6440 = vmatpush1.bf16.msra.mxu0 %v5787
    %6441 = vmatprep.subr.bf16.mxu0 0
    %6442 = vmatpush1.bf16.msra.mxu0 %v5788
    %6443 = vmatprep.subr.bf16.mxu0 0
    %6444 = vmatpush1.bf16.msra.mxu0 %v5789
    %6445 = vmatprep.subr.bf16.mxu0 0
    %6446 = vmatpush1.bf16.msra.mxu0 %v5790
    %6447 = vmatprep.mubr.bf16.mxu0 %v4273
    %6448 = vmatmul.mubr.bf16.gmra.mrb[0].mxu0 %v4272
    %v6449 = vpop.f32.mrb[0].mxu0
    %v6450 = vadd.f32 %v6410, %v6449
    %v6451 = vpop.f32.mrb[0].mxu0
    %v6452 = vpop.f32.mrb[0].mxu0
    %v6453 = vpop.f32.mrb[0].mxu0
    %6454 = vdwg.mxu0
    %6455 = vmatprep.subr.bf16.mxu0 0
    %6456 = vmatpush1.bf16.msra.mxu0 %v5791
    %6457 = vmatprep.subr.bf16.mxu0 0
    %6458 = vmatpush1.bf16.msra.mxu0 %v5792
    %6459 = vmatprep.subr.bf16.mxu0 0
    %6460 = vmatpush1.bf16.msra.mxu0 %v5793
    %6461 = vmatprep.subr.bf16.mxu0 0
    %6462 = vmatpush1.bf16.msra.mxu0 %v5794
    %6463 = vmatprep.subr.bf16.mxu0 0
    %6464 = vmatpush1.bf16.msra.mxu0 %v5795
    %6465 = vmatprep.subr.bf16.mxu0 0
    %6466 = vmatpush1.bf16.msra.mxu0 %v5796
    %6467 = vmatprep.subr.bf16.mxu0 0
    %6468 = vmatpush1.bf16.msra.mxu0 %v5797
    %6469 = vmatprep.subr.bf16.mxu0 0
    %6470 = vmatpush1.bf16.msra.mxu0 %v5798
    %6471 = vmatprep.subr.bf16.mxu0 0
    %6472 = vmatpush1.bf16.msra.mxu0 %v5799
    %6473 = vmatprep.subr.bf16.mxu0 0
    %6474 = vmatpush1.bf16.msra.mxu0 %v5800
    %6475 = vmatprep.subr.bf16.mxu0 0
    %6476 = vmatpush1.bf16.msra.mxu0 %v5801
    %6477 = vmatprep.subr.bf16.mxu0 0
    %6478 = vmatpush1.bf16.msra.mxu0 %v5802
    %6479 = vmatprep.subr.bf16.mxu0 0
    %6480 = vmatpush1.bf16.msra.mxu0 %v5803
    %6481 = vmatprep.subr.bf16.mxu0 0
    %6482 = vmatpush1.bf16.msra.mxu0 %v5804
    %6483 = vmatprep.subr.bf16.mxu0 0
    %6484 = vmatpush1.bf16.msra.mxu0 %v5805
    %6485 = vmatprep.subr.bf16.mxu0 0
    %6486 = vmatpush1.bf16.msra.mxu0 %v5806
    %6487 = vmatprep.mubr.bf16.mxu0 %v4275
    %6488 = vmatmul.mubr.bf16.gmra.mrb[0].mxu0 %v4274
    %v6489 = vpop.f32.mrb[0].mxu0
    %v6490 = vadd.f32 %v6450, %v6489
    %v6491 = vpop.f32.mrb[0].mxu0
    %v6492 = vpop.f32.mrb[0].mxu0
    %v6493 = vpop.f32.mrb[0].mxu0
    %6494 = vdwg.mxu0
    %6495 = vmatprep.subr.bf16.mxu0 0
    %6496 = vmatpush1.bf16.msra.mxu0 %v5807
    %6497 = vmatprep.subr.bf16.mxu0 0
    %6498 = vmatpush1.bf16.msra.mxu0 %v5808
    %6499 = vmatprep.subr.bf16.mxu0 0
    %6500 = vmatpush1.bf16.msra.mxu0 %v5809
    %6501 = vmatprep.subr.bf16.mxu0 0
    %6502 = vmatpush1.bf16.msra.mxu0 %v5810
    %6503 = vmatprep.subr.bf16.mxu0 0
    %6504 = vmatpush1.bf16.msra.mxu0 %v5811
    %6505 = vmatprep.subr.bf16.mxu0 0
    %6506 = vmatpush1.bf16.msra.mxu0 %v5812
    %6507 = vmatprep.subr.bf16.mxu0 0
    %6508 = vmatpush1.bf16.msra.mxu0 %v5813
    %6509 = vmatprep.subr.bf16.mxu0 0
    %6510 = vmatpush1.bf16.msra.mxu0 %v5814
    %6511 = vmatprep.subr.bf16.mxu0 0
    %6512 = vmatpush1.bf16.msra.mxu0 %v5815
    %6513 = vmatprep.subr.bf16.mxu0 0
    %6514 = vmatpush1.bf16.msra.mxu0 %v5816
    %6515 = vmatprep.subr.bf16.mxu0 0
    %6516 = vmatpush1.bf16.msra.mxu0 %v5817
    %6517 = vmatprep.subr.bf16.mxu0 0
    %6518 = vmatpush1.bf16.msra.mxu0 %v5818
    %6519 = vmatprep.subr.bf16.mxu0 0
    %6520 = vmatpush1.bf16.msra.mxu0 %v5819
    %6521 = vmatprep.subr.bf16.mxu0 0
    %6522 = vmatpush1.bf16.msra.mxu0 %v5820
    %6523 = vmatprep.subr.bf16.mxu0 0
    %6524 = vmatpush1.bf16.msra.mxu0 %v5821
    %6525 = vmatprep.subr.bf16.mxu0 0
    %6526 = vmatpush1.bf16.msra.mxu0 %v5822
    %6527 = vmatprep.mubr.bf16.mxu0 %v4281
    %6528 = vmatmul.mubr.bf16.gmra.mrb[0].mxu0 %v4280
    %v6529 = vpop.f32.mrb[0].mxu0
    %v6530 = vadd.f32 %v6490, %v6529
    %v6531 = vpop.f32.mrb[0].mxu0
    %v6532 = vpop.f32.mrb[0].mxu0
    %v6533 = vpop.f32.mrb[0].mxu0
    %6534 = vdwg.mxu0
    %6535 = vmatprep.subr.bf16.mxu0 0
    %6536 = vmatpush1.bf16.msra.mxu0 %v5823
    %6537 = vmatprep.subr.bf16.mxu0 0
    %6538 = vmatpush1.bf16.msra.mxu0 %v5824
    %6539 = vmatprep.subr.bf16.mxu0 0
    %6540 = vmatpush1.bf16.msra.mxu0 %v5825
    %6541 = vmatprep.subr.bf16.mxu0 0
    %6542 = vmatpush1.bf16.msra.mxu0 %v5826
    %6543 = vmatprep.subr.bf16.mxu0 0
    %6544 = vmatpush1.bf16.msra.mxu0 %v5827
    %6545 = vmatprep.subr.bf16.mxu0 0
    %6546 = vmatpush1.bf16.msra.mxu0 %v5828
    %6547 = vmatprep.subr.bf16.mxu0 0
    %6548 = vmatpush1.bf16.msra.mxu0 %v5829
    %6549 = vmatprep.subr.bf16.mxu0 0
    %6550 = vmatpush1.bf16.msra.mxu0 %v5830
    %6551 = vmatprep.subr.bf16.mxu0 0
    %6552 = vmatpush1.bf16.msra.mxu0 %v5831
    %6553 = vmatprep.subr.bf16.mxu0 0
    %6554 = vmatpush1.bf16.msra.mxu0 %v5832
    %6555 = vmatprep.subr.bf16.mxu0 0
    %6556 = vmatpush1.bf16.msra.mxu0 %v5833
    %6557 = vmatprep.subr.bf16.mxu0 0
    %6558 = vmatpush1.bf16.msra.mxu0 %v5834
    %6559 = vmatprep.subr.bf16.mxu0 0
    %6560 = vmatpush1.bf16.msra.mxu0 %v5835
    %6561 = vmatprep.subr.bf16.mxu0 0
    %6562 = vmatpush1.bf16.msra.mxu0 %v5836
    %6563 = vmatprep.subr.bf16.mxu0 0
    %6564 = vmatpush1.bf16.msra.mxu0 %v5837
    %6565 = vmatprep.subr.bf16.mxu0 0
    %6566 = vmatpush1.bf16.msra.mxu0 %v5838
    %6567 = vmatprep.mubr.bf16.mxu0 %v4283
    %6568 = vmatmul.mubr.bf16.gmra.mrb[0].mxu0 %v4282
    %v6569 = vpop.f32.mrb[0].mxu0
    %v6570 = vadd.f32 %v6530, %v6569
    %v6571 = vpop.f32.mrb[0].mxu0
    %v6572 = vpop.f32.mrb[0].mxu0
    %v6573 = vpop.f32.mrb[0].mxu0
    %6574 = vdwg.mxu0
    %6575 = vmatprep.subr.bf16.mxu0 0
    %6576 = vmatpush1.bf16.msra.mxu0 %v5839
    %6577 = vmatprep.subr.bf16.mxu0 0
    %6578 = vmatpush1.bf16.msra.mxu0 %v5840
    %6579 = vmatprep.subr.bf16.mxu0 0
    %6580 = vmatpush1.bf16.msra.mxu0 %v5841
    %6581 = vmatprep.subr.bf16.mxu0 0
    %6582 = vmatpush1.bf16.msra.mxu0 %v5842
    %6583 = vmatprep.subr.bf16.mxu0 0
    %6584 = vmatpush1.bf16.msra.mxu0 %v5843
    %6585 = vmatprep.subr.bf16.mxu0 0
    %6586 = vmatpush1.bf16.msra.mxu0 %v5844
    %6587 = vmatprep.subr.bf16.mxu0 0
    %6588 = vmatpush1.bf16.msra.mxu0 %v5845
    %6589 = vmatprep.subr.bf16.mxu0 0
    %6590 = vmatpush1.bf16.msra.mxu0 %v5846
    %6591 = vmatprep.subr.bf16.mxu0 0
    %6592 = vmatpush1.bf16.msra.mxu0 %v5847
    %6593 = vmatprep.subr.bf16.mxu0 0
    %6594 = vmatpush1.bf16.msra.mxu0 %v5848
    %6595 = vmatprep.subr.bf16.mxu0 0
    %6596 = vmatpush1.bf16.msra.mxu0 %v5849
    %6597 = vmatprep.subr.bf16.mxu0 0
    %6598 = vmatpush1.bf16.msra.mxu0 %v5850
    %6599 = vmatprep.subr.bf16.mxu0 0
    %6600 = vmatpush1.bf16.msra.mxu0 %v5851
    %6601 = vmatprep.subr.bf16.mxu0 0
    %6602 = vmatpush1.bf16.msra.mxu0 %v5852
    %6603 = vmatprep.subr.bf16.mxu0 0
    %6604 = vmatpush1.bf16.msra.mxu0 %v5853
    %6605 = vmatprep.subr.bf16.mxu0 0
    %6606 = vmatpush1.bf16.msra.mxu0 %v5854
    %6607 = vmatprep.mubr.bf16.mxu0 %v4289
    %6608 = vmatmul.mubr.bf16.gmra.mrb[0].mxu0 %v4288
    %v6609 = vpop.f32.mrb[0].mxu0
    %v6610 = vadd.f32 %v6570, %v6609
    %v6611 = vpop.f32.mrb[0].mxu0
    %v6612 = vpop.f32.mrb[0].mxu0
    %v6613 = vpop.f32.mrb[0].mxu0
    %6614 = vdwg.mxu0
    %6615 = vmatprep.subr.bf16.mxu0 0
    %6616 = vmatpush1.bf16.msra.mxu0 %v5855
    %6617 = vmatprep.subr.bf16.mxu0 0
    %6618 = vmatpush1.bf16.msra.mxu0 %v5856
    %6619 = vmatprep.subr.bf16.mxu0 0
    %6620 = vmatpush1.bf16.msra.mxu0 %v5857
    %6621 = vmatprep.subr.bf16.mxu0 0
    %6622 = vmatpush1.bf16.msra.mxu0 %v5858
    %6623 = vmatprep.subr.bf16.mxu0 0
    %6624 = vmatpush1.bf16.msra.mxu0 %v5859
    %6625 = vmatprep.subr.bf16.mxu0 0
    %6626 = vmatpush1.bf16.msra.mxu0 %v5860
    %6627 = vmatprep.subr.bf16.mxu0 0
    %6628 = vmatpush1.bf16.msra.mxu0 %v5861
    %6629 = vmatprep.subr.bf16.mxu0 0
    %6630 = vmatpush1.bf16.msra.mxu0 %v5862
    %6631 = vmatprep.subr.bf16.mxu0 0
    %6632 = vmatpush1.bf16.msra.mxu0 %v5863
    %6633 = vmatprep.subr.bf16.mxu0 0
    %6634 = vmatpush1.bf16.msra.mxu0 %v5864
    %6635 = vmatprep.subr.bf16.mxu0 0
    %6636 = vmatpush1.bf16.msra.mxu0 %v5865
    %6637 = vmatprep.subr.bf16.mxu0 0
    %6638 = vmatpush1.bf16.msra.mxu0 %v5866
    %6639 = vmatprep.subr.bf16.mxu0 0
    %6640 = vmatpush1.bf16.msra.mxu0 %v5867
    %6641 = vmatprep.subr.bf16.mxu0 0
    %6642 = vmatpush1.bf16.msra.mxu0 %v5868
    %6643 = vmatprep.subr.bf16.mxu0 0
    %6644 = vmatpush1.bf16.msra.mxu0 %v5869
    %6645 = vmatprep.subr.bf16.mxu0 0
    %6646 = vmatpush1.bf16.msra.mxu0 %v5870
    %6647 = vmatprep.mubr.bf16.mxu0 %v4291
    %6648 = vmatmul.mubr.bf16.gmra.mrb[0].mxu0 %v4290
    %v6649 = vpop.f32.mrb[0].mxu0
    %v6650 = vadd.f32 %v6610, %v6649
    %v6651 = vpop.f32.mrb[0].mxu0
    %v6652 = vpop.f32.mrb[0].mxu0
    %v6653 = vpop.f32.mrb[0].mxu0
    %6654 = vdwg.mxu0
    %6655 = vst [vmem:[%s6] sm:$0x3] %v6650
    // Predicated region
    $region46: #{encoder_forward.1} parent=1 // pred_check
      _
    $region47: #{encoder_forward.1} parent=1 // pred_check_branch
      %6657 = sbr.rel (0) target = $region49
    $region48: #{encoder_forward.1} parent=1 // pred_region
      _
    $region49: #{encoder_forward.1} parent=1 // pred_fallthru
      _
    // Predicated region
    $region50: #{encoder_forward.1} parent=1 // pred_check
      _
    $region51: #{encoder_forward.1} parent=1 // pred_check_branch
      %6659 = sbr.rel (0) target = $region53
    $region52: #{encoder_forward.1} parent=1 // pred_region
      _
    $region53: #{encoder_forward.1} parent=1 // pred_fallthru
      _
    %6660 = vsyncpa [#allocation3], 1
    %6661 = vsyncpa [#allocation5], 1
    %6662 = vsyncpa [#allocation8], 1

</llo_original>
